<compile_context>
chip_gen: v7x
topology: tpu7x:2x2x1
jax: 0.10.0
libtpu: 0.0.40
codegen_flags: <defaults>
</compile_context>

<pallas_src>
import functools

import jax
import jax.numpy as jnp
import numpy as np
from jax import lax
from jax.experimental import pallas as pl
from jax.experimental.pallas import tpu as pltpu


# ----------------------------------------------------------------------------
# Fused kernel: [concat -> conv3x3+BN+ReLU -> conv3x3+BN+ReLU] per
# (batch, row-tile).  All refs are NHWC-like with channels on the lane axis.
# ----------------------------------------------------------------------------
def _up_conv_fused_kernel(x2b_ref, x2h_ref, x1b_ref, x1h_ref,
                          w1a_ref, w1b_ref, b1_ref, w2_ref, b2_ref,
                          o_ref, mid_ref, *, tail_rows):
    th = o_ref.shape[1]                 # output rows in this tile
    w = o_ref.shape[2]                  # true image width
    wc = mid_ref.shape[1] - 2           # compute width (multiple of 8)
    cmid = mid_ref.shape[-1]
    t = pl.program_id(1)

    # Stitch body (TH rows) + halo (4 rows) along the outer row axis.
    # (Outer-dim concat: plane copies only, no cross-lane relayout.)
    x2 = jnp.concatenate([x2b_ref[0], x2h_ref[0]], axis=0)   # (TH+4, wc+2, C2)
    x1 = jnp.concatenate([x1b_ref[0], x1h_ref[0]], axis=0)   # (TH+4, wc+2, C1)

    # ---- conv1: two per-source column-shift slabs (lane-aligned K), three
    # row-tap matmuls each, summed as a value chain (no scratch accumulator;
    # the torch.cat([x2, x1]) never materializes). -----------------------------
    slab_a = jnp.concatenate([x2[:, dx:dx + wc, :] for dx in range(3)], axis=-1)
    slab_b = jnp.concatenate([x1[:, dx:dx + wc, :] for dx in range(3)], axis=-1)
    m1 = (th + 2) * wc
    ka = slab_a.shape[-1]               # 3 * C2
    kb = slab_b.shape[-1]               # 3 * C1

    y1 = jnp.dot(slab_a[0:th + 2].reshape(m1, ka), w1a_ref[0],
                 preferred_element_type=jnp.float32)
    for dy in (1, 2):
        y1 = y1 + jnp.dot(slab_a[dy:dy + th + 2].reshape(m1, ka), w1a_ref[dy],
                          preferred_element_type=jnp.float32)
    for dy in (0, 1, 2):
        y1 = y1 + jnp.dot(slab_b[dy:dy + th + 2].reshape(m1, kb), w1b_ref[dy],
                          preferred_element_type=jnp.float32)

    # BN scale is folded into the weights; epilogue is bias + ReLU only.
    h1 = jnp.maximum(y1 + b1_ref[0], 0.0).reshape(th + 2, wc, cmid)

    # Store the intermediate (bf16) into the zero-padded VMEM scratch.  The
    # whole scratch is rewritten every step, so "parallel" semantics stay safe
    # on megacore parts (no cross-step state).
    mid_ref[:, 1:wc + 1, :] = h1.astype(mid_ref.dtype)
    mid_ref[:, 0:1, :] = jnp.zeros((th + 2, 1, cmid), mid_ref.dtype)
    mid_ref[:, w + 1:wc + 2, :] = jnp.zeros((th + 2, wc + 1 - w, cmid),
                                            mid_ref.dtype)

    # Row-validity zeroing (torch zero padding of conv2 + H round-up rows),
    # only on the boundary tiles -- interior tiles pay nothing.
    @pl.when(t == 0)
    def _():
        mid_ref[0:1, :, :] = jnp.zeros((1, wc + 2, cmid), mid_ref.dtype)

    @pl.when(t == pl.num_programs(1) - 1)
    def _():
        mid_ref[th + 2 - tail_rows:th + 2, :, :] = jnp.zeros(
            (tail_rows, wc + 2, cmid), mid_ref.dtype)

    # ---- conv2 on the VMEM-resident intermediate (no HBM round trip) --------
    midv = mid_ref[...]
    slab_m = jnp.concatenate([midv[:, dx:dx + wc, :] for dx in range(3)],
                             axis=-1)                        # (TH+2, wc, 3*Cmid)
    m2 = th * wc
    km = slab_m.shape[-1]
    y2 = jnp.dot(slab_m[0:th].reshape(m2, km), w2_ref[0],
                 preferred_element_type=jnp.float32)
    for dy in (1, 2):
        y2 = y2 + jnp.dot(slab_m[dy:dy + th].reshape(m2, km), w2_ref[dy],
                          preferred_element_type=jnp.float32)

    y2 = jnp.maximum(y2 + b2_ref[0], 0.0).reshape(th, wc, -1)
    o_ref[0] = y2[:, :w, :].astype(o_ref.dtype)


# ----------------------------------------------------------------------------
# VMEM budgeting / tile-height selection.
# ----------------------------------------------------------------------------
def _vmem_budget_bytes():
    try:
        cap = int(pltpu.get_tpu_info().vmem_capacity_bytes)
    except Exception:
        cap = 64 * 1024 * 1024
    if cap >= 96 * 1024 * 1024:
        # 128 MiB generations (v5e/v6e): leave ~32 MiB for compiler scratch.
        return cap - 32 * 1024 * 1024
    # 64 MiB generation (v7x): stay well clear of the per-TC capacity.
    return min(44 * 1024 * 1024, (cap * 2) // 3)


def _pick_tile_h(h, n, wc, c2, c1, cmid, cout, target, budget):
    """Largest multiple-of-4 tile height whose peak VMEM fits `budget`."""
    cin = c2 + c1
    wp = wc + 2
    hmax = ((h + 3) // 4) * 4

    def est(th):
        rows_in = th + 4                     # stitched conv1 input rows
        rows_mid = th + 2                    # intermediate rows
        persistent = (
            2 * rows_in * wp * cin * 2       # body+halo input blocks, 2-buffered, bf16
            + 2 * th * wc * cout * 4         # output blocks, 2-buffered, f32
            + 2 * 2 * 9 * (cin * cmid + cmid * cout)   # weights, 2-buffered, bf16
            + rows_mid * wp * cmid * 2)      # persistent mid scratch, bf16
        phase1 = (
            rows_in * wp * cin * 2           # stitched body+halo copies, bf16
            + rows_in * wc * 3 * cin * 2     # conv1 K slabs, bf16
            + 2 * rows_mid * wc * cmid * 4)  # conv1 f32 result + epilogue temp
        phase2 = (
            rows_mid * wc * 3 * cmid * 2     # conv2 K slab, bf16
            + 2 * th * wc * cout * 4)        # conv2 f32 result + epilogue temp
        return persistent + max(phase1, phase2)

    th = max(4, min(max(4, (int(target) // 4) * 4), hmax))
    while th > 4 and est(th) > budget:
        th -= 4

    # v7x megacore friendliness: with an odd batch, prefer an even tile count
    # (never backing off by more than 2x).
    if n % 2 == 1:
        t2 = th
        while t2 > 4 and (n * (-(-h // t2))) % 2 == 1:
            t2 -= 4
        if t2 >= max(4, th // 2) and (n * (-(-h // t2))) % 2 == 0:
            th = t2
    return th


def _reorg_fold(w_t, scale):
    """torch (Cout, Cin, 3, 3) -> (3_dy, 3_dx*Cin, Cout); BN scale folded; bf16."""
    co, ci = int(w_t.shape[0]), int(w_t.shape[1])
    w = jnp.transpose(w_t, (2, 3, 1, 0)).reshape(3, 3 * ci, co)
    return (w * scale[None, None, :]).astype(jnp.bfloat16)


# ----------------------------------------------------------------------------
# Wrapper around pallas_call.
# x2: (N,H,W,C2), x1: (N,h1,w1,C1) already upsampled; diff pads applied here.
# ----------------------------------------------------------------------------
def up_conv_fused(x2_nhwc, x1_nhwc, diff_yx, w1_t, s1, b1, w2_t, s2, b2,
                  *, tile_h=32):
    n, h, w, c2 = x2_nhwc.shape
    c1 = x1_nhwc.shape[-1]
    cmid, cin = int(w1_t.shape[0]), int(w1_t.shape[1])
    cout = int(w2_t.shape[0])
    assert cin == c1 + c2, (cin, c1, c2)
    pad_y, pad_x = diff_yx

    wc = ((w + 7) // 8) * 8             # sublane-aligned compute width
    wp = wc + 2

    budget = _vmem_budget_bytes()
    th = _pick_tile_h(h, n, wc, c2, c1, cmid, cout, tile_h, budget)
    nt = -(-h // th)
    hp = nt * th
    out_h = h if h % th == 0 else hp    # exact height -> no output slice pass
    tail = hp - h + 1                   # invalid trailing mid rows, last tile

    # One merged pad per input: F.pad-to-match-x2 (x1 only), 2-row/1-col conv
    # halo, W compute round-up, H round-up.  bf16 operands for the MXU.
    # TODO(synk): fold these pads into the producing ops to save an HBM pass.
    x2p = jnp.pad(x2_nhwc,
                  ((0, 0), (2, 2 + hp - h),
                   (1, 1 + wc - w), (0, 0))).astype(jnp.bfloat16)
    x1p = jnp.pad(x1_nhwc,
                  ((0, 0),
                   (pad_y // 2 + 2, (pad_y - pad_y // 2) + 2 + hp - h),
                   (pad_x // 2 + 1, (pad_x - pad_x // 2) + 1 + wc - w),
                   (0, 0))).astype(jnp.bfloat16)
    assert x1p.shape == x2p.shape[:3] + (c1,), (x1p.shape, x2p.shape)

    # conv1 weight split to match the per-source slabs; BN scale folded.
    w1a = _reorg_fold(w1_t[:, :c2], s1)      # applied to x2 channels
    w1b = _reorg_fold(w1_t[:, c2:], s1)      # applied to x1 channels
    w2r = _reorg_fold(w2_t, s2)

    h4 = th // 4                             # halo block-index multiplier

    kernel = functools.partial(_up_conv_fused_kernel, tail_rows=tail)
    out = pl.pallas_call(
        kernel,
        out_shape=jax.ShapeDtypeStruct((n, out_h, w, cout), x2_nhwc.dtype),
        grid=(n, nt),
        in_specs=[
            pl.BlockSpec((1, th, wp, c2), lambda b, i: (b, i, 0, 0)),
            pl.BlockSpec((1, 4, wp, c2), lambda b, i: (b, (i + 1) * h4, 0, 0)),
            pl.BlockSpec((1, th, wp, c1), lambda b, i: (b, i, 0, 0)),
            pl.BlockSpec((1, 4, wp, c1), lambda b, i: (b, (i + 1) * h4, 0, 0)),
            # Constant-index weight/bias blocks.  (pl.Buffered(1) would save
            # one buffer; instead the 2x buffers are charged to the estimator.)
            pl.BlockSpec((3, 3 * c2, cmid), lambda b, i: (0, 0, 0)),
            pl.BlockSpec((3, 3 * c1, cmid), lambda b, i: (0, 0, 0)),
            pl.BlockSpec((1, cmid), lambda b, i: (0, 0)),
            pl.BlockSpec((3, 3 * cmid, cout), lambda b, i: (0, 0, 0)),
            pl.BlockSpec((1, cout), lambda b, i: (0, 0)),
        ],
        out_specs=pl.BlockSpec((1, th, w, cout), lambda b, i: (b, i, 0, 0)),
        scratch_shapes=[
            pltpu.VMEM((th + 2, wp, cmid), jnp.bfloat16),   # intermediate
        ],
        compiler_params=pltpu.CompilerParams(
            dimension_semantics=("parallel", "parallel"),
            vmem_limit_bytes=budget),
    )(x2p, x2p, x1p, x1p, w1a, w1b,
      b1.reshape(1, -1), w2r, b2.reshape(1, -1))

    return out if out_h == h else out[:, :h]


# ----------------------------------------------------------------------------
# Glue (plain JAX / XLA): gather-free bilinear upsample, BN folding, params.
# ----------------------------------------------------------------------------
def _interp_matrix(n_in, n_out):
    """Dense align_corners=True interpolation matrix (n_out, n_in)."""
    m = np.zeros((n_out, n_in), np.float32)
    if n_in == 1 or n_out == 1:
        m[:, 0] = 1.0
        return jnp.asarray(m)
    src = np.arange(n_out, dtype=np.float64) * (n_in - 1) / (n_out - 1)
    i0 = np.clip(np.floor(src).astype(np.int64), 0, n_in - 1)
    i1 = np.minimum(i0 + 1, n_in - 1)
    frac = (src - i0).astype(np.float32)
    m[np.arange(n_out), i0] += 1.0 - frac
    m[np.arange(n_out), i1] += frac
    return jnp.asarray(m)


def upsample_bilinear_ac(x_nhwc, scale_factor):
    """align_corners=True bilinear upsample as two small matmuls (no gathers)."""
    _, hh, ww, _ = x_nhwc.shape
    mh = _interp_matrix(hh, hh * scale_factor)
    mw = _interp_matrix(ww, ww * scale_factor)
    y = jnp.einsum("oh,nhwc->nowc", mh, x_nhwc)
    return jnp.einsum("pw,nowc->nopc", mw, y)


def fold_bn(gamma, beta, running_mean, running_var, eps=1e-5):
    scale = gamma / jnp.sqrt(running_var + eps)
    bias = beta - running_mean * scale
    return scale, bias


class UpParams:
    def __init__(self, key, in_channels, out_channels):
        ks = jax.random.split(key, 8)
        self.w1 = 0.1 * jax.random.normal(ks[0], (out_channels, in_channels, 3, 3),
                                          jnp.float32)
        self.w2 = 0.1 * jax.random.normal(ks[1], (out_channels, out_channels, 3, 3),
                                          jnp.float32)
        self.g1 = 1.0 + 0.1 * jax.random.normal(ks[2], (out_channels,), jnp.float32)
        self.b1 = 0.1 * jax.random.normal(ks[3], (out_channels,), jnp.float32)
        self.m1 = 0.05 * jax.random.normal(ks[4], (out_channels,), jnp.float32)
        self.v1 = 1.0 + 0.1 * jax.random.uniform(ks[5], (out_channels,), jnp.float32)
        self.g2 = 1.0 + 0.1 * jax.random.normal(ks[6], (out_channels,), jnp.float32)
        self.b2 = 0.1 * jax.random.normal(ks[7], (out_channels,), jnp.float32)
        self.m2 = jnp.zeros((out_channels,), jnp.float32)
        self.v2 = jnp.ones((out_channels,), jnp.float32)


def up_forward(params, x1_nchw, x2_nchw, scale_factor=2, tile_h=32):
    """Equivalent of Up.forward (inference BN).  NCHW in / NCHW out."""
    x1 = jnp.transpose(x1_nchw, (0, 2, 3, 1))
    x2 = jnp.transpose(x2_nchw, (0, 2, 3, 1))
    x1 = upsample_bilinear_ac(x1, scale_factor)
    diff_y = x2.shape[1] - x1.shape[1]
    diff_x = x2.shape[2] - x1.shape[2]
    s1, bb1 = fold_bn(params.g1, params.b1, params.m1, params.v1)
    s2, bb2 = fold_bn(params.g2, params.b2, params.m2, params.v2)
    y = up_conv_fused(x2, x1, (diff_y, diff_x), params.w1, s1, bb1,
                      params.w2, s2, bb2, tile_h=tile_h)
    return jnp.transpose(y, (0, 3, 1, 2))


# ----------------------------------------------------------------------------
# Pure-JAX reference (lax.conv) with matching bf16 operand quantization and
# matching scale-folded weights.
# ----------------------------------------------------------------------------
def _q_bf16(x):
    return x.astype(jnp.bfloat16).astype(jnp.float32)


def _ref_conv_bn_relu(x_nhwc, w_torch, scale, bias):
    w_folded = w_torch * scale[:, None, None, None]
    w_hwio = jnp.transpose(_q_bf16(w_folded), (2, 3, 1, 0))
    y = lax.conv_general_dilated(_q_bf16(x_nhwc), w_hwio, (1, 1), "SAME",
                                 dimension_numbers=("NHWC", "HWIO", "NHWC"),
                                 precision=lax.Precision.HIGHEST)
    return jnp.maximum(y + bias, 0.0)


def up_forward_ref(params, x1_nchw, x2_nchw, scale_factor=2):
    x1 = jnp.transpose(x1_nchw, (0, 2, 3, 1))
    x2 = jnp.transpose(x2_nchw, (0, 2, 3, 1))
    x1 = upsample_bilinear_ac(x1, scale_factor)
    dy = x2.shape[1] - x1.shape[1]
    dx = x2.shape[2] - x1.shape[2]
    x1 = jnp.pad(x1, ((0, 0), (dy // 2, dy - dy // 2),
                      (dx // 2, dx - dx // 2), (0, 0)))
    x = jnp.concatenate([x2, x1], axis=-1)
    s1, bb1 = fold_bn(params.g1, params.b1, params.m1, params.v1)
    s2, bb2 = fold_bn(params.g2, params.b2, params.m2, params.v2)
    y = _ref_conv_bn_relu(x, params.w1, s1, bb1)
    y = _ref_conv_bn_relu(y, params.w2, s2, bb2)
    return jnp.transpose(y, (0, 3, 1, 2))


if __name__ == "__main__":
    key = jax.random.PRNGKey(0)
    k_x1, k_x2, k_p = jax.random.split(key, 3)

    N = 2
    C1, H1, W1 = 4, 8, 8          # x1: low-res feature map (upsampled 2x)
    C2, H2, W2 = 4, 16, 16        # x2: skip connection
    in_ch, out_ch = C1 + C2, 8

    x1 = jax.random.normal(k_x1, (N, C1, H1, W1), jnp.float32)
    x2 = jax.random.normal(k_x2, (N, C2, H2, W2), jnp.float32)
    params = UpParams(k_p, in_ch, out_ch)

    # tile_h=8 -> grid=(2, 2): exercises row-tiling, halo fetch, and the
    # first/last-tile boundary zeroing paths.
    out = jax.block_until_ready(up_forward(params, x1, x2, scale_factor=2,
                                           tile_h=8))
    ref = jax.block_until_ready(up_forward_ref(params, x1, x2, scale_factor=2))

    assert out.shape == (N, out_ch, H2, W2), out.shape
    np.testing.assert_allclose(np.asarray(out), np.asarray(ref),
                               rtol=2e-3, atol=2e-3)
    print("KERNEL_OK")
</pallas_src>

<mosaic_0001>
module attributes {stable_mosaic.version = 11 : i64} {
  func.func @_up_conv_fused_kernel(%arg0: i32, %arg1: i32, %arg2: memref<1x8x18x4xbf16, #tpu.memory_space<vmem>>, %arg3: memref<1x4x18x4xbf16, #tpu.memory_space<vmem>>, %arg4: memref<1x8x18x4xbf16, #tpu.memory_space<vmem>>, %arg5: memref<1x4x18x4xbf16, #tpu.memory_space<vmem>>, %arg6: memref<3x12x8xbf16, #tpu.memory_space<vmem>>, %arg7: memref<3x12x8xbf16, #tpu.memory_space<vmem>>, %arg8: memref<1x8xf32, #tpu.memory_space<vmem>>, %arg9: memref<3x24x8xbf16, #tpu.memory_space<vmem>>, %arg10: memref<1x8xf32, #tpu.memory_space<vmem>>, %arg11: memref<1x8x16x8xf32, #tpu.memory_space<vmem>>, %arg12: memref<10x18x8xbf16, #tpu.memory_space<vmem>>) attributes {dimension_semantics = [#tpu.dimension_semantics<parallel>, #tpu.dimension_semantics<parallel>], iteration_bounds = array<i64: 2, 2>, scalar_prefetch = 0 : i64, scratch_operands = 1 : i64, tpu.core_type = #tpu.core_type<tc>, window_params = [{transform_indices = @transform_0, window_bounds = array<i64: 1, 8, 18, 4>}, {transform_indices = @transform_1, window_bounds = array<i64: 1, 4, 18, 4>}, {transform_indices = @transform_2, window_bounds = array<i64: 1, 8, 18, 4>}, {transform_indices = @transform_3, window_bounds = array<i64: 1, 4, 18, 4>}, {pipeline_mode = #tpu.pipeline_mode<synchronous>, transform_indices = @transform_4, window_bounds = array<i64: 3, 12, 8>}, {pipeline_mode = #tpu.pipeline_mode<synchronous>, transform_indices = @transform_5, window_bounds = array<i64: 3, 12, 8>}, {pipeline_mode = #tpu.pipeline_mode<synchronous>, transform_indices = @transform_6, window_bounds = array<i64: 1, 8>}, {pipeline_mode = #tpu.pipeline_mode<synchronous>, transform_indices = @transform_7, window_bounds = array<i64: 3, 24, 8>}, {pipeline_mode = #tpu.pipeline_mode<synchronous>, transform_indices = @transform_8, window_bounds = array<i64: 1, 8>}, {transform_indices = @transform_9, window_bounds = array<i64: 1, 8, 16, 8>}]} {
    %c0 = arith.constant 0 : index
    %c0_0 = arith.constant 0 : index
    %c0_1 = arith.constant 0 : index
    %c0_2 = arith.constant 0 : index
    %0 = vector.load %arg2[%c0, %c0_0, %c0_1, %c0_2] : memref<1x8x18x4xbf16, #tpu.memory_space<vmem>>, vector<1x8x18x4xbf16>
    %1 = vector.shape_cast %0 : vector<1x8x18x4xbf16> to vector<8x18x4xbf16>
    %c0_3 = arith.constant 0 : index
    %c0_4 = arith.constant 0 : index
    %c0_5 = arith.constant 0 : index
    %c0_6 = arith.constant 0 : index
    %2 = vector.load %arg3[%c0_3, %c0_4, %c0_5, %c0_6] : memref<1x4x18x4xbf16, #tpu.memory_space<vmem>>, vector<1x4x18x4xbf16>
    %3 = vector.shape_cast %2 : vector<1x4x18x4xbf16> to vector<4x18x4xbf16>
    %4 = tpu.concatenate %1, %3 in 0 : vector<8x18x4xbf16>, vector<4x18x4xbf16> -> vector<12x18x4xbf16>
    %c0_7 = arith.constant 0 : index
    %c0_8 = arith.constant 0 : index
    %c0_9 = arith.constant 0 : index
    %c0_10 = arith.constant 0 : index
    %5 = vector.load %arg4[%c0_7, %c0_8, %c0_9, %c0_10] : memref<1x8x18x4xbf16, #tpu.memory_space<vmem>>, vector<1x8x18x4xbf16>
    %6 = vector.shape_cast %5 : vector<1x8x18x4xbf16> to vector<8x18x4xbf16>
    %c0_11 = arith.constant 0 : index
    %c0_12 = arith.constant 0 : index
    %c0_13 = arith.constant 0 : index
    %c0_14 = arith.constant 0 : index
    %7 = vector.load %arg5[%c0_11, %c0_12, %c0_13, %c0_14] : memref<1x4x18x4xbf16, #tpu.memory_space<vmem>>, vector<1x4x18x4xbf16>
    %8 = vector.shape_cast %7 : vector<1x4x18x4xbf16> to vector<4x18x4xbf16>
    %9 = tpu.concatenate %6, %8 in 0 : vector<8x18x4xbf16>, vector<4x18x4xbf16> -> vector<12x18x4xbf16>
    %10 = vector.extract_strided_slice %4 {offsets = [0, 0, 0], sizes = [12, 16, 4], strides = [1, 1, 1]} : vector<12x18x4xbf16> to vector<12x16x4xbf16>
    %11 = vector.extract_strided_slice %4 {offsets = [0, 1, 0], sizes = [12, 16, 4], strides = [1, 1, 1]} : vector<12x18x4xbf16> to vector<12x16x4xbf16>
    %12 = vector.extract_strided_slice %4 {offsets = [0, 2, 0], sizes = [12, 16, 4], strides = [1, 1, 1]} : vector<12x18x4xbf16> to vector<12x16x4xbf16>
    %13 = tpu.concatenate %10, %11, %12 in 2 : vector<12x16x4xbf16>, vector<12x16x4xbf16>, vector<12x16x4xbf16> -> vector<12x16x12xbf16>
    %14 = vector.extract_strided_slice %9 {offsets = [0, 0, 0], sizes = [12, 16, 4], strides = [1, 1, 1]} : vector<12x18x4xbf16> to vector<12x16x4xbf16>
    %15 = vector.extract_strided_slice %9 {offsets = [0, 1, 0], sizes = [12, 16, 4], strides = [1, 1, 1]} : vector<12x18x4xbf16> to vector<12x16x4xbf16>
    %16 = vector.extract_strided_slice %9 {offsets = [0, 2, 0], sizes = [12, 16, 4], strides = [1, 1, 1]} : vector<12x18x4xbf16> to vector<12x16x4xbf16>
    %17 = tpu.concatenate %14, %15, %16 in 2 : vector<12x16x4xbf16>, vector<12x16x4xbf16>, vector<12x16x4xbf16> -> vector<12x16x12xbf16>
    %18 = vector.extract_strided_slice %13 {offsets = [0, 0, 0], sizes = [10, 16, 12], strides = [1, 1, 1]} : vector<12x16x12xbf16> to vector<10x16x12xbf16>
    %19 = vector.shape_cast %18 : vector<10x16x12xbf16> to vector<160x12xbf16>
    %c0_15 = arith.constant 0 : index
    %c0_16 = arith.constant 0 : index
    %c0_17 = arith.constant 0 : index
    %20 = vector.load %arg6[%c0_15, %c0_16, %c0_17] : memref<3x12x8xbf16, #tpu.memory_space<vmem>>, vector<1x12x8xbf16>
    %21 = vector.shape_cast %20 : vector<1x12x8xbf16> to vector<12x8xbf16>
    %cst = arith.constant dense<0.000000e+00> : vector<160x8xf32>
    %22 = tpu.matmul %19, %21, %cst {dimension_numbers = #tpu.dot_dimension_numbers<[1], [0], [0], [1], [0, 0, 1, 1], [], []>} : vector<160x12xbf16>, vector<12x8xbf16>, vector<160x8xf32> -> vector<160x8xf32>
    %23 = vector.extract_strided_slice %13 {offsets = [1, 0, 0], sizes = [10, 16, 12], strides = [1, 1, 1]} : vector<12x16x12xbf16> to vector<10x16x12xbf16>
    %24 = vector.shape_cast %23 : vector<10x16x12xbf16> to vector<160x12xbf16>
    %c1 = arith.constant 1 : index
    %c0_18 = arith.constant 0 : index
    %c0_19 = arith.constant 0 : index
    %25 = vector.load %arg6[%c1, %c0_18, %c0_19] : memref<3x12x8xbf16, #tpu.memory_space<vmem>>, vector<1x12x8xbf16>
    %26 = vector.shape_cast %25 : vector<1x12x8xbf16> to vector<12x8xbf16>
    %cst_20 = arith.constant dense<0.000000e+00> : vector<160x8xf32>
    %27 = tpu.matmul %24, %26, %cst_20 {dimension_numbers = #tpu.dot_dimension_numbers<[1], [0], [0], [1], [0, 0, 1, 1], [], []>} : vector<160x12xbf16>, vector<12x8xbf16>, vector<160x8xf32> -> vector<160x8xf32>
    %28 = arith.addf %22, %27 : vector<160x8xf32>
    %29 = vector.extract_strided_slice %13 {offsets = [2, 0, 0], sizes = [10, 16, 12], strides = [1, 1, 1]} : vector<12x16x12xbf16> to vector<10x16x12xbf16>
    %30 = vector.shape_cast %29 : vector<10x16x12xbf16> to vector<160x12xbf16>
    %c2 = arith.constant 2 : index
    %c0_21 = arith.constant 0 : index
    %c0_22 = arith.constant 0 : index
    %31 = vector.load %arg6[%c2, %c0_21, %c0_22] : memref<3x12x8xbf16, #tpu.memory_space<vmem>>, vector<1x12x8xbf16>
    %32 = vector.shape_cast %31 : vector<1x12x8xbf16> to vector<12x8xbf16>
    %cst_23 = arith.constant dense<0.000000e+00> : vector<160x8xf32>
    %33 = tpu.matmul %30, %32, %cst_23 {dimension_numbers = #tpu.dot_dimension_numbers<[1], [0], [0], [1], [0, 0, 1, 1], [], []>} : vector<160x12xbf16>, vector<12x8xbf16>, vector<160x8xf32> -> vector<160x8xf32>
    %34 = arith.addf %28, %33 : vector<160x8xf32>
    %35 = vector.extract_strided_slice %17 {offsets = [0, 0, 0], sizes = [10, 16, 12], strides = [1, 1, 1]} : vector<12x16x12xbf16> to vector<10x16x12xbf16>
    %36 = vector.shape_cast %35 : vector<10x16x12xbf16> to vector<160x12xbf16>
    %c0_24 = arith.constant 0 : index
    %c0_25 = arith.constant 0 : index
    %c0_26 = arith.constant 0 : index
    %37 = vector.load %arg7[%c0_24, %c0_25, %c0_26] : memref<3x12x8xbf16, #tpu.memory_space<vmem>>, vector<1x12x8xbf16>
    %38 = vector.shape_cast %37 : vector<1x12x8xbf16> to vector<12x8xbf16>
    %cst_27 = arith.constant dense<0.000000e+00> : vector<160x8xf32>
    %39 = tpu.matmul %36, %38, %cst_27 {dimension_numbers = #tpu.dot_dimension_numbers<[1], [0], [0], [1], [0, 0, 1, 1], [], []>} : vector<160x12xbf16>, vector<12x8xbf16>, vector<160x8xf32> -> vector<160x8xf32>
    %40 = arith.addf %34, %39 : vector<160x8xf32>
    %41 = vector.extract_strided_slice %17 {offsets = [1, 0, 0], sizes = [10, 16, 12], strides = [1, 1, 1]} : vector<12x16x12xbf16> to vector<10x16x12xbf16>
    %42 = vector.shape_cast %41 : vector<10x16x12xbf16> to vector<160x12xbf16>
    %c1_28 = arith.constant 1 : index
    %c0_29 = arith.constant 0 : index
    %c0_30 = arith.constant 0 : index
    %43 = vector.load %arg7[%c1_28, %c0_29, %c0_30] : memref<3x12x8xbf16, #tpu.memory_space<vmem>>, vector<1x12x8xbf16>
    %44 = vector.shape_cast %43 : vector<1x12x8xbf16> to vector<12x8xbf16>
    %cst_31 = arith.constant dense<0.000000e+00> : vector<160x8xf32>
    %45 = tpu.matmul %42, %44, %cst_31 {dimension_numbers = #tpu.dot_dimension_numbers<[1], [0], [0], [1], [0, 0, 1, 1], [], []>} : vector<160x12xbf16>, vector<12x8xbf16>, vector<160x8xf32> -> vector<160x8xf32>
    %46 = arith.addf %40, %45 : vector<160x8xf32>
    %47 = vector.extract_strided_slice %17 {offsets = [2, 0, 0], sizes = [10, 16, 12], strides = [1, 1, 1]} : vector<12x16x12xbf16> to vector<10x16x12xbf16>
    %48 = vector.shape_cast %47 : vector<10x16x12xbf16> to vector<160x12xbf16>
    %c2_32 = arith.constant 2 : index
    %c0_33 = arith.constant 0 : index
    %c0_34 = arith.constant 0 : index
    %49 = vector.load %arg7[%c2_32, %c0_33, %c0_34] : memref<3x12x8xbf16, #tpu.memory_space<vmem>>, vector<1x12x8xbf16>
    %50 = vector.shape_cast %49 : vector<1x12x8xbf16> to vector<12x8xbf16>
    %cst_35 = arith.constant dense<0.000000e+00> : vector<160x8xf32>
    %51 = tpu.matmul %48, %50, %cst_35 {dimension_numbers = #tpu.dot_dimension_numbers<[1], [0], [0], [1], [0, 0, 1, 1], [], []>} : vector<160x12xbf16>, vector<12x8xbf16>, vector<160x8xf32> -> vector<160x8xf32>
    %52 = arith.addf %46, %51 : vector<160x8xf32>
    %c0_36 = arith.constant 0 : index
    %c0_37 = arith.constant 0 : index
    %53 = vector.load %arg8[%c0_36, %c0_37] : memref<1x8xf32, #tpu.memory_space<vmem>>, vector<1x8xf32>
    %54 = vector.shape_cast %53 : vector<1x8xf32> to vector<8xf32>
    %55 = vector.shape_cast %54 : vector<8xf32> to vector<1x8xf32>
    %56 = vector.broadcast %55 : vector<1x8xf32> to vector<160x8xf32>
    %57 = arith.addf %52, %56 : vector<160x8xf32>
    %cst_38 = arith.constant 0.000000e+00 : f32
    %58 = vector.broadcast %cst_38 : f32 to vector<160x8xf32>
    %59 = arith.maximumf %57, %58 : vector<160x8xf32>
    %60 = vector.shape_cast %59 : vector<160x8xf32> to vector<10x16x8xf32>
    %61 = arith.truncf %60 : vector<10x16x8xf32> to vector<10x16x8xbf16>
    %c0_39 = arith.constant 0 : index
    %c1_40 = arith.constant 1 : index
    %c0_41 = arith.constant 0 : index
    %62 = vector.load %arg12[%c0_39, %c1_40, %c0_41] : memref<10x18x8xbf16, #tpu.memory_space<vmem>>, vector<10x16x8xbf16>
    tpu.vector_store %arg12[%c0_39, %c1_40, %c0_41], %61 {strides = array<i32>} : memref<10x18x8xbf16, #tpu.memory_space<vmem>>, vector<10x16x8xbf16>,
    %cst_42 = arith.constant 0.000000e+00 : bf16
    %63 = vector.broadcast %cst_42 : bf16 to vector<10x1x8xbf16>
    %c0_43 = arith.constant 0 : index
    %c0_44 = arith.constant 0 : index
    %c0_45 = arith.constant 0 : index
    %64 = vector.load %arg12[%c0_43, %c0_44, %c0_45] : memref<10x18x8xbf16, #tpu.memory_space<vmem>>, vector<10x1x8xbf16>
    tpu.vector_store %arg12[%c0_43, %c0_44, %c0_45], %63 {strides = array<i32>} : memref<10x18x8xbf16, #tpu.memory_space<vmem>>, vector<10x1x8xbf16>,
    %cst_46 = arith.constant 0.000000e+00 : bf16
    %65 = vector.broadcast %cst_46 : bf16 to vector<10x1x8xbf16>
    %c0_47 = arith.constant 0 : index
    %c17 = arith.constant 17 : index
    %c0_48 = arith.constant 0 : index
    %66 = vector.load %arg12[%c0_47, %c17, %c0_48] : memref<10x18x8xbf16, #tpu.memory_space<vmem>>, vector<10x1x8xbf16>
    tpu.vector_store %arg12[%c0_47, %c17, %c0_48], %65 {strides = array<i32>} : memref<10x18x8xbf16, #tpu.memory_space<vmem>>, vector<10x1x8xbf16>,
    %c0_i32 = arith.constant 0 : i32
    %67 = arith.cmpi eq, %arg1, %c0_i32 : i32
    %68 = arith.extui %67 : i1 to i32
    %c0_i32_49 = arith.constant 0 : i32
    %69 = arith.cmpi ne, %68, %c0_i32_49 : i32
    scf.if %69 {
      %cst_73 = arith.constant 0.000000e+00 : bf16
      %106 = vector.broadcast %cst_73 : bf16 to vector<1x18x8xbf16>
      %c0_74 = arith.constant 0 : index
      %c0_75 = arith.constant 0 : index
      %c0_76 = arith.constant 0 : index
      %107 = vector.load %arg12[%c0_74, %c0_75, %c0_76] : memref<10x18x8xbf16, #tpu.memory_space<vmem>>, vector<1x18x8xbf16>
      tpu.vector_store %arg12[%c0_74, %c0_75, %c0_76], %106 {strides = array<i32>} : memref<10x18x8xbf16, #tpu.memory_space<vmem>>, vector<1x18x8xbf16>,
    } else {
    }
    %c1_i32 = arith.constant 1 : i32
    %70 = arith.cmpi eq, %arg1, %c1_i32 : i32
    %71 = arith.extui %70 : i1 to i32
    %c0_i32_50 = arith.constant 0 : i32
    %72 = arith.cmpi ne, %71, %c0_i32_50 : i32
    scf.if %72 {
      %cst_73 = arith.constant 0.000000e+00 : bf16
      %106 = vector.broadcast %cst_73 : bf16 to vector<1x18x8xbf16>
      %c9 = arith.constant 9 : index
      %c0_74 = arith.constant 0 : index
      %c0_75 = arith.constant 0 : index
      %107 = vector.load %arg12[%c9, %c0_74, %c0_75] : memref<10x18x8xbf16, #tpu.memory_space<vmem>>, vector<1x18x8xbf16>
      tpu.vector_store %arg12[%c9, %c0_74, %c0_75], %106 {strides = array<i32>} : memref<10x18x8xbf16, #tpu.memory_space<vmem>>, vector<1x18x8xbf16>,
    } else {
    }
    %c0_51 = arith.constant 0 : index
    %c0_52 = arith.constant 0 : index
    %c0_53 = arith.constant 0 : index
    %73 = vector.load %arg12[%c0_51, %c0_52, %c0_53] : memref<10x18x8xbf16, #tpu.memory_space<vmem>>, vector<10x18x8xbf16>
    %74 = vector.extract_strided_slice %73 {offsets = [0, 0, 0], sizes = [10, 16, 8], strides = [1, 1, 1]} : vector<10x18x8xbf16> to vector<10x16x8xbf16>
    %75 = vector.extract_strided_slice %73 {offsets = [0, 1, 0], sizes = [10, 16, 8], strides = [1, 1, 1]} : vector<10x18x8xbf16> to vector<10x16x8xbf16>
    %76 = vector.extract_strided_slice %73 {offsets = [0, 2, 0], sizes = [10, 16, 8], strides = [1, 1, 1]} : vector<10x18x8xbf16> to vector<10x16x8xbf16>
    %77 = tpu.concatenate %74, %75, %76 in 2 : vector<10x16x8xbf16>, vector<10x16x8xbf16>, vector<10x16x8xbf16> -> vector<10x16x24xbf16>
    %78 = vector.extract_strided_slice %77 {offsets = [0, 0, 0], sizes = [8, 16, 24], strides = [1, 1, 1]} : vector<10x16x24xbf16> to vector<8x16x24xbf16>
    %79 = vector.shape_cast %78 : vector<8x16x24xbf16> to vector<128x24xbf16>
    %c0_54 = arith.constant 0 : index
    %c0_55 = arith.constant 0 : index
    %c0_56 = arith.constant 0 : index
    %80 = vector.load %arg9[%c0_54, %c0_55, %c0_56] : memref<3x24x8xbf16, #tpu.memory_space<vmem>>, vector<1x24x8xbf16>
    %81 = vector.shape_cast %80 : vector<1x24x8xbf16> to vector<24x8xbf16>
    %cst_57 = arith.constant dense<0.000000e+00> : vector<128x8xf32>
    %82 = tpu.matmul %79, %81, %cst_57 {dimension_numbers = #tpu.dot_dimension_numbers<[1], [0], [0], [1], [0, 0, 1, 1], [], []>} : vector<128x24xbf16>, vector<24x8xbf16>, vector<128x8xf32> -> vector<128x8xf32>
    %83 = vector.extract_strided_slice %77 {offsets = [1, 0, 0], sizes = [8, 16, 24], strides = [1, 1, 1]} : vector<10x16x24xbf16> to vector<8x16x24xbf16>
    %84 = vector.shape_cast %83 : vector<8x16x24xbf16> to vector<128x24xbf16>
    %c1_58 = arith.constant 1 : index
    %c0_59 = arith.constant 0 : index
    %c0_60 = arith.constant 0 : index
    %85 = vector.load %arg9[%c1_58, %c0_59, %c0_60] : memref<3x24x8xbf16, #tpu.memory_space<vmem>>, vector<1x24x8xbf16>
    %86 = vector.shape_cast %85 : vector<1x24x8xbf16> to vector<24x8xbf16>
    %cst_61 = arith.constant dense<0.000000e+00> : vector<128x8xf32>
    %87 = tpu.matmul %84, %86, %cst_61 {dimension_numbers = #tpu.dot_dimension_numbers<[1], [0], [0], [1], [0, 0, 1, 1], [], []>} : vector<128x24xbf16>, vector<24x8xbf16>, vector<128x8xf32> -> vector<128x8xf32>
    %88 = arith.addf %82, %87 : vector<128x8xf32>
    %89 = vector.extract_strided_slice %77 {offsets = [2, 0, 0], sizes = [8, 16, 24], strides = [1, 1, 1]} : vector<10x16x24xbf16> to vector<8x16x24xbf16>
    %90 = vector.shape_cast %89 : vector<8x16x24xbf16> to vector<128x24xbf16>
    %c2_62 = arith.constant 2 : index
    %c0_63 = arith.constant 0 : index
    %c0_64 = arith.constant 0 : index
    %91 = vector.load %arg9[%c2_62, %c0_63, %c0_64] : memref<3x24x8xbf16, #tpu.memory_space<vmem>>, vector<1x24x8xbf16>
    %92 = vector.shape_cast %91 : vector<1x24x8xbf16> to vector<24x8xbf16>
    %cst_65 = arith.constant dense<0.000000e+00> : vector<128x8xf32>
    %93 = tpu.matmul %90, %92, %cst_65 {dimension_numbers = #tpu.dot_dimension_numbers<[1], [0], [0], [1], [0, 0, 1, 1], [], []>} : vector<128x24xbf16>, vector<24x8xbf16>, vector<128x8xf32> -> vector<128x8xf32>
    %94 = arith.addf %88, %93 : vector<128x8xf32>
    %c0_66 = arith.constant 0 : index
    %c0_67 = arith.constant 0 : index
    %95 = vector.load %arg10[%c0_66, %c0_67] : memref<1x8xf32, #tpu.memory_space<vmem>>, vector<1x8xf32>
    %96 = vector.shape_cast %95 : vector<1x8xf32> to vector<8xf32>
    %97 = vector.shape_cast %96 : vector<8xf32> to vector<1x8xf32>
    %98 = vector.broadcast %97 : vector<1x8xf32> to vector<128x8xf32>
    %99 = arith.addf %94, %98 : vector<128x8xf32>
    %cst_68 = arith.constant 0.000000e+00 : f32
    %100 = vector.broadcast %cst_68 : f32 to vector<128x8xf32>
    %101 = arith.maximumf %99, %100 : vector<128x8xf32>
    %102 = vector.shape_cast %101 : vector<128x8xf32> to vector<8x16x8xf32>
    %c0_69 = arith.constant 0 : index
    %c0_70 = arith.constant 0 : index
    %c0_71 = arith.constant 0 : index
    %c0_72 = arith.constant 0 : index
    %103 = vector.load %arg11[%c0_69, %c0_70, %c0_71, %c0_72] : memref<1x8x16x8xf32, #tpu.memory_space<vmem>>, vector<1x8x16x8xf32>
    %104 = vector.shape_cast %103 : vector<1x8x16x8xf32> to vector<8x16x8xf32>
    %105 = vector.shape_cast %102 : vector<8x16x8xf32> to vector<1x8x16x8xf32>
    tpu.vector_store %arg11[%c0_69, %c0_70, %c0_71, %c0_72], %105 {strides = array<i32>} : memref<1x8x16x8xf32, #tpu.memory_space<vmem>>, vector<1x8x16x8xf32>,
    return
  }
  func.func @transform_0(%arg0: i32, %arg1: i32) -> (i32, i32, i32, i32) {
    %c0_i32 = arith.constant 0 : i32
    %c0_i32_0 = arith.constant 0 : i32
    %c0_i32_1 = arith.constant 0 : i32
    return %arg0, %arg1, %c0_i32, %c0_i32_0 : i32, i32, i32, i32
  }
  func.func @transform_1(%arg0: i32, %arg1: i32) -> (i32, i32, i32, i32) {
    %c1_i32 = arith.constant 1 : i32
    %0 = arith.addi %arg1, %c1_i32 : i32
    %c2_i32 = arith.constant 2 : i32
    %1 = arith.muli %0, %c2_i32 : i32
    %c0_i32 = arith.constant 0 : i32
    %c0_i32_0 = arith.constant 0 : i32
    %c0_i32_1 = arith.constant 0 : i32
    return %arg0, %1, %c0_i32, %c0_i32_0 : i32, i32, i32, i32
  }
  func.func @transform_2(%arg0: i32, %arg1: i32) -> (i32, i32, i32, i32) {
    %c0_i32 = arith.constant 0 : i32
    %c0_i32_0 = arith.constant 0 : i32
    %c0_i32_1 = arith.constant 0 : i32
    return %arg0, %arg1, %c0_i32, %c0_i32_0 : i32, i32, i32, i32
  }
  func.func @transform_3(%arg0: i32, %arg1: i32) -> (i32, i32, i32, i32) {
    %c1_i32 = arith.constant 1 : i32
    %0 = arith.addi %arg1, %c1_i32 : i32
    %c2_i32 = arith.constant 2 : i32
    %1 = arith.muli %0, %c2_i32 : i32
    %c0_i32 = arith.constant 0 : i32
    %c0_i32_0 = arith.constant 0 : i32
    %c0_i32_1 = arith.constant 0 : i32
    return %arg0, %1, %c0_i32, %c0_i32_0 : i32, i32, i32, i32
  }
  func.func @transform_4(%arg0: i32, %arg1: i32) -> (i32, i32, i32) {
    %c0_i32 = arith.constant 0 : i32
    %c0_i32_0 = arith.constant 0 : i32
    %c0_i32_1 = arith.constant 0 : i32
    %c0_i32_2 = arith.constant 0 : i32
    return %c0_i32, %c0_i32_0, %c0_i32_1 : i32, i32, i32
  }
  func.func @transform_5(%arg0: i32, %arg1: i32) -> (i32, i32, i32) {
    %c0_i32 = arith.constant 0 : i32
    %c0_i32_0 = arith.constant 0 : i32
    %c0_i32_1 = arith.constant 0 : i32
    %c0_i32_2 = arith.constant 0 : i32
    return %c0_i32, %c0_i32_0, %c0_i32_1 : i32, i32, i32
  }
  func.func @transform_6(%arg0: i32, %arg1: i32) -> (i32, i32) {
    %c0_i32 = arith.constant 0 : i32
    %c0_i32_0 = arith.constant 0 : i32
    %c0_i32_1 = arith.constant 0 : i32
    return %c0_i32, %c0_i32_0 : i32, i32
  }
  func.func @transform_7(%arg0: i32, %arg1: i32) -> (i32, i32, i32) {
    %c0_i32 = arith.constant 0 : i32
    %c0_i32_0 = arith.constant 0 : i32
    %c0_i32_1 = arith.constant 0 : i32
    %c0_i32_2 = arith.constant 0 : i32
    return %c0_i32, %c0_i32_0, %c0_i32_1 : i32, i32, i32
  }
  func.func @transform_8(%arg0: i32, %arg1: i32) -> (i32, i32) {
    %c0_i32 = arith.constant 0 : i32
    %c0_i32_0 = arith.constant 0 : i32
    %c0_i32_1 = arith.constant 0 : i32
    return %c0_i32, %c0_i32_0 : i32, i32
  }
  func.func @transform_9(%arg0: i32, %arg1: i32) -> (i32, i32, i32, i32) {
    %c0_i32 = arith.constant 0 : i32
    %c0_i32_0 = arith.constant 0 : i32
    %c0_i32_1 = arith.constant 0 : i32
    return %arg0, %arg1, %c0_i32, %c0_i32_0 : i32, i32, i32, i32
  }
}

</mosaic_0001>

<llo_original>
// kernel: tpu_custom_call.1
$region0: #{tpu_custom_call.1}
  #allocation0 [shape = 'u32[]', space=smem, size = 0x4, offset = 0x4, fixed_abs, tag = 'smem constant byte address 0x4 - core index']
  #allocation1 [shape = 'u32[144,128]{1,0:T(1,128)}', space=vmem, size = 0x12000, scoped, tag = 'internal scratch']
  #allocation2 [shape = 'bf16[10,18,8]{2,1,0:T(8,128)(2,1)}', space=vmem, size = 0xf000, scoped, tag = 'scratch operand']
  %s0 = inlined_call_operand.vmem [shape: bf16[2,20,18,4], index: 0, kind: input, shape index: {}]
  %s1 = inlined_call_operand.vmem [shape: bf16[2,20,18,4], index: 1, kind: input, shape index: {}]
  %s2 = inlined_call_operand.vmem [shape: bf16[2,20,18,4], index: 2, kind: input, shape index: {}]
  %s3 = inlined_call_operand.vmem [shape: bf16[2,20,18,4], index: 3, kind: input, shape index: {}]
  %s4 = inlined_call_operand.vmem [shape: bf16[3,12,8], index: 4, kind: input, shape index: {}]
  %s5 = inlined_call_operand.vmem [shape: bf16[3,12,8], index: 5, kind: input, shape index: {}]
  %s6 = inlined_call_operand.vmem [shape: f32[1,8], index: 6, kind: input, shape index: {}]
  %s7 = inlined_call_operand.vmem [shape: bf16[3,24,8], index: 7, kind: input, shape index: {}]
  %s8 = inlined_call_operand.vmem [shape: f32[1,8], index: 8, kind: input, shape index: {}]
  %s9 = inlined_call_operand.vmem [shape: f32[2,16,16,8], index: 9, kind: output, shape index: {}]
  %s10 = sld [smem:[#allocation0]]
  $region77: #{tpu_custom_call.1} parent=0
    _
  %s12 = ssub.s32 1, %s10
  %s13 = scalar_select 0, %s12, %s10
  loop: start=0, step=1, limit=6
  $region2: #{tpu_custom_call.1} parent=0 // loop_pre_header
    _
  $region3: #{tpu_custom_call.1} parent=0 // loop_header
    %s15 = sphi 0, %s19
    %p16 = scmp.ge.s32.totalorder %s15, 6
    %s22 = sphi 0, %s34
    %s23 = sphi 0, %s30
    %s24 = sphi 0, %s22
    %s25 = sphi 0, %s23
    %s26 = sphi 0, %s24
    %s27 = sphi 0, %s25
    %s39 = sphi 0, %s41
    %s42 = sphi 0, %s39
    %s43 = sphi 0, %s42
    %s59 = sphi 0, %s43
    %s71 = sphi 0, %s73
    %s74 = sphi 0, %s71
    %s75 = sphi 0, %s74
    %s91 = sphi 0, %s75
    %s99 = sphi 0, %s101
    %s102 = sphi 0, %s99
    %s103 = sphi 0, %s102
    %s119 = sphi 0, %s103
    %s131 = sphi 0, %s133
    %s134 = sphi 0, %s131
    %s135 = sphi 0, %s134
    %s151 = sphi 0, %s135
    %s155 = sphi 0, %s155
    %s157 = sphi 0, %s155
    %s158 = sphi 0, %s157
    %s172 = sphi 0, %s158
    %s176 = sphi 0, %s176
    %s178 = sphi 0, %s176
    %s179 = sphi 0, %s178
    %s193 = sphi 0, %s179
    %s197 = sphi 0, %s197
    %s199 = sphi 0, %s197
    %s200 = sphi 0, %s199
    %s214 = sphi 0, %s200
    %s218 = sphi 0, %s218
    %s220 = sphi 0, %s218
    %s221 = sphi 0, %s220
    %s235 = sphi 0, %s221
    %s239 = sphi 0, %s239
    %s241 = sphi 0, %s239
    %s242 = sphi 0, %s241
    %s256 = sphi 0, %s242
    %s264 = sphi 0, %s266
    %s267 = sphi 0, %s264
    %s268 = sphi 0, %s267
    %s284 = sphi 0, %s268
  $region4: #{tpu_custom_call.1} parent=0 // loop_header_branch
    %18 = sbr.rel (%p16) target = $region8
  $region5: #{tpu_custom_call.1} parent=0 // loop_body
    %s20 = ssub.s32 %s15, 1
    %s21 = ssub.s32 %s15, 2
    %s28 = sadd.s32 1, %s23
    %p29 = scmp.ge.s32.totalorder %s28, 2
    %s30 = scalar_select %p29, 0, %s28
    %s31 = sadd.s32 1, %s22
    %s32 = scalar_select %p29, %s31, %s22
    %p33 = scmp.ge.s32.totalorder %s32, 2
    %s34 = scalar_select %p33, 0, %s32
    %s35 = ssub.s32 %s22, %s34
    %s36 = ssub.s32 %s23, %s30
    %s37 = sor.u32 %s35, %s36
    %p38 = scmp.eq.s32.totalorder %s37, 0
    %s40 = sadd.s32 %s39, 1
    %s41 = scalar_select %p38, %s39, %s40
    %p44 = pneg %p38
    %p45 = scmp.eq.s32.totalorder %s15, 3
    %p46 = por %p44, %p45
    %p47 = scmp.ne.s32.totalorder %s39, %s42
    %p48 = scmp.eq.s32.totalorder %s15, 0
    %p49 = por %p47, %p48
    %p50 = scmp.ne.s32.totalorder %s39, %s42
    %p51 = scmp.eq.s32.totalorder %s20, 3
    %p52 = por %p50, %p51
    %p53 = scmp.ne.s32.totalorder %s42, %s43
    %p54 = scmp.eq.s32.totalorder %s20, 0
    %p55 = por %p53, %p54
    %p56 = scmp.ne.s32.totalorder %s42, %s43
    %p57 = scmp.eq.s32.totalorder %s21, 3
    %p58 = por %p56, %p57
    %p60 = scmp.ne.s32.totalorder %s43, %s59
    %p61 = scmp.eq.s32.totalorder %s21, 0
    %p62 = por %p60, %p61
    %s63 = sadd.s32 %s23, 1
    %s64 = smul.u32 %s63, 2
    %s65 = sadd.s32 %s30, 1
    %s66 = smul.u32 %s65, 2
    %s67 = ssub.s32 %s22, %s34
    %s68 = ssub.s32 %s64, %s66
    %s69 = sor.u32 %s67, %s68
    %p70 = scmp.eq.s32.totalorder %s69, 0
    %s72 = sadd.s32 %s71, 1
    %s73 = scalar_select %p70, %s71, %s72
    %p76 = pneg %p70
    %p77 = scmp.eq.s32.totalorder %s15, 3
    %p78 = por %p76, %p77
    %p79 = scmp.ne.s32.totalorder %s71, %s74
    %p80 = scmp.eq.s32.totalorder %s15, 0
    %p81 = por %p79, %p80
    %p82 = scmp.ne.s32.totalorder %s71, %s74
    %p83 = scmp.eq.s32.totalorder %s20, 3
    %p84 = por %p82, %p83
    %p85 = scmp.ne.s32.totalorder %s74, %s75
    %p86 = scmp.eq.s32.totalorder %s20, 0
    %p87 = por %p85, %p86
    %p88 = scmp.ne.s32.totalorder %s74, %s75
    %p89 = scmp.eq.s32.totalorder %s21, 3
    %p90 = por %p88, %p89
    %p92 = scmp.ne.s32.totalorder %s75, %s91
    %p93 = scmp.eq.s32.totalorder %s21, 0
    %p94 = por %p92, %p93
    %s95 = ssub.s32 %s22, %s34
    %s96 = ssub.s32 %s23, %s30
    %s97 = sor.u32 %s95, %s96
    %p98 = scmp.eq.s32.totalorder %s97, 0
    %s100 = sadd.s32 %s99, 1
    %s101 = scalar_select %p98, %s99, %s100
    %p104 = pneg %p98
    %p105 = scmp.eq.s32.totalorder %s15, 3
    %p106 = por %p104, %p105
    %p107 = scmp.ne.s32.totalorder %s99, %s102
    %p108 = scmp.eq.s32.totalorder %s15, 0
    %p109 = por %p107, %p108
    %p110 = scmp.ne.s32.totalorder %s99, %s102
    %p111 = scmp.eq.s32.totalorder %s20, 3
    %p112 = por %p110, %p111
    %p113 = scmp.ne.s32.totalorder %s102, %s103
    %p114 = scmp.eq.s32.totalorder %s20, 0
    %p115 = por %p113, %p114
    %p116 = scmp.ne.s32.totalorder %s102, %s103
    %p117 = scmp.eq.s32.totalorder %s21, 3
    %p118 = por %p116, %p117
    %p120 = scmp.ne.s32.totalorder %s103, %s119
    %p121 = scmp.eq.s32.totalorder %s21, 0
    %p122 = por %p120, %p121
    %s123 = sadd.s32 %s23, 1
    %s124 = smul.u32 %s123, 2
    %s125 = sadd.s32 %s30, 1
    %s126 = smul.u32 %s125, 2
    %s127 = ssub.s32 %s22, %s34
    %s128 = ssub.s32 %s124, %s126
    %s129 = sor.u32 %s127, %s128
    %p130 = scmp.eq.s32.totalorder %s129, 0
    %s132 = sadd.s32 %s131, 1
    %s133 = scalar_select %p130, %s131, %s132
    %p136 = pneg %p130
    %p137 = scmp.eq.s32.totalorder %s15, 3
    %p138 = por %p136, %p137
    %p139 = scmp.ne.s32.totalorder %s131, %s134
    %p140 = scmp.eq.s32.totalorder %s15, 0
    %p141 = por %p139, %p140
    %p142 = scmp.ne.s32.totalorder %s131, %s134
    %p143 = scmp.eq.s32.totalorder %s20, 3
    %p144 = por %p142, %p143
    %p145 = scmp.ne.s32.totalorder %s134, %s135
    %p146 = scmp.eq.s32.totalorder %s20, 0
    %p147 = por %p145, %p146
    %p148 = scmp.ne.s32.totalorder %s134, %s135
    %p149 = scmp.eq.s32.totalorder %s21, 3
    %p150 = por %p148, %p149
    %p152 = scmp.ne.s32.totalorder %s135, %s151
    %p153 = scmp.eq.s32.totalorder %s21, 0
    %p154 = por %p152, %p153
    %s156 = sadd.s32 %s155, 1
    %p159 = scmp.eq.s32.totalorder %s15, 3
    %p160 = scmp.ne.s32.totalorder %s155, %s157
    %p161 = scmp.eq.s32.totalorder %s15, 0
    %p162 = por %p160, %p161
    %p163 = scmp.ne.s32.totalorder %s155, %s157
    %p164 = scmp.eq.s32.totalorder %s20, 3
    %p165 = por %p163, %p164
    %p166 = scmp.ne.s32.totalorder %s157, %s158
    %p167 = scmp.eq.s32.totalorder %s20, 0
    %p168 = por %p166, %p167
    %p169 = scmp.ne.s32.totalorder %s157, %s158
    %p170 = scmp.eq.s32.totalorder %s21, 3
    %p171 = por %p169, %p170
    %p173 = scmp.ne.s32.totalorder %s158, %s172
    %p174 = scmp.eq.s32.totalorder %s21, 0
    %p175 = por %p173, %p174
    %s177 = sadd.s32 %s176, 1
    %p180 = scmp.eq.s32.totalorder %s15, 3
    %p181 = scmp.ne.s32.totalorder %s176, %s178
    %p182 = scmp.eq.s32.totalorder %s15, 0
    %p183 = por %p181, %p182
    %p184 = scmp.ne.s32.totalorder %s176, %s178
    %p185 = scmp.eq.s32.totalorder %s20, 3
    %p186 = por %p184, %p185
    %p187 = scmp.ne.s32.totalorder %s178, %s179
    %p188 = scmp.eq.s32.totalorder %s20, 0
    %p189 = por %p187, %p188
    %p190 = scmp.ne.s32.totalorder %s178, %s179
    %p191 = scmp.eq.s32.totalorder %s21, 3
    %p192 = por %p190, %p191
    %p194 = scmp.ne.s32.totalorder %s179, %s193
    %p195 = scmp.eq.s32.totalorder %s21, 0
    %p196 = por %p194, %p195
    %s198 = sadd.s32 %s197, 1
    %p201 = scmp.eq.s32.totalorder %s15, 3
    %p202 = scmp.ne.s32.totalorder %s197, %s199
    %p203 = scmp.eq.s32.totalorder %s15, 0
    %p204 = por %p202, %p203
    %p205 = scmp.ne.s32.totalorder %s197, %s199
    %p206 = scmp.eq.s32.totalorder %s20, 3
    %p207 = por %p205, %p206
    %p208 = scmp.ne.s32.totalorder %s199, %s200
    %p209 = scmp.eq.s32.totalorder %s20, 0
    %p210 = por %p208, %p209
    %p211 = scmp.ne.s32.totalorder %s199, %s200
    %p212 = scmp.eq.s32.totalorder %s21, 3
    %p213 = por %p211, %p212
    %p215 = scmp.ne.s32.totalorder %s200, %s214
    %p216 = scmp.eq.s32.totalorder %s21, 0
    %p217 = por %p215, %p216
    %s219 = sadd.s32 %s218, 1
    %p222 = scmp.eq.s32.totalorder %s15, 3
    %p223 = scmp.ne.s32.totalorder %s218, %s220
    %p224 = scmp.eq.s32.totalorder %s15, 0
    %p225 = por %p223, %p224
    %p226 = scmp.ne.s32.totalorder %s218, %s220
    %p227 = scmp.eq.s32.totalorder %s20, 3
    %p228 = por %p226, %p227
    %p229 = scmp.ne.s32.totalorder %s220, %s221
    %p230 = scmp.eq.s32.totalorder %s20, 0
    %p231 = por %p229, %p230
    %p232 = scmp.ne.s32.totalorder %s220, %s221
    %p233 = scmp.eq.s32.totalorder %s21, 3
    %p234 = por %p232, %p233
    %p236 = scmp.ne.s32.totalorder %s221, %s235
    %p237 = scmp.eq.s32.totalorder %s21, 0
    %p238 = por %p236, %p237
    %s240 = sadd.s32 %s239, 1
    %p243 = scmp.eq.s32.totalorder %s15, 3
    %p244 = scmp.ne.s32.totalorder %s239, %s241
    %p245 = scmp.eq.s32.totalorder %s15, 0
    %p246 = por %p244, %p245
    %p247 = scmp.ne.s32.totalorder %s239, %s241
    %p248 = scmp.eq.s32.totalorder %s20, 3
    %p249 = por %p247, %p248
    %p250 = scmp.ne.s32.totalorder %s241, %s242
    %p251 = scmp.eq.s32.totalorder %s20, 0
    %p252 = por %p250, %p251
    %p253 = scmp.ne.s32.totalorder %s241, %s242
    %p254 = scmp.eq.s32.totalorder %s21, 3
    %p255 = por %p253, %p254
    %p257 = scmp.ne.s32.totalorder %s242, %s256
    %p258 = scmp.eq.s32.totalorder %s21, 0
    %p259 = por %p257, %p258
    %s260 = ssub.s32 %s22, %s34
    %s261 = ssub.s32 %s23, %s30
    %s262 = sor.u32 %s260, %s261
    %p263 = scmp.eq.s32.totalorder %s262, 0
    %s265 = sadd.s32 %s264, 1
    %s266 = scalar_select %p263, %s264, %s265
    %p269 = pneg %p263
    %p270 = scmp.eq.s32.totalorder %s15, 3
    %p271 = por %p269, %p270
    %p272 = scmp.ne.s32.totalorder %s264, %s267
    %p273 = scmp.eq.s32.totalorder %s15, 0
    %p274 = por %p272, %p273
    %p275 = scmp.ne.s32.totalorder %s264, %s267
    %p276 = scmp.eq.s32.totalorder %s20, 3
    %p277 = por %p275, %p276
    %p278 = scmp.ne.s32.totalorder %s267, %s268
    %p279 = scmp.eq.s32.totalorder %s20, 0
    %p280 = por %p278, %p279
    %p281 = scmp.ne.s32.totalorder %s267, %s268
    %p282 = scmp.eq.s32.totalorder %s21, 3
    %p283 = por %p281, %p282
    %p285 = scmp.ne.s32.totalorder %s268, %s284
    %p286 = scmp.eq.s32.totalorder %s21, 0
    %p287 = por %p285, %p286
    %p288 = scmp.le.s32.totalorder 1, %s15
    %p289 = scmp.lt.s32.totalorder %s15, 5
    %p290 = pnand %p288, %p289
    %p291 = pneg %p290
    // Predicated region
    $region9: #{tpu_custom_call.1} parent=5 // pred_check
      _
    $region10: #{tpu_custom_call.1} parent=5 // pred_check_branch
      %293 = sbr.rel (%p290) target = $region12
    $region11: #{tpu_custom_call.1} parent=5 // pred_region
      %s294 = ssub.s32 %s15, 1
      // Predicated region
      $region13: #{tpu_custom_call.1} parent=11 // pred_check
        %p295 = pneg %p168
      $region14: #{tpu_custom_call.1} parent=11 // pred_check_branch
        %297 = sbr.rel (%p295) target = $region16
      $region15: #{tpu_custom_call.1} parent=11 // pred_region
        _
      $region16: #{tpu_custom_call.1} parent=11 // pred_fallthru
        _
      // Predicated region
      $region17: #{tpu_custom_call.1} parent=11 // pred_check
        %p298 = pneg %p189
      $region18: #{tpu_custom_call.1} parent=11 // pred_check_branch
        %300 = sbr.rel (%p298) target = $region20
      $region19: #{tpu_custom_call.1} parent=11 // pred_region
        _
      $region20: #{tpu_custom_call.1} parent=11 // pred_fallthru
        _
      // Predicated region
      $region21: #{tpu_custom_call.1} parent=11 // pred_check
        %p301 = pneg %p210
      $region22: #{tpu_custom_call.1} parent=11 // pred_check_branch
        %303 = sbr.rel (%p301) target = $region24
      $region23: #{tpu_custom_call.1} parent=11 // pred_region
        _
      $region24: #{tpu_custom_call.1} parent=11 // pred_fallthru
        _
      // Predicated region
      $region25: #{tpu_custom_call.1} parent=11 // pred_check
        %p304 = pneg %p231
      $region26: #{tpu_custom_call.1} parent=11 // pred_check_branch
        %306 = sbr.rel (%p304) target = $region28
      $region27: #{tpu_custom_call.1} parent=11 // pred_region
        _
      $region28: #{tpu_custom_call.1} parent=11 // pred_fallthru
        _
      // Predicated region
      $region29: #{tpu_custom_call.1} parent=11 // pred_check
        %p307 = pneg %p252
      $region30: #{tpu_custom_call.1} parent=11 // pred_check_branch
        %309 = sbr.rel (%p307) target = $region32
      $region31: #{tpu_custom_call.1} parent=11 // pred_region
        _
      $region32: #{tpu_custom_call.1} parent=11 // pred_fallthru
        _
    $region12: #{tpu_custom_call.1} parent=5 // pred_fallthru
      _
    %p310 = scmp.lt.s32.totalorder %s15, 4
    // Predicated region
    $region33: #{tpu_custom_call.1} parent=5 // pred_check
      %p311 = pneg %p310
    $region34: #{tpu_custom_call.1} parent=5 // pred_check_branch
      %313 = sbr.rel (%p311) target = $region36
    $region35: #{tpu_custom_call.1} parent=5 // pred_region
      // Predicated region
      $region37: #{tpu_custom_call.1} parent=35 // pred_check
        %p314 = pneg %p49
      $region38: #{tpu_custom_call.1} parent=35 // pred_check_branch
        %316 = sbr.rel (%p314) target = $region40
      $region39: #{tpu_custom_call.1} parent=35 // pred_region
        %s317 = smul.u32 8, %s23
        %s318 = ssub.s32 20, %s317
        %p319 = scmp.lt.s32.totalorder %s318, 8
        %s320 = scalar_select %p319, %s318, 8
        %s321 = smul.u32 64, %s320
        %s322 = smul.u32 %s321, 3
        %p323 = scmp.lt.s32.totalorder %s22, 1
        %s324 = scalar_select %p323, %s22, 1
        %p325 = scmp.lt.s32.totalorder %s317, 19
        %s326 = scalar_select %p325, %s317, 19
        %s327 = smul.addr %s326, 3
        %s328 = smul.addr %s324, 60
        %s329 = sadd.s32 %s327, %s328
        %s330 = smul.addr %s329, 4
        %s331 = scalar_lea.vmem %s0, %s330
        %s332 = smul.u32 8, %s23
        %s333 = ssub.s32 20, %s332
        %p334 = scmp.lt.s32.totalorder %s333, 8
        %s335 = scalar_select %p334, %s333, 8
        %s336 = smul.u32 64, %s335
        %s337 = smul.u32 %s336, 3
      $region40: #{tpu_custom_call.1} parent=35 // pred_fallthru
        _
      // Predicated region
      $region41: #{tpu_custom_call.1} parent=35 // pred_check
        %p338 = pneg %p81
      $region42: #{tpu_custom_call.1} parent=35 // pred_check_branch
        %340 = sbr.rel (%p338) target = $region44
      $region43: #{tpu_custom_call.1} parent=35 // pred_region
        %s341 = sadd.s32 %s23, 1
        %s342 = smul.u32 %s341, 2
        %s343 = smul.u32 4, %s342
        %p344 = scmp.lt.s32.totalorder %s22, 1
        %s345 = scalar_select %p344, %s22, 1
        %p346 = scmp.lt.s32.totalorder %s343, 19
        %s347 = scalar_select %p346, %s343, 19
        %s348 = smul.addr %s347, 3
        %s349 = smul.addr %s345, 60
        %s350 = sadd.s32 %s348, %s349
        %s351 = smul.addr %s350, 4
        %s352 = scalar_lea.vmem %s1, %s351
        %s353 = sadd.s32 %s23, 1
        %s354 = smul.u32 %s353, 2
        %s355 = smul.u32 4, %s354
      $region44: #{tpu_custom_call.1} parent=35 // pred_fallthru
        _
      // Predicated region
      $region45: #{tpu_custom_call.1} parent=35 // pred_check
        %p356 = pneg %p109
      $region46: #{tpu_custom_call.1} parent=35 // pred_check_branch
        %358 = sbr.rel (%p356) target = $region48
      $region47: #{tpu_custom_call.1} parent=35 // pred_region
        %s359 = smul.u32 8, %s23
        %s360 = ssub.s32 20, %s359
        %p361 = scmp.lt.s32.totalorder %s360, 8
        %s362 = scalar_select %p361, %s360, 8
        %s363 = smul.u32 64, %s362
        %s364 = smul.u32 %s363, 3
        %p365 = scmp.lt.s32.totalorder %s22, 1
        %s366 = scalar_select %p365, %s22, 1
        %p367 = scmp.lt.s32.totalorder %s359, 19
        %s368 = scalar_select %p367, %s359, 19
        %s369 = smul.addr %s368, 3
        %s370 = smul.addr %s366, 60
        %s371 = sadd.s32 %s369, %s370
        %s372 = smul.addr %s371, 4
        %s373 = scalar_lea.vmem %s2, %s372
        %s374 = smul.u32 8, %s23
        %s375 = ssub.s32 20, %s374
        %p376 = scmp.lt.s32.totalorder %s375, 8
        %s377 = scalar_select %p376, %s375, 8
        %s378 = smul.u32 64, %s377
        %s379 = smul.u32 %s378, 3
      $region48: #{tpu_custom_call.1} parent=35 // pred_fallthru
        _
      // Predicated region
      $region49: #{tpu_custom_call.1} parent=35 // pred_check
        %p380 = pneg %p141
      $region50: #{tpu_custom_call.1} parent=35 // pred_check_branch
        %382 = sbr.rel (%p380) target = $region52
      $region51: #{tpu_custom_call.1} parent=35 // pred_region
        %s383 = sadd.s32 %s23, 1
        %s384 = smul.u32 %s383, 2
        %s385 = smul.u32 4, %s384
        %p386 = scmp.lt.s32.totalorder %s22, 1
        %s387 = scalar_select %p386, %s22, 1
        %p388 = scmp.lt.s32.totalorder %s385, 19
        %s389 = scalar_select %p388, %s385, 19
        %s390 = smul.addr %s389, 3
        %s391 = smul.addr %s387, 60
        %s392 = sadd.s32 %s390, %s391
        %s393 = smul.addr %s392, 4
        %s394 = scalar_lea.vmem %s3, %s393
        %s395 = sadd.s32 %s23, 1
        %s396 = smul.u32 %s395, 2
        %s397 = smul.u32 4, %s396
      $region52: #{tpu_custom_call.1} parent=35 // pred_fallthru
        _
    $region36: #{tpu_custom_call.1} parent=5 // pred_fallthru
      _
    %p398 = scmp.le.s32.totalorder 1, %s15
    %p399 = scmp.lt.s32.totalorder %s15, 5
    %p400 = pnand %p398, %p399
    %p401 = pneg %p400
    // Predicated region
    $region53: #{tpu_custom_call.1} parent=5 // pred_check
      _
    $region54: #{tpu_custom_call.1} parent=5 // pred_check_branch
      %403 = sbr.rel (%p400) target = $region56
    $region55: #{tpu_custom_call.1} parent=5 // pred_region
      %s404 = ssub.s32 %s15, 1
      %s405 = smul.u32 8, %s25
      %s406 = ssub.s32 20, %s405
      %p407 = scmp.lt.s32.totalorder %s406, 8
      %s408 = scalar_select %p407, %s406, 8
      %s409 = smul.u32 64, %s408
      %s410 = smul.u32 %s409, 3
      %p411 = scmp.lt.s32.totalorder %s24, 1
      %s412 = scalar_select %p411, %s24, 1
      %p413 = scmp.lt.s32.totalorder %s405, 19
      %s414 = scalar_select %p413, %s405, 19
      %s415 = smul.addr %s414, 3
      %s416 = smul.addr %s412, 60
      %s417 = sadd.s32 %s415, %s416
      %s418 = smul.addr %s417, 4
      %s419 = scalar_lea.vmem %s0, %s418
      %p420 = pneg %p55
      %p421 = pneg %p52
      %s422 = sadd.s32 %s25, 1
      %s423 = smul.u32 %s422, 2
      %s424 = smul.u32 4, %s423
      %p425 = scmp.lt.s32.totalorder %s24, 1
      %s426 = scalar_select %p425, %s24, 1
      %p427 = scmp.lt.s32.totalorder %s424, 19
      %s428 = scalar_select %p427, %s424, 19
      %s429 = smul.addr %s428, 3
      %s430 = smul.addr %s426, 60
      %s431 = sadd.s32 %s429, %s430
      %s432 = smul.addr %s431, 4
      %s433 = scalar_lea.vmem %s1, %s432
      %p434 = pneg %p87
      %p435 = pneg %p84
      %s436 = smul.u32 8, %s25
      %s437 = ssub.s32 20, %s436
      %p438 = scmp.lt.s32.totalorder %s437, 8
      %s439 = scalar_select %p438, %s437, 8
      %s440 = smul.u32 64, %s439
      %s441 = smul.u32 %s440, 3
      %p442 = scmp.lt.s32.totalorder %s24, 1
      %s443 = scalar_select %p442, %s24, 1
      %p444 = scmp.lt.s32.totalorder %s436, 19
      %s445 = scalar_select %p444, %s436, 19
      %s446 = smul.addr %s445, 3
      %s447 = smul.addr %s443, 60
      %s448 = sadd.s32 %s446, %s447
      %s449 = smul.addr %s448, 4
      %s450 = scalar_lea.vmem %s2, %s449
      %p451 = pneg %p115
      %p452 = pneg %p112
      %s453 = sadd.s32 %s25, 1
      %s454 = smul.u32 %s453, 2
      %s455 = smul.u32 4, %s454
      %p456 = scmp.lt.s32.totalorder %s24, 1
      %s457 = scalar_select %p456, %s24, 1
      %p458 = scmp.lt.s32.totalorder %s455, 19
      %s459 = scalar_select %p458, %s455, 19
      %s460 = smul.addr %s459, 3
      %s461 = smul.addr %s457, 60
      %s462 = sadd.s32 %s460, %s461
      %s463 = smul.addr %s462, 4
      %s464 = scalar_lea.vmem %s3, %s463
      %p465 = pneg %p147
      %p466 = pneg %p144
      %p467 = pneg %p168
      %p468 = pneg %p165
      %p469 = pneg %p189
      %p470 = pneg %p186
      %p471 = pneg %p210
      %p472 = pneg %p207
      %p473 = pneg %p231
      %p474 = pneg %p228
      %p475 = pneg %p252
      %p476 = pneg %p249
      %p477 = pneg %p280
      %p478 = pneg %p277
      %s479 = smul.u32 8, %s25
      %p480 = scmp.lt.s32.totalorder %s24, 1
      %s481 = scalar_select %p480, %s24, 1
      %p482 = scmp.lt.s32.totalorder %s479, 15
      %s483 = scalar_select %p482, %s479, 15
      %s484 = smul.addr %s483, 2
      %s485 = smul.addr %s481, 32
      %s486 = sadd.s32 %s484, %s485
      %s487 = smul.addr %s486, 8
      %s488 = scalar_lea.vmem %s9, %s487
      %s489 = smul.u32 8, %s25
      %s490 = ssub.s32 20, %s489
      %p491 = scmp.lt.s32.totalorder %s490, 8
      %s492 = scalar_select %p491, %s490, 8
      %s493 = smul.u32 64, %s492
      %s494 = smul.u32 %s493, 3
      %p495 = scmp.lt.s32.totalorder %s24, 1
      %s496 = scalar_select %p495, %s24, 1
      %p497 = scmp.lt.s32.totalorder %s489, 19
      %s498 = scalar_select %p497, %s489, 19
      %s499 = smul.addr %s498, 3
      %s500 = smul.addr %s496, 60
      %s501 = sadd.s32 %s499, %s500
      %s502 = smul.addr %s501, 4
      %s503 = scalar_lea.vmem %s0, %s502
      %s504 = smul.u32 8, %s25
      %s505 = ssub.s32 20, %s504
      %p506 = scmp.lt.s32.totalorder %s505, 8
      %s507 = scalar_select %p506, %s505, 8
      %s508 = smul.u32 64, %s507
      %s509 = smul.u32 %s508, 3
      %s510 = sadd.s32 %s25, 1
      %s511 = smul.u32 %s510, 2
      %s512 = smul.u32 4, %s511
      %p513 = scmp.lt.s32.totalorder %s24, 1
      %s514 = scalar_select %p513, %s24, 1
      %p515 = scmp.lt.s32.totalorder %s512, 19
      %s516 = scalar_select %p515, %s512, 19
      %s517 = smul.addr %s516, 3
      %s518 = smul.addr %s514, 60
      %s519 = sadd.s32 %s517, %s518
      %s520 = smul.addr %s519, 4
      %s521 = scalar_lea.vmem %s1, %s520
      %s522 = sadd.s32 %s25, 1
      %s523 = smul.u32 %s522, 2
      %s524 = smul.u32 4, %s523
      %s525 = smul.u32 8, %s25
      %s526 = ssub.s32 20, %s525
      %p527 = scmp.lt.s32.totalorder %s526, 8
      %s528 = scalar_select %p527, %s526, 8
      %s529 = smul.u32 64, %s528
      %s530 = smul.u32 %s529, 3
      %p531 = scmp.lt.s32.totalorder %s24, 1
      %s532 = scalar_select %p531, %s24, 1
      %p533 = scmp.lt.s32.totalorder %s525, 19
      %s534 = scalar_select %p533, %s525, 19
      %s535 = smul.addr %s534, 3
      %s536 = smul.addr %s532, 60
      %s537 = sadd.s32 %s535, %s536
      %s538 = smul.addr %s537, 4
      %s539 = scalar_lea.vmem %s2, %s538
      %s540 = smul.u32 8, %s25
      %s541 = ssub.s32 20, %s540
      %p542 = scmp.lt.s32.totalorder %s541, 8
      %s543 = scalar_select %p542, %s541, 8
      %s544 = smul.u32 64, %s543
      %s545 = smul.u32 %s544, 3
      %s546 = sadd.s32 %s25, 1
      %s547 = smul.u32 %s546, 2
      %s548 = smul.u32 4, %s547
      %p549 = scmp.lt.s32.totalorder %s24, 1
      %s550 = scalar_select %p549, %s24, 1
      %p551 = scmp.lt.s32.totalorder %s548, 19
      %s552 = scalar_select %p551, %s548, 19
      %s553 = smul.addr %s552, 3
      %s554 = smul.addr %s550, 60
      %s555 = sadd.s32 %s553, %s554
      %s556 = smul.addr %s555, 4
      %s557 = scalar_lea.vmem %s3, %s556
      %s558 = sadd.s32 %s25, 1
      %s559 = smul.u32 %s558, 2
      %s560 = smul.u32 4, %s559
      %s561 = smul.u32 8, %s25
      %p562 = scmp.lt.s32.totalorder %s24, 1
      %s563 = scalar_select %p562, %s24, 1
      %p564 = scmp.lt.s32.totalorder %s561, 15
      %s565 = scalar_select %p564, %s561, 15
      %s566 = smul.addr %s565, 2
      %s567 = smul.addr %s563, 32
      %s568 = sadd.s32 %s566, %s567
      %s569 = smul.addr %s568, 8
      %s570 = scalar_lea.vmem %s9, %s569
      %s571 = smul.u32 8, %s25
      %v573 = vld [vmem:[%s503] sm:$0xf]
      %v574 = vld [vmem:[%s503 + $0x4] sm:$0xf]
      %v575 = vld [vmem:[%s503 + $0x8] sm:$0x1]
      %v576 = vld [vmem:[%s503 + $0xc] sm:$0xf]
      %v577 = vld [vmem:[%s503 + $0x10] sm:$0xf]
      %v578 = vld [vmem:[%s503 + $0x14] sm:$0x1]
      %v579 = vld [vmem:[%s503 + $0x18] sm:$0xf]
      %v580 = vld [vmem:[%s503 + $0x1c] sm:$0xf]
      %v581 = vld [vmem:[%s503 + $0x20] sm:$0x1]
      %v582 = vld [vmem:[%s503 + $0x24] sm:$0xf]
      %v583 = vld [vmem:[%s503 + $0x28] sm:$0xf]
      %v584 = vld [vmem:[%s503 + $0x2c] sm:$0x1]
      %v585 = vld [vmem:[%s503 + $0x30] sm:$0xf]
      %v586 = vld [vmem:[%s503 + $0x34] sm:$0xf]
      %v587 = vld [vmem:[%s503 + $0x38] sm:$0x1]
      %v588 = vld [vmem:[%s503 + $0x3c] sm:$0xf]
      %v589 = vld [vmem:[%s503 + $0x40] sm:$0xf]
      %v590 = vld [vmem:[%s503 + $0x44] sm:$0x1]
      %v591 = vld [vmem:[%s503 + $0x48] sm:$0xf]
      %v592 = vld [vmem:[%s503 + $0x4c] sm:$0xf]
      %v593 = vld [vmem:[%s503 + $0x50] sm:$0x1]
      %v594 = vld [vmem:[%s503 + $0x54] sm:$0xf]
      %v595 = vld [vmem:[%s503 + $0x58] sm:$0xf]
      %v596 = vld [vmem:[%s503 + $0x5c] sm:$0x1]
      %v597 = vld [vmem:[%s521] sm:$0xf]
      %v598 = vld [vmem:[%s521 + $0x4] sm:$0xf]
      %v599 = vld [vmem:[%s521 + $0x8] sm:$0x1]
      %v600 = vld [vmem:[%s521 + $0xc] sm:$0xf]
      %v601 = vld [vmem:[%s521 + $0x10] sm:$0xf]
      %v602 = vld [vmem:[%s521 + $0x14] sm:$0x1]
      %v603 = vld [vmem:[%s521 + $0x18] sm:$0xf]
      %v604 = vld [vmem:[%s521 + $0x1c] sm:$0xf]
      %v605 = vld [vmem:[%s521 + $0x20] sm:$0x1]
      %v606 = vld [vmem:[%s521 + $0x24] sm:$0xf]
      %v607 = vld [vmem:[%s521 + $0x28] sm:$0xf]
      %v608 = vld [vmem:[%s521 + $0x2c] sm:$0x1]
      %v609 = vld [vmem:[%s539] sm:$0xf]
      %v610 = vld [vmem:[%s539 + $0x4] sm:$0xf]
      %v611 = vld [vmem:[%s539 + $0x8] sm:$0x1]
      %v612 = vld [vmem:[%s539 + $0xc] sm:$0xf]
      %v613 = vld [vmem:[%s539 + $0x10] sm:$0xf]
      %v614 = vld [vmem:[%s539 + $0x14] sm:$0x1]
      %v615 = vld [vmem:[%s539 + $0x18] sm:$0xf]
      %v616 = vld [vmem:[%s539 + $0x1c] sm:$0xf]
      %v617 = vld [vmem:[%s539 + $0x20] sm:$0x1]
      %v618 = vld [vmem:[%s539 + $0x24] sm:$0xf]
      %v619 = vld [vmem:[%s539 + $0x28] sm:$0xf]
      %v620 = vld [vmem:[%s539 + $0x2c] sm:$0x1]
      %v621 = vld [vmem:[%s539 + $0x30] sm:$0xf]
      %v622 = vld [vmem:[%s539 + $0x34] sm:$0xf]
      %v623 = vld [vmem:[%s539 + $0x38] sm:$0x1]
      %v624 = vld [vmem:[%s539 + $0x3c] sm:$0xf]
      %v625 = vld [vmem:[%s539 + $0x40] sm:$0xf]
      %v626 = vld [vmem:[%s539 + $0x44] sm:$0x1]
      %v627 = vld [vmem:[%s539 + $0x48] sm:$0xf]
      %v628 = vld [vmem:[%s539 + $0x4c] sm:$0xf]
      %v629 = vld [vmem:[%s539 + $0x50] sm:$0x1]
      %v630 = vld [vmem:[%s539 + $0x54] sm:$0xf]
      %v631 = vld [vmem:[%s539 + $0x58] sm:$0xf]
      %v632 = vld [vmem:[%s539 + $0x5c] sm:$0x1]
      %v633 = vld [vmem:[%s557] sm:$0xf]
      %v634 = vld [vmem:[%s557 + $0x4] sm:$0xf]
      %v635 = vld [vmem:[%s557 + $0x8] sm:$0x1]
      %v636 = vld [vmem:[%s557 + $0xc] sm:$0xf]
      %v637 = vld [vmem:[%s557 + $0x10] sm:$0xf]
      %v638 = vld [vmem:[%s557 + $0x14] sm:$0x1]
      %v639 = vld [vmem:[%s557 + $0x18] sm:$0xf]
      %v640 = vld [vmem:[%s557 + $0x1c] sm:$0xf]
      %v641 = vld [vmem:[%s557 + $0x20] sm:$0x1]
      %v642 = vld [vmem:[%s557 + $0x24] sm:$0xf]
      %v643 = vld [vmem:[%s557 + $0x28] sm:$0xf]
      %v644 = vld [vmem:[%s557 + $0x2c] sm:$0x1]
      %v669 = vunpack.c.l.b16 %v573
      %v670 = vunpack.c.l.b16 %v574
      %v671 = vunpack.c.l.b16 %v576
      %v672 = vunpack.c.l.b16 %v577
      %v673 = vunpack.c.l.b16 %v579
      %v674 = vunpack.c.l.b16 %v580
      %v675 = vunpack.c.l.b16 %v582
      %v676 = vunpack.c.l.b16 %v583
      %v677 = vunpack.c.l.b16 %v585
      %v678 = vunpack.c.l.b16 %v586
      %v679 = vunpack.c.l.b16 %v588
      %v680 = vunpack.c.l.b16 %v589
      %v681 = vunpack.c.l.b16 %v591
      %v682 = vunpack.c.l.b16 %v592
      %v683 = vunpack.c.l.b16 %v594
      %v684 = vunpack.c.l.b16 %v595
      %v685 = vunpack.c.l.b16 %v597
      %v686 = vunpack.c.l.b16 %v598
      %v687 = vunpack.c.l.b16 %v600
      %v688 = vunpack.c.l.b16 %v601
      %v689 = vunpack.c.l.b16 %v603
      %v690 = vunpack.c.l.b16 %v604
      %v691 = vunpack.c.l.b16 %v606
      %v692 = vunpack.c.l.b16 %v607
      %v693 = vpack.c.b16 %v670, %v669
      %v694 = vpack.c.b16 %v672, %v671
      %v695 = vpack.c.b16 %v674, %v673
      %v696 = vpack.c.b16 %v676, %v675
      %v697 = vpack.c.b16 %v678, %v677
      %v698 = vpack.c.b16 %v680, %v679
      %v699 = vpack.c.b16 %v682, %v681
      %v700 = vpack.c.b16 %v684, %v683
      %v701 = vpack.c.b16 %v686, %v685
      %v702 = vpack.c.b16 %v688, %v687
      %v703 = vpack.c.b16 %v690, %v689
      %v704 = vpack.c.b16 %v692, %v691
      %v717 = vunpack.c.l.b16 %v575
      %v718 = vunpack.c.l.b16 %v578
      %v719 = vunpack.c.l.b16 %v581
      %v720 = vunpack.c.l.b16 %v584
      %v721 = vunpack.c.l.b16 %v587
      %v722 = vunpack.c.l.b16 %v590
      %v723 = vunpack.c.l.b16 %v593
      %v724 = vunpack.c.l.b16 %v596
      %v725 = vunpack.c.l.b16 %v599
      %v726 = vunpack.c.l.b16 %v602
      %v727 = vunpack.c.l.b16 %v605
      %v728 = vunpack.c.l.b16 %v608
      %v729 = vpack.c.b16 %v717, %v717
      %v730 = vpack.c.b16 %v718, %v718
      %v731 = vpack.c.b16 %v719, %v719
      %v732 = vpack.c.b16 %v720, %v720
      %v733 = vpack.c.b16 %v721, %v721
      %v734 = vpack.c.b16 %v722, %v722
      %v735 = vpack.c.b16 %v723, %v723
      %v736 = vpack.c.b16 %v724, %v724
      %v737 = vpack.c.b16 %v725, %v725
      %v738 = vpack.c.b16 %v726, %v726
      %v739 = vpack.c.b16 %v727, %v727
      %v740 = vpack.c.b16 %v728, %v728
      %vm741 = vsmask.f32 7424
      %v743 = vshrl.u32 %v693, 16
      %v745 = vshll.u32 %v693, 16
      %v747 = vrot.slane %v745, 1
      %v748 = vor.u32 %v743, %v747
      %v750 = vshll.u32 %v729, 16
      %v752 = vrot.slane %v750, 1
      %v753 = vsel %vm741, %v748, %v752
      %v755 = vshrl.u32 %v694, 16
      %v757 = vshll.u32 %v694, 16
      %v759 = vrot.slane %v757, 1
      %v760 = vor.u32 %v755, %v759
      %v762 = vshll.u32 %v730, 16
      %v764 = vrot.slane %v762, 1
      %v765 = vsel %vm741, %v760, %v764
      %v767 = vshrl.u32 %v695, 16
      %v769 = vshll.u32 %v695, 16
      %v771 = vrot.slane %v769, 1
      %v772 = vor.u32 %v767, %v771
      %v774 = vshll.u32 %v731, 16
      %v776 = vrot.slane %v774, 1
      %v777 = vsel %vm741, %v772, %v776
      %v779 = vshrl.u32 %v696, 16
      %v781 = vshll.u32 %v696, 16
      %v783 = vrot.slane %v781, 1
      %v784 = vor.u32 %v779, %v783
      %v786 = vshll.u32 %v732, 16
      %v788 = vrot.slane %v786, 1
      %v789 = vsel %vm741, %v784, %v788
      %v791 = vshrl.u32 %v697, 16
      %v793 = vshll.u32 %v697, 16
      %v795 = vrot.slane %v793, 1
      %v796 = vor.u32 %v791, %v795
      %v798 = vshll.u32 %v733, 16
      %v800 = vrot.slane %v798, 1
      %v801 = vsel %vm741, %v796, %v800
      %v803 = vshrl.u32 %v698, 16
      %v805 = vshll.u32 %v698, 16
      %v807 = vrot.slane %v805, 1
      %v808 = vor.u32 %v803, %v807
      %v810 = vshll.u32 %v734, 16
      %v812 = vrot.slane %v810, 1
      %v813 = vsel %vm741, %v808, %v812
      %v815 = vshrl.u32 %v699, 16
      %v817 = vshll.u32 %v699, 16
      %v819 = vrot.slane %v817, 1
      %v820 = vor.u32 %v815, %v819
      %v822 = vshll.u32 %v735, 16
      %v824 = vrot.slane %v822, 1
      %v825 = vsel %vm741, %v820, %v824
      %v827 = vshrl.u32 %v700, 16
      %v829 = vshll.u32 %v700, 16
      %v831 = vrot.slane %v829, 1
      %v832 = vor.u32 %v827, %v831
      %v834 = vshll.u32 %v736, 16
      %v836 = vrot.slane %v834, 1
      %v837 = vsel %vm741, %v832, %v836
      %v839 = vshrl.u32 %v701, 16
      %v841 = vshll.u32 %v701, 16
      %v843 = vrot.slane %v841, 1
      %v844 = vor.u32 %v839, %v843
      %v846 = vshll.u32 %v737, 16
      %v848 = vrot.slane %v846, 1
      %v849 = vsel %vm741, %v844, %v848
      %v851 = vshrl.u32 %v702, 16
      %v853 = vshll.u32 %v702, 16
      %v855 = vrot.slane %v853, 1
      %v856 = vor.u32 %v851, %v855
      %v858 = vshll.u32 %v738, 16
      %v860 = vrot.slane %v858, 1
      %v861 = vsel %vm741, %v856, %v860
      %v863 = vshrl.u32 %v703, 16
      %v865 = vshll.u32 %v703, 16
      %v867 = vrot.slane %v865, 1
      %v868 = vor.u32 %v863, %v867
      %v870 = vshll.u32 %v739, 16
      %v872 = vrot.slane %v870, 1
      %v873 = vsel %vm741, %v868, %v872
      %v875 = vshrl.u32 %v704, 16
      %v877 = vshll.u32 %v704, 16
      %v879 = vrot.slane %v877, 1
      %v880 = vor.u32 %v875, %v879
      %v882 = vshll.u32 %v740, 16
      %v884 = vrot.slane %v882, 1
      %v885 = vsel %vm741, %v880, %v884
      %886 = vrot.lane.b32.xlu0 %v753, 4
      %v887 = vpop.permute.xlu0 %886
      %888 = vrot.lane.b32.xlu0 %v765, 4
      %v889 = vpop.permute.xlu0 %888
      %890 = vrot.lane.b32.xlu0 %v777, 4
      %v891 = vpop.permute.xlu0 %890
      %892 = vrot.lane.b32.xlu0 %v789, 4
      %v893 = vpop.permute.xlu0 %892
      %894 = vrot.lane.b32.xlu0 %v801, 4
      %v895 = vpop.permute.xlu0 %894
      %896 = vrot.lane.b32.xlu0 %v813, 4
      %v897 = vpop.permute.xlu0 %896
      %898 = vrot.lane.b32.xlu0 %v825, 4
      %v899 = vpop.permute.xlu0 %898
      %900 = vrot.lane.b32.xlu0 %v837, 4
      %v901 = vpop.permute.xlu0 %900
      %902 = vrot.lane.b32.xlu0 %v849, 4
      %v903 = vpop.permute.xlu0 %902
      %904 = vrot.lane.b32.xlu0 %v861, 4
      %v905 = vpop.permute.xlu0 %904
      %906 = vrot.lane.b32.xlu0 %v873, 4
      %v907 = vpop.permute.xlu0 %906
      %908 = vrot.lane.b32.xlu0 %v885, 4
      %v909 = vpop.permute.xlu0 %908
      %vm910 = vcmask 1046528
      %v911 = vrot.slane %v693, 1
      %v912 = vrot.slane %v729, 1
      %v913 = vsel %vm910, %v911, %v912
      %v914 = vrot.slane %v694, 1
      %v915 = vrot.slane %v730, 1
      %v916 = vsel %vm910, %v914, %v915
      %v917 = vrot.slane %v695, 1
      %v918 = vrot.slane %v731, 1
      %v919 = vsel %vm910, %v917, %v918
      %v920 = vrot.slane %v696, 1
      %v921 = vrot.slane %v732, 1
      %v922 = vsel %vm910, %v920, %v921
      %v923 = vrot.slane %v697, 1
      %v924 = vrot.slane %v733, 1
      %v925 = vsel %vm910, %v923, %v924
      %v926 = vrot.slane %v698, 1
      %v927 = vrot.slane %v734, 1
      %v928 = vsel %vm910, %v926, %v927
      %v929 = vrot.slane %v699, 1
      %v930 = vrot.slane %v735, 1
      %v931 = vsel %vm910, %v929, %v930
      %v932 = vrot.slane %v700, 1
      %v933 = vrot.slane %v736, 1
      %v934 = vsel %vm910, %v932, %v933
      %v935 = vrot.slane %v701, 1
      %v936 = vrot.slane %v737, 1
      %v937 = vsel %vm910, %v935, %v936
      %v938 = vrot.slane %v702, 1
      %v939 = vrot.slane %v738, 1
      %v940 = vsel %vm910, %v938, %v939
      %v941 = vrot.slane %v703, 1
      %v942 = vrot.slane %v739, 1
      %v943 = vsel %vm910, %v941, %v942
      %v944 = vrot.slane %v704, 1
      %v945 = vrot.slane %v740, 1
      %v946 = vsel %vm910, %v944, %v945
      %947 = vrot.lane.b32.xlu0 %v913, 8
      %v948 = vpop.permute.xlu0 %947
      %949 = vrot.lane.b32.xlu0 %v916, 8
      %v950 = vpop.permute.xlu0 %949
      %951 = vrot.lane.b32.xlu0 %v919, 8
      %v952 = vpop.permute.xlu0 %951
      %953 = vrot.lane.b32.xlu0 %v922, 8
      %v954 = vpop.permute.xlu0 %953
      %955 = vrot.lane.b32.xlu0 %v925, 8
      %v956 = vpop.permute.xlu0 %955
      %957 = vrot.lane.b32.xlu0 %v928, 8
      %v958 = vpop.permute.xlu0 %957
      %959 = vrot.lane.b32.xlu0 %v931, 8
      %v960 = vpop.permute.xlu0 %959
      %961 = vrot.lane.b32.xlu0 %v934, 8
      %v962 = vpop.permute.xlu0 %961
      %963 = vrot.lane.b32.xlu0 %v937, 8
      %v964 = vpop.permute.xlu0 %963
      %965 = vrot.lane.b32.xlu0 %v940, 8
      %v966 = vpop.permute.xlu0 %965
      %967 = vrot.lane.b32.xlu0 %v943, 8
      %v968 = vpop.permute.xlu0 %967
      %969 = vrot.lane.b32.xlu0 %v946, 8
      %v970 = vpop.permute.xlu0 %969
      %vm971 = vcmask 31744
      %v973 = vsel %vm971, %v693, %v887
      %v975 = vsel %vm971, %v694, %v889
      %v977 = vsel %vm971, %v695, %v891
      %v979 = vsel %vm971, %v696, %v893
      %v981 = vsel %vm971, %v697, %v895
      %v983 = vsel %vm971, %v698, %v897
      %v985 = vsel %vm971, %v699, %v899
      %v987 = vsel %vm971, %v700, %v901
      %v989 = vsel %vm971, %v701, %v903
      %v991 = vsel %vm971, %v702, %v905
      %v993 = vsel %vm971, %v703, %v907
      %v995 = vsel %vm971, %v704, %v909
      %vm996 = vcmask 64512
      %v998 = vsel %vm996, %v973, %v948
      %v1000 = vsel %vm996, %v975, %v950
      %v1002 = vsel %vm996, %v977, %v952
      %v1004 = vsel %vm996, %v979, %v954
      %v1006 = vsel %vm996, %v981, %v956
      %v1008 = vsel %vm996, %v983, %v958
      %v1010 = vsel %vm996, %v985, %v960
      %v1012 = vsel %vm996, %v987, %v962
      %v1014 = vsel %vm996, %v989, %v964
      %v1016 = vsel %vm996, %v991, %v966
      %v1018 = vsel %vm996, %v993, %v968
      %v1020 = vsel %vm996, %v995, %v970
      %v1045 = vunpack.c.l.b16 %v609
      %v1046 = vunpack.c.l.b16 %v610
      %v1047 = vunpack.c.l.b16 %v612
      %v1048 = vunpack.c.l.b16 %v613
      %v1049 = vunpack.c.l.b16 %v615
      %v1050 = vunpack.c.l.b16 %v616
      %v1051 = vunpack.c.l.b16 %v618
      %v1052 = vunpack.c.l.b16 %v619
      %v1053 = vunpack.c.l.b16 %v621
      %v1054 = vunpack.c.l.b16 %v622
      %v1055 = vunpack.c.l.b16 %v624
      %v1056 = vunpack.c.l.b16 %v625
      %v1057 = vunpack.c.l.b16 %v627
      %v1058 = vunpack.c.l.b16 %v628
      %v1059 = vunpack.c.l.b16 %v630
      %v1060 = vunpack.c.l.b16 %v631
      %v1061 = vunpack.c.l.b16 %v633
      %v1062 = vunpack.c.l.b16 %v634
      %v1063 = vunpack.c.l.b16 %v636
      %v1064 = vunpack.c.l.b16 %v637
      %v1065 = vunpack.c.l.b16 %v639
      %v1066 = vunpack.c.l.b16 %v640
      %v1067 = vunpack.c.l.b16 %v642
      %v1068 = vunpack.c.l.b16 %v643
      %v1069 = vpack.c.b16 %v1046, %v1045
      %v1070 = vpack.c.b16 %v1048, %v1047
      %v1071 = vpack.c.b16 %v1050, %v1049
      %v1072 = vpack.c.b16 %v1052, %v1051
      %v1073 = vpack.c.b16 %v1054, %v1053
      %v1074 = vpack.c.b16 %v1056, %v1055
      %v1075 = vpack.c.b16 %v1058, %v1057
      %v1076 = vpack.c.b16 %v1060, %v1059
      %v1077 = vpack.c.b16 %v1062, %v1061
      %v1078 = vpack.c.b16 %v1064, %v1063
      %v1079 = vpack.c.b16 %v1066, %v1065
      %v1080 = vpack.c.b16 %v1068, %v1067
      %v1093 = vunpack.c.l.b16 %v611
      %v1094 = vunpack.c.l.b16 %v614
      %v1095 = vunpack.c.l.b16 %v617
      %v1096 = vunpack.c.l.b16 %v620
      %v1097 = vunpack.c.l.b16 %v623
      %v1098 = vunpack.c.l.b16 %v626
      %v1099 = vunpack.c.l.b16 %v629
      %v1100 = vunpack.c.l.b16 %v632
      %v1101 = vunpack.c.l.b16 %v635
      %v1102 = vunpack.c.l.b16 %v638
      %v1103 = vunpack.c.l.b16 %v641
      %v1104 = vunpack.c.l.b16 %v644
      %v1105 = vpack.c.b16 %v1093, %v1093
      %v1106 = vpack.c.b16 %v1094, %v1094
      %v1107 = vpack.c.b16 %v1095, %v1095
      %v1108 = vpack.c.b16 %v1096, %v1096
      %v1109 = vpack.c.b16 %v1097, %v1097
      %v1110 = vpack.c.b16 %v1098, %v1098
      %v1111 = vpack.c.b16 %v1099, %v1099
      %v1112 = vpack.c.b16 %v1100, %v1100
      %v1113 = vpack.c.b16 %v1101, %v1101
      %v1114 = vpack.c.b16 %v1102, %v1102
      %v1115 = vpack.c.b16 %v1103, %v1103
      %v1116 = vpack.c.b16 %v1104, %v1104
      %v1118 = vshrl.u32 %v1069, 16
      %v1120 = vshll.u32 %v1069, 16
      %v1122 = vrot.slane %v1120, 1
      %v1123 = vor.u32 %v1118, %v1122
      %v1125 = vshll.u32 %v1105, 16
      %v1127 = vrot.slane %v1125, 1
      %v1128 = vsel %vm741, %v1123, %v1127
      %v1130 = vshrl.u32 %v1070, 16
      %v1132 = vshll.u32 %v1070, 16
      %v1134 = vrot.slane %v1132, 1
      %v1135 = vor.u32 %v1130, %v1134
      %v1137 = vshll.u32 %v1106, 16
      %v1139 = vrot.slane %v1137, 1
      %v1140 = vsel %vm741, %v1135, %v1139
      %v1142 = vshrl.u32 %v1071, 16
      %v1144 = vshll.u32 %v1071, 16
      %v1146 = vrot.slane %v1144, 1
      %v1147 = vor.u32 %v1142, %v1146
      %v1149 = vshll.u32 %v1107, 16
      %v1151 = vrot.slane %v1149, 1
      %v1152 = vsel %vm741, %v1147, %v1151
      %v1154 = vshrl.u32 %v1072, 16
      %v1156 = vshll.u32 %v1072, 16
      %v1158 = vrot.slane %v1156, 1
      %v1159 = vor.u32 %v1154, %v1158
      %v1161 = vshll.u32 %v1108, 16
      %v1163 = vrot.slane %v1161, 1
      %v1164 = vsel %vm741, %v1159, %v1163
      %v1166 = vshrl.u32 %v1073, 16
      %v1168 = vshll.u32 %v1073, 16
      %v1170 = vrot.slane %v1168, 1
      %v1171 = vor.u32 %v1166, %v1170
      %v1173 = vshll.u32 %v1109, 16
      %v1175 = vrot.slane %v1173, 1
      %v1176 = vsel %vm741, %v1171, %v1175
      %v1178 = vshrl.u32 %v1074, 16
      %v1180 = vshll.u32 %v1074, 16
      %v1182 = vrot.slane %v1180, 1
      %v1183 = vor.u32 %v1178, %v1182
      %v1185 = vshll.u32 %v1110, 16
      %v1187 = vrot.slane %v1185, 1
      %v1188 = vsel %vm741, %v1183, %v1187
      %v1190 = vshrl.u32 %v1075, 16
      %v1192 = vshll.u32 %v1075, 16
      %v1194 = vrot.slane %v1192, 1
      %v1195 = vor.u32 %v1190, %v1194
      %v1197 = vshll.u32 %v1111, 16
      %v1199 = vrot.slane %v1197, 1
      %v1200 = vsel %vm741, %v1195, %v1199
      %v1202 = vshrl.u32 %v1076, 16
      %v1204 = vshll.u32 %v1076, 16
      %v1206 = vrot.slane %v1204, 1
      %v1207 = vor.u32 %v1202, %v1206
      %v1209 = vshll.u32 %v1112, 16
      %v1211 = vrot.slane %v1209, 1
      %v1212 = vsel %vm741, %v1207, %v1211
      %v1214 = vshrl.u32 %v1077, 16
      %v1216 = vshll.u32 %v1077, 16
      %v1218 = vrot.slane %v1216, 1
      %v1219 = vor.u32 %v1214, %v1218
      %v1221 = vshll.u32 %v1113, 16
      %v1223 = vrot.slane %v1221, 1
      %v1224 = vsel %vm741, %v1219, %v1223
      %v1226 = vshrl.u32 %v1078, 16
      %v1228 = vshll.u32 %v1078, 16
      %v1230 = vrot.slane %v1228, 1
      %v1231 = vor.u32 %v1226, %v1230
      %v1233 = vshll.u32 %v1114, 16
      %v1235 = vrot.slane %v1233, 1
      %v1236 = vsel %vm741, %v1231, %v1235
      %v1238 = vshrl.u32 %v1079, 16
      %v1240 = vshll.u32 %v1079, 16
      %v1242 = vrot.slane %v1240, 1
      %v1243 = vor.u32 %v1238, %v1242
      %v1245 = vshll.u32 %v1115, 16
      %v1247 = vrot.slane %v1245, 1
      %v1248 = vsel %vm741, %v1243, %v1247
      %v1250 = vshrl.u32 %v1080, 16
      %v1252 = vshll.u32 %v1080, 16
      %v1254 = vrot.slane %v1252, 1
      %v1255 = vor.u32 %v1250, %v1254
      %v1257 = vshll.u32 %v1116, 16
      %v1259 = vrot.slane %v1257, 1
      %v1260 = vsel %vm741, %v1255, %v1259
      %1261 = vrot.lane.b32.xlu0 %v1128, 4
      %v1262 = vpop.permute.xlu0 %1261
      %1263 = vrot.lane.b32.xlu0 %v1140, 4
      %v1264 = vpop.permute.xlu0 %1263
      %1265 = vrot.lane.b32.xlu0 %v1152, 4
      %v1266 = vpop.permute.xlu0 %1265
      %1267 = vrot.lane.b32.xlu0 %v1164, 4
      %v1268 = vpop.permute.xlu0 %1267
      %1269 = vrot.lane.b32.xlu0 %v1176, 4
      %v1270 = vpop.permute.xlu0 %1269
      %1271 = vrot.lane.b32.xlu0 %v1188, 4
      %v1272 = vpop.permute.xlu0 %1271
      %1273 = vrot.lane.b32.xlu0 %v1200, 4
      %v1274 = vpop.permute.xlu0 %1273
      %1275 = vrot.lane.b32.xlu0 %v1212, 4
      %v1276 = vpop.permute.xlu0 %1275
      %1277 = vrot.lane.b32.xlu0 %v1224, 4
      %v1278 = vpop.permute.xlu0 %1277
      %1279 = vrot.lane.b32.xlu0 %v1236, 4
      %v1280 = vpop.permute.xlu0 %1279
      %1281 = vrot.lane.b32.xlu0 %v1248, 4
      %v1282 = vpop.permute.xlu0 %1281
      %1283 = vrot.lane.b32.xlu0 %v1260, 4
      %v1284 = vpop.permute.xlu0 %1283
      %v1285 = vrot.slane %v1069, 1
      %v1286 = vrot.slane %v1105, 1
      %v1287 = vsel %vm910, %v1285, %v1286
      %v1288 = vrot.slane %v1070, 1
      %v1289 = vrot.slane %v1106, 1
      %v1290 = vsel %vm910, %v1288, %v1289
      %v1291 = vrot.slane %v1071, 1
      %v1292 = vrot.slane %v1107, 1
      %v1293 = vsel %vm910, %v1291, %v1292
      %v1294 = vrot.slane %v1072, 1
      %v1295 = vrot.slane %v1108, 1
      %v1296 = vsel %vm910, %v1294, %v1295
      %v1297 = vrot.slane %v1073, 1
      %v1298 = vrot.slane %v1109, 1
      %v1299 = vsel %vm910, %v1297, %v1298
      %v1300 = vrot.slane %v1074, 1
      %v1301 = vrot.slane %v1110, 1
      %v1302 = vsel %vm910, %v1300, %v1301
      %v1303 = vrot.slane %v1075, 1
      %v1304 = vrot.slane %v1111, 1
      %v1305 = vsel %vm910, %v1303, %v1304
      %v1306 = vrot.slane %v1076, 1
      %v1307 = vrot.slane %v1112, 1
      %v1308 = vsel %vm910, %v1306, %v1307
      %v1309 = vrot.slane %v1077, 1
      %v1310 = vrot.slane %v1113, 1
      %v1311 = vsel %vm910, %v1309, %v1310
      %v1312 = vrot.slane %v1078, 1
      %v1313 = vrot.slane %v1114, 1
      %v1314 = vsel %vm910, %v1312, %v1313
      %v1315 = vrot.slane %v1079, 1
      %v1316 = vrot.slane %v1115, 1
      %v1317 = vsel %vm910, %v1315, %v1316
      %v1318 = vrot.slane %v1080, 1
      %v1319 = vrot.slane %v1116, 1
      %v1320 = vsel %vm910, %v1318, %v1319
      %1321 = vrot.lane.b32.xlu0 %v1287, 8
      %v1322 = vpop.permute.xlu0 %1321
      %1323 = vrot.lane.b32.xlu0 %v1290, 8
      %v1324 = vpop.permute.xlu0 %1323
      %1325 = vrot.lane.b32.xlu0 %v1293, 8
      %v1326 = vpop.permute.xlu0 %1325
      %1327 = vrot.lane.b32.xlu0 %v1296, 8
      %v1328 = vpop.permute.xlu0 %1327
      %1329 = vrot.lane.b32.xlu0 %v1299, 8
      %v1330 = vpop.permute.xlu0 %1329
      %1331 = vrot.lane.b32.xlu0 %v1302, 8
      %v1332 = vpop.permute.xlu0 %1331
      %1333 = vrot.lane.b32.xlu0 %v1305, 8
      %v1334 = vpop.permute.xlu0 %1333
      %1335 = vrot.lane.b32.xlu0 %v1308, 8
      %v1336 = vpop.permute.xlu0 %1335
      %1337 = vrot.lane.b32.xlu0 %v1311, 8
      %v1338 = vpop.permute.xlu0 %1337
      %1339 = vrot.lane.b32.xlu0 %v1314, 8
      %v1340 = vpop.permute.xlu0 %1339
      %1341 = vrot.lane.b32.xlu0 %v1317, 8
      %v1342 = vpop.permute.xlu0 %1341
      %1343 = vrot.lane.b32.xlu0 %v1320, 8
      %v1344 = vpop.permute.xlu0 %1343
      %v1346 = vsel %vm971, %v1069, %v1262
      %v1348 = vsel %vm971, %v1070, %v1264
      %v1350 = vsel %vm971, %v1071, %v1266
      %v1352 = vsel %vm971, %v1072, %v1268
      %v1354 = vsel %vm971, %v1073, %v1270
      %v1356 = vsel %vm971, %v1074, %v1272
      %v1358 = vsel %vm971, %v1075, %v1274
      %v1360 = vsel %vm971, %v1076, %v1276
      %v1362 = vsel %vm971, %v1077, %v1278
      %v1364 = vsel %vm971, %v1078, %v1280
      %v1366 = vsel %vm971, %v1079, %v1282
      %v1368 = vsel %vm971, %v1080, %v1284
      %v1370 = vsel %vm996, %v1346, %v1322
      %v1372 = vsel %vm996, %v1348, %v1324
      %v1374 = vsel %vm996, %v1350, %v1326
      %v1376 = vsel %vm996, %v1352, %v1328
      %v1378 = vsel %vm996, %v1354, %v1330
      %v1380 = vsel %vm996, %v1356, %v1332
      %v1382 = vsel %vm996, %v1358, %v1334
      %v1384 = vsel %vm996, %v1360, %v1336
      %v1386 = vsel %vm996, %v1362, %v1338
      %v1388 = vsel %vm996, %v1364, %v1340
      %v1390 = vsel %vm996, %v1366, %v1342
      %v1392 = vsel %vm996, %v1368, %v1344
      %v1393 = vld [vmem:[%s4] sm:$0xf]
      %v1394 = vld [vmem:[%s4 + $0x4] sm:$0x3]
      %s1395 = scalar_lea.vmem %s4, 8
      %v1396 = vld [vmem:[%s1395] sm:$0xf]
      %v1397 = vld [vmem:[%s1395 + $0x4] sm:$0x3]
      %v1400 = vunpack.c.l.b16 %v1396
      %v1401 = vunpack.c.l.b16 %v1397
      %v1402 = vpack.c.b16 %v1401, %v1400
      %vm1403 = vcmask 97280
      %v1404 = vsel %vm1403, %v1000, 0
      %v1406 = vsel %vm1403, %v1002, 0
      %v1408 = vsel %vm1403, %v1004, 0
      %v1410 = vsel %vm1403, %v1006, 0
      %v1412 = vsel %vm1403, %v1008, 0
      %v1414 = vsel %vm1403, %v1010, 0
      %v1416 = vsel %vm1403, %v1012, 0
      %v1418 = vsel %vm1403, %v1014, 0
      %v1420 = vsel %vm1403, %v1016, 0
      %v1422 = vsel %vm1403, %v1018, 0
      %vm1424 = vcmask 1045504
      %v1426 = vsel %vm1424, %v1402, 0
      %1428 = vmatprep.subr.bf16.mxu0 0
      %1429 = vmatpush1.bf16.msra.mxu0 %v1426
      %1430 = vmatprep.subr.bf16.mxu0 0
      %1431 = vmatpush1.bf16.msra.mxu0 0
      %1432 = vmatprep.subr.bf16.mxu0 0
      %1433 = vmatpush1.bf16.msra.mxu0 0
      %1434 = vmatprep.subr.bf16.mxu0 0
      %1435 = vmatpush1.bf16.msra.mxu0 0
      %1436 = vmatprep.subr.bf16.mxu0 0
      %1437 = vmatpush1.bf16.msra.mxu0 0
      %1438 = vmatprep.subr.bf16.mxu0 0
      %1439 = vmatpush1.bf16.msra.mxu0 0
      %1440 = vmatprep.subr.bf16.mxu0 0
      %1441 = vmatpush1.bf16.msra.mxu0 0
      %1442 = vmatprep.subr.bf16.mxu0 0
      %1443 = vmatpush1.bf16.msra.mxu0 0
      %1444 = vmatprep.subr.bf16.mxu0 0
      %1445 = vmatpush1.bf16.msra.mxu0 0
      %1446 = vmatprep.subr.bf16.mxu0 0
      %1447 = vmatpush1.bf16.msra.mxu0 0
      %1448 = vmatprep.subr.bf16.mxu0 0
      %1449 = vmatpush1.bf16.msra.mxu0 0
      %1450 = vmatprep.subr.bf16.mxu0 0
      %1451 = vmatpush1.bf16.msra.mxu0 0
      %1452 = vmatprep.subr.bf16.mxu0 0
      %1453 = vmatpush1.bf16.msra.mxu0 0
      %1454 = vmatprep.subr.bf16.mxu0 0
      %1455 = vmatpush1.bf16.msra.mxu0 0
      %1456 = vmatprep.subr.bf16.mxu0 0
      %1457 = vmatpush1.bf16.msra.mxu0 0
      %1458 = vmatprep.subr.bf16.mxu0 0
      %1459 = vmatpush1.bf16.msra.mxu0 0
      %1460 = vmatprep.mubr.bf16.mxu0 0
      %1461 = vmatmul.mubr.bf16.gmra.mrb[0].mxu0 %v1404
      %v1462 = vpop.f32.mrb[0].mxu0
      %v1463 = vadd.f32 0.0, %v1462
      %v1464 = vpop.f32.mrb[0].mxu0
      %v1465 = vpop.f32.mrb[0].mxu0
      %v1466 = vadd.f32 0.0, %v1465
      %v1467 = vpop.f32.mrb[0].mxu0
      %1468 = vmatprep.mubr.bf16.mxu0 0
      %1469 = vmatmul.mubr.bf16.gmra.mrb[0].mxu0 %v1406
      %v1470 = vpop.f32.mrb[0].mxu0
      %v1471 = vadd.f32 0.0, %v1470
      %v1472 = vpop.f32.mrb[0].mxu0
      %v1473 = vpop.f32.mrb[0].mxu0
      %v1474 = vadd.f32 0.0, %v1473
      %v1475 = vpop.f32.mrb[0].mxu0
      %1476 = vmatprep.mubr.bf16.mxu0 0
      %1477 = vmatmul.mubr.bf16.gmra.mrb[0].mxu0 %v1408
      %v1478 = vpop.f32.mrb[0].mxu0
      %v1479 = vadd.f32 0.0, %v1478
      %v1480 = vpop.f32.mrb[0].mxu0
      %v1481 = vpop.f32.mrb[0].mxu0
      %v1482 = vadd.f32 0.0, %v1481
      %v1483 = vpop.f32.mrb[0].mxu0
      %1484 = vmatprep.mubr.bf16.mxu0 0
      %1485 = vmatmul.mubr.bf16.gmra.mrb[0].mxu0 %v1410
      %v1486 = vpop.f32.mrb[0].mxu0
      %v1487 = vadd.f32 0.0, %v1486
      %v1488 = vpop.f32.mrb[0].mxu0
      %v1489 = vpop.f32.mrb[0].mxu0
      %v1490 = vadd.f32 0.0, %v1489
      %v1491 = vpop.f32.mrb[0].mxu0
      %1492 = vmatprep.mubr.bf16.mxu0 0
      %1493 = vmatmul.mubr.bf16.gmra.mrb[0].mxu0 %v1412
      %v1494 = vpop.f32.mrb[0].mxu0
      %v1495 = vadd.f32 0.0, %v1494
      %v1496 = vpop.f32.mrb[0].mxu0
      %v1497 = vpop.f32.mrb[0].mxu0
      %v1498 = vadd.f32 0.0, %v1497
      %v1499 = vpop.f32.mrb[0].mxu0
      %1500 = vmatprep.mubr.bf16.mxu0 0
      %1501 = vmatmul.mubr.bf16.gmra.mrb[0].mxu0 %v1414
      %v1502 = vpop.f32.mrb[0].mxu0
      %v1503 = vadd.f32 0.0, %v1502
      %v1504 = vpop.f32.mrb[0].mxu0
      %v1505 = vpop.f32.mrb[0].mxu0
      %v1506 = vadd.f32 0.0, %v1505
      %v1507 = vpop.f32.mrb[0].mxu0
      %1508 = vmatprep.mubr.bf16.mxu0 0
      %1509 = vmatmul.mubr.bf16.gmra.mrb[0].mxu0 %v1416
      %v1510 = vpop.f32.mrb[0].mxu0
      %v1511 = vadd.f32 0.0, %v1510
      %v1512 = vpop.f32.mrb[0].mxu0
      %v1513 = vpop.f32.mrb[0].mxu0
      %v1514 = vadd.f32 0.0, %v1513
      %v1515 = vpop.f32.mrb[0].mxu0
      %1516 = vmatprep.mubr.bf16.mxu0 0
      %1517 = vmatmul.mubr.bf16.gmra.mrb[0].mxu0 %v1418
      %v1518 = vpop.f32.mrb[0].mxu0
      %v1519 = vadd.f32 0.0, %v1518
      %v1520 = vpop.f32.mrb[0].mxu0
      %v1521 = vpop.f32.mrb[0].mxu0
      %v1522 = vadd.f32 0.0, %v1521
      %v1523 = vpop.f32.mrb[0].mxu0
      %1524 = vmatprep.mubr.bf16.mxu0 0
      %1525 = vmatmul.mubr.bf16.gmra.mrb[0].mxu0 %v1420
      %v1526 = vpop.f32.mrb[0].mxu0
      %v1527 = vadd.f32 0.0, %v1526
      %v1528 = vpop.f32.mrb[0].mxu0
      %v1529 = vpop.f32.mrb[0].mxu0
      %v1530 = vadd.f32 0.0, %v1529
      %v1531 = vpop.f32.mrb[0].mxu0
      %1532 = vmatprep.mubr.bf16.mxu0 0
      %1533 = vmatmul.mubr.bf16.gmra.mrb[0].mxu0 %v1422
      %v1534 = vpop.f32.mrb[0].mxu0
      %v1535 = vadd.f32 0.0, %v1534
      %v1536 = vpop.f32.mrb[0].mxu0
      %v1537 = vpop.f32.mrb[0].mxu0
      %v1538 = vadd.f32 0.0, %v1537
      %v1539 = vpop.f32.mrb[0].mxu0
      %1540 = vdwg.mxu0
      %v1543 = vunpack.c.l.b16 %v1393
      %v1544 = vunpack.c.l.b16 %v1394
      %v1545 = vpack.c.b16 %v1544, %v1543
      %v1546 = vsel %vm1403, %v998, 0
      %v1549 = vsel %vm1424, %v1545, 0
      %1551 = vmatprep.subr.bf16.mxu0 0
      %1552 = vmatpush1.bf16.msra.mxu0 %v1549
      %1553 = vmatprep.subr.bf16.mxu0 0
      %1554 = vmatpush1.bf16.msra.mxu0 0
      %1555 = vmatprep.subr.bf16.mxu0 0
      %1556 = vmatpush1.bf16.msra.mxu0 0
      %1557 = vmatprep.subr.bf16.mxu0 0
      %1558 = vmatpush1.bf16.msra.mxu0 0
      %1559 = vmatprep.subr.bf16.mxu0 0
      %1560 = vmatpush1.bf16.msra.mxu0 0
      %1561 = vmatprep.subr.bf16.mxu0 0
      %1562 = vmatpush1.bf16.msra.mxu0 0
      %1563 = vmatprep.subr.bf16.mxu0 0
      %1564 = vmatpush1.bf16.msra.mxu0 0
      %1565 = vmatprep.subr.bf16.mxu0 0
      %1566 = vmatpush1.bf16.msra.mxu0 0
      %1567 = vmatprep.subr.bf16.mxu0 0
      %1568 = vmatpush1.bf16.msra.mxu0 0
      %1569 = vmatprep.subr.bf16.mxu0 0
      %1570 = vmatpush1.bf16.msra.mxu0 0
      %1571 = vmatprep.subr.bf16.mxu0 0
      %1572 = vmatpush1.bf16.msra.mxu0 0
      %1573 = vmatprep.subr.bf16.mxu0 0
      %1574 = vmatpush1.bf16.msra.mxu0 0
      %1575 = vmatprep.subr.bf16.mxu0 0
      %1576 = vmatpush1.bf16.msra.mxu0 0
      %1577 = vmatprep.subr.bf16.mxu0 0
      %1578 = vmatpush1.bf16.msra.mxu0 0
      %1579 = vmatprep.subr.bf16.mxu0 0
      %1580 = vmatpush1.bf16.msra.mxu0 0
      %1581 = vmatprep.subr.bf16.mxu0 0
      %1582 = vmatpush1.bf16.msra.mxu0 0
      %1583 = vmatprep.mubr.bf16.mxu0 0
      %1584 = vmatmul.mubr.bf16.gmra.mrb[0].mxu0 %v1546
      %v1585 = vpop.f32.mrb[0].mxu0
      %v1586 = vadd.f32 %v1463, %v1585
      %v1587 = vpop.f32.mrb[0].mxu0
      %v1588 = vpop.f32.mrb[0].mxu0
      %v1589 = vadd.f32 %v1466, %v1588
      %v1590 = vpop.f32.mrb[0].mxu0
      %1591 = vmatprep.mubr.bf16.mxu0 0
      %1592 = vmatmul.mubr.bf16.gmra.mrb[0].mxu0 %v1404
      %v1593 = vpop.f32.mrb[0].mxu0
      %v1594 = vadd.f32 %v1471, %v1593
      %v1595 = vpop.f32.mrb[0].mxu0
      %v1596 = vpop.f32.mrb[0].mxu0
      %v1597 = vadd.f32 %v1474, %v1596
      %v1598 = vpop.f32.mrb[0].mxu0
      %1599 = vmatprep.mubr.bf16.mxu0 0
      %1600 = vmatmul.mubr.bf16.gmra.mrb[0].mxu0 %v1406
      %v1601 = vpop.f32.mrb[0].mxu0
      %v1602 = vadd.f32 %v1479, %v1601
      %v1603 = vpop.f32.mrb[0].mxu0
      %v1604 = vpop.f32.mrb[0].mxu0
      %v1605 = vadd.f32 %v1482, %v1604
      %v1606 = vpop.f32.mrb[0].mxu0
      %1607 = vmatprep.mubr.bf16.mxu0 0
      %1608 = vmatmul.mubr.bf16.gmra.mrb[0].mxu0 %v1408
      %v1609 = vpop.f32.mrb[0].mxu0
      %v1610 = vadd.f32 %v1487, %v1609
      %v1611 = vpop.f32.mrb[0].mxu0
      %v1612 = vpop.f32.mrb[0].mxu0
      %v1613 = vadd.f32 %v1490, %v1612
      %v1614 = vpop.f32.mrb[0].mxu0
      %1615 = vmatprep.mubr.bf16.mxu0 0
      %1616 = vmatmul.mubr.bf16.gmra.mrb[0].mxu0 %v1410
      %v1617 = vpop.f32.mrb[0].mxu0
      %v1618 = vadd.f32 %v1495, %v1617
      %v1619 = vpop.f32.mrb[0].mxu0
      %v1620 = vpop.f32.mrb[0].mxu0
      %v1621 = vadd.f32 %v1498, %v1620
      %v1622 = vpop.f32.mrb[0].mxu0
      %1623 = vmatprep.mubr.bf16.mxu0 0
      %1624 = vmatmul.mubr.bf16.gmra.mrb[0].mxu0 %v1412
      %v1625 = vpop.f32.mrb[0].mxu0
      %v1626 = vadd.f32 %v1503, %v1625
      %v1627 = vpop.f32.mrb[0].mxu0
      %v1628 = vpop.f32.mrb[0].mxu0
      %v1629 = vadd.f32 %v1506, %v1628
      %v1630 = vpop.f32.mrb[0].mxu0
      %1631 = vmatprep.mubr.bf16.mxu0 0
      %1632 = vmatmul.mubr.bf16.gmra.mrb[0].mxu0 %v1414
      %v1633 = vpop.f32.mrb[0].mxu0
      %v1634 = vadd.f32 %v1511, %v1633
      %v1635 = vpop.f32.mrb[0].mxu0
      %v1636 = vpop.f32.mrb[0].mxu0
      %v1637 = vadd.f32 %v1514, %v1636
      %v1638 = vpop.f32.mrb[0].mxu0
      %1639 = vmatprep.mubr.bf16.mxu0 0
      %1640 = vmatmul.mubr.bf16.gmra.mrb[0].mxu0 %v1416
      %v1641 = vpop.f32.mrb[0].mxu0
      %v1642 = vadd.f32 %v1519, %v1641
      %v1643 = vpop.f32.mrb[0].mxu0
      %v1644 = vpop.f32.mrb[0].mxu0
      %v1645 = vadd.f32 %v1522, %v1644
      %v1646 = vpop.f32.mrb[0].mxu0
      %1647 = vmatprep.mubr.bf16.mxu0 0
      %1648 = vmatmul.mubr.bf16.gmra.mrb[0].mxu0 %v1418
      %v1649 = vpop.f32.mrb[0].mxu0
      %v1650 = vadd.f32 %v1527, %v1649
      %v1651 = vpop.f32.mrb[0].mxu0
      %v1652 = vpop.f32.mrb[0].mxu0
      %v1653 = vadd.f32 %v1530, %v1652
      %v1654 = vpop.f32.mrb[0].mxu0
      %1655 = vmatprep.mubr.bf16.mxu0 0
      %1656 = vmatmul.mubr.bf16.gmra.mrb[0].mxu0 %v1420
      %v1657 = vpop.f32.mrb[0].mxu0
      %v1658 = vadd.f32 %v1535, %v1657
      %v1659 = vpop.f32.mrb[0].mxu0
      %v1660 = vpop.f32.mrb[0].mxu0
      %v1661 = vadd.f32 %v1538, %v1660
      %v1662 = vpop.f32.mrb[0].mxu0
      %1663 = vdwg.mxu0
      %s1664 = scalar_lea.vmem %s4, 16
      %v1665 = vld [vmem:[%s1664] sm:$0xf]
      %v1666 = vld [vmem:[%s1664 + $0x4] sm:$0x3]
      %v1669 = vunpack.c.l.b16 %v1665
      %v1670 = vunpack.c.l.b16 %v1666
      %v1671 = vpack.c.b16 %v1670, %v1669
      %v1672 = vsel %vm1403, %v1020, 0
      %v1675 = vsel %vm1424, %v1671, 0
      %1677 = vmatprep.subr.bf16.mxu0 0
      %1678 = vmatpush1.bf16.msra.mxu0 %v1675
      %1679 = vmatprep.subr.bf16.mxu0 0
      %1680 = vmatpush1.bf16.msra.mxu0 0
      %1681 = vmatprep.subr.bf16.mxu0 0
      %1682 = vmatpush1.bf16.msra.mxu0 0
      %1683 = vmatprep.subr.bf16.mxu0 0
      %1684 = vmatpush1.bf16.msra.mxu0 0
      %1685 = vmatprep.subr.bf16.mxu0 0
      %1686 = vmatpush1.bf16.msra.mxu0 0
      %1687 = vmatprep.subr.bf16.mxu0 0
      %1688 = vmatpush1.bf16.msra.mxu0 0
      %1689 = vmatprep.subr.bf16.mxu0 0
      %1690 = vmatpush1.bf16.msra.mxu0 0
      %1691 = vmatprep.subr.bf16.mxu0 0
      %1692 = vmatpush1.bf16.msra.mxu0 0
      %1693 = vmatprep.subr.bf16.mxu0 0
      %1694 = vmatpush1.bf16.msra.mxu0 0
      %1695 = vmatprep.subr.bf16.mxu0 0
      %1696 = vmatpush1.bf16.msra.mxu0 0
      %1697 = vmatprep.subr.bf16.mxu0 0
      %1698 = vmatpush1.bf16.msra.mxu0 0
      %1699 = vmatprep.subr.bf16.mxu0 0
      %1700 = vmatpush1.bf16.msra.mxu0 0
      %1701 = vmatprep.subr.bf16.mxu0 0
      %1702 = vmatpush1.bf16.msra.mxu0 0
      %1703 = vmatprep.subr.bf16.mxu0 0
      %1704 = vmatpush1.bf16.msra.mxu0 0
      %1705 = vmatprep.subr.bf16.mxu0 0
      %1706 = vmatpush1.bf16.msra.mxu0 0
      %1707 = vmatprep.subr.bf16.mxu0 0
      %1708 = vmatpush1.bf16.msra.mxu0 0
      %1709 = vmatprep.mubr.bf16.mxu0 0
      %1710 = vmatmul.mubr.bf16.gmra.mrb[0].mxu0 %v1406
      %v1711 = vpop.f32.mrb[0].mxu0
      %v1712 = vadd.f32 0.0, %v1711
      %v1713 = vpop.f32.mrb[0].mxu0
      %v1714 = vpop.f32.mrb[0].mxu0
      %v1715 = vadd.f32 0.0, %v1714
      %v1716 = vpop.f32.mrb[0].mxu0
      %1717 = vmatprep.mubr.bf16.mxu0 0
      %1718 = vmatmul.mubr.bf16.gmra.mrb[0].mxu0 %v1408
      %v1719 = vpop.f32.mrb[0].mxu0
      %v1720 = vadd.f32 0.0, %v1719
      %v1721 = vpop.f32.mrb[0].mxu0
      %v1722 = vpop.f32.mrb[0].mxu0
      %v1723 = vadd.f32 0.0, %v1722
      %v1724 = vpop.f32.mrb[0].mxu0
      %1725 = vmatprep.mubr.bf16.mxu0 0
      %1726 = vmatmul.mubr.bf16.gmra.mrb[0].mxu0 %v1410
      %v1727 = vpop.f32.mrb[0].mxu0
      %v1728 = vadd.f32 0.0, %v1727
      %v1729 = vpop.f32.mrb[0].mxu0
      %v1730 = vpop.f32.mrb[0].mxu0
      %v1731 = vadd.f32 0.0, %v1730
      %v1732 = vpop.f32.mrb[0].mxu0
      %1733 = vmatprep.mubr.bf16.mxu0 0
      %1734 = vmatmul.mubr.bf16.gmra.mrb[0].mxu0 %v1412
      %v1735 = vpop.f32.mrb[0].mxu0
      %v1736 = vadd.f32 0.0, %v1735
      %v1737 = vpop.f32.mrb[0].mxu0
      %v1738 = vpop.f32.mrb[0].mxu0
      %v1739 = vadd.f32 0.0, %v1738
      %v1740 = vpop.f32.mrb[0].mxu0
      %1741 = vmatprep.mubr.bf16.mxu0 0
      %1742 = vmatmul.mubr.bf16.gmra.mrb[0].mxu0 %v1414
      %v1743 = vpop.f32.mrb[0].mxu0
      %v1744 = vadd.f32 0.0, %v1743
      %v1745 = vpop.f32.mrb[0].mxu0
      %v1746 = vpop.f32.mrb[0].mxu0
      %v1747 = vadd.f32 0.0, %v1746
      %v1748 = vpop.f32.mrb[0].mxu0
      %1749 = vmatprep.mubr.bf16.mxu0 0
      %1750 = vmatmul.mubr.bf16.gmra.mrb[0].mxu0 %v1416
      %v1751 = vpop.f32.mrb[0].mxu0
      %v1752 = vadd.f32 0.0, %v1751
      %v1753 = vpop.f32.mrb[0].mxu0
      %v1754 = vpop.f32.mrb[0].mxu0
      %v1755 = vadd.f32 0.0, %v1754
      %v1756 = vpop.f32.mrb[0].mxu0
      %1757 = vmatprep.mubr.bf16.mxu0 0
      %1758 = vmatmul.mubr.bf16.gmra.mrb[0].mxu0 %v1418
      %v1759 = vpop.f32.mrb[0].mxu0
      %v1760 = vadd.f32 0.0, %v1759
      %v1761 = vpop.f32.mrb[0].mxu0
      %v1762 = vpop.f32.mrb[0].mxu0
      %v1763 = vadd.f32 0.0, %v1762
      %v1764 = vpop.f32.mrb[0].mxu0
      %1765 = vmatprep.mubr.bf16.mxu0 0
      %1766 = vmatmul.mubr.bf16.gmra.mrb[0].mxu0 %v1420
      %v1767 = vpop.f32.mrb[0].mxu0
      %v1768 = vadd.f32 0.0, %v1767
      %v1769 = vpop.f32.mrb[0].mxu0
      %v1770 = vpop.f32.mrb[0].mxu0
      %v1771 = vadd.f32 0.0, %v1770
      %v1772 = vpop.f32.mrb[0].mxu0
      %1773 = vmatprep.mubr.bf16.mxu0 0
      %1774 = vmatmul.mubr.bf16.gmra.mrb[0].mxu0 %v1422
      %v1775 = vpop.f32.mrb[0].mxu0
      %v1776 = vadd.f32 0.0, %v1775
      %v1777 = vpop.f32.mrb[0].mxu0
      %v1778 = vpop.f32.mrb[0].mxu0
      %v1779 = vadd.f32 0.0, %v1778
      %v1780 = vpop.f32.mrb[0].mxu0
      %1781 = vmatprep.mubr.bf16.mxu0 0
      %1782 = vmatmul.mubr.bf16.gmra.mrb[0].mxu0 %v1672
      %v1783 = vpop.f32.mrb[0].mxu0
      %v1784 = vadd.f32 0.0, %v1783
      %v1785 = vpop.f32.mrb[0].mxu0
      %v1786 = vpop.f32.mrb[0].mxu0
      %v1787 = vadd.f32 0.0, %v1786
      %v1788 = vpop.f32.mrb[0].mxu0
      %1789 = vdwg.mxu0
      %v1790 = vadd.f32 %v1586, %v1712
      %v1791 = vadd.f32 %v1589, %v1715
      %v1792 = vadd.f32 %v1594, %v1720
      %v1793 = vadd.f32 %v1597, %v1723
      %v1794 = vadd.f32 %v1602, %v1728
      %v1795 = vadd.f32 %v1605, %v1731
      %v1796 = vadd.f32 %v1610, %v1736
      %v1797 = vadd.f32 %v1613, %v1739
      %v1798 = vadd.f32 %v1618, %v1744
      %v1799 = vadd.f32 %v1621, %v1747
      %v1800 = vadd.f32 %v1626, %v1752
      %v1801 = vadd.f32 %v1629, %v1755
      %v1802 = vadd.f32 %v1634, %v1760
      %v1803 = vadd.f32 %v1637, %v1763
      %v1804 = vadd.f32 %v1642, %v1768
      %v1805 = vadd.f32 %v1645, %v1771
      %v1806 = vadd.f32 %v1650, %v1776
      %v1807 = vadd.f32 %v1653, %v1779
      %v1808 = vadd.f32 %v1658, %v1784
      %v1809 = vadd.f32 %v1661, %v1787
      %v1810 = vld [vmem:[%s5] sm:$0xf]
      %v1811 = vld [vmem:[%s5 + $0x4] sm:$0x3]
      %v1814 = vunpack.c.l.b16 %v1810
      %v1815 = vunpack.c.l.b16 %v1811
      %v1816 = vpack.c.b16 %v1815, %v1814
      %v1817 = vsel %vm1403, %v1370, 0
      %v1819 = vsel %vm1403, %v1372, 0
      %v1821 = vsel %vm1403, %v1374, 0
      %v1823 = vsel %vm1403, %v1376, 0
      %v1825 = vsel %vm1403, %v1378, 0
      %v1827 = vsel %vm1403, %v1380, 0
      %v1829 = vsel %vm1403, %v1382, 0
      %v1831 = vsel %vm1403, %v1384, 0
      %v1833 = vsel %vm1403, %v1386, 0
      %v1835 = vsel %vm1403, %v1388, 0
      %v1838 = vsel %vm1424, %v1816, 0
      %1840 = vmatprep.subr.bf16.mxu0 0
      %1841 = vmatpush1.bf16.msra.mxu0 %v1838
      %1842 = vmatprep.subr.bf16.mxu0 0
      %1843 = vmatpush1.bf16.msra.mxu0 0
      %1844 = vmatprep.subr.bf16.mxu0 0
      %1845 = vmatpush1.bf16.msra.mxu0 0
      %1846 = vmatprep.subr.bf16.mxu0 0
      %1847 = vmatpush1.bf16.msra.mxu0 0
      %1848 = vmatprep.subr.bf16.mxu0 0
      %1849 = vmatpush1.bf16.msra.mxu0 0
      %1850 = vmatprep.subr.bf16.mxu0 0
      %1851 = vmatpush1.bf16.msra.mxu0 0
      %1852 = vmatprep.subr.bf16.mxu0 0
      %1853 = vmatpush1.bf16.msra.mxu0 0
      %1854 = vmatprep.subr.bf16.mxu0 0
      %1855 = vmatpush1.bf16.msra.mxu0 0
      %1856 = vmatprep.subr.bf16.mxu0 0
      %1857 = vmatpush1.bf16.msra.mxu0 0
      %1858 = vmatprep.subr.bf16.mxu0 0
      %1859 = vmatpush1.bf16.msra.mxu0 0
      %1860 = vmatprep.subr.bf16.mxu0 0
      %1861 = vmatpush1.bf16.msra.mxu0 0
      %1862 = vmatprep.subr.bf16.mxu0 0
      %1863 = vmatpush1.bf16.msra.mxu0 0
      %1864 = vmatprep.subr.bf16.mxu0 0
      %1865 = vmatpush1.bf16.msra.mxu0 0
      %1866 = vmatprep.subr.bf16.mxu0 0
      %1867 = vmatpush1.bf16.msra.mxu0 0
      %1868 = vmatprep.subr.bf16.mxu0 0
      %1869 = vmatpush1.bf16.msra.mxu0 0
      %1870 = vmatprep.subr.bf16.mxu0 0
      %1871 = vmatpush1.bf16.msra.mxu0 0
      %1872 = vmatprep.mubr.bf16.mxu0 0
      %1873 = vmatmul.mubr.bf16.gmra.mrb[0].mxu0 %v1817
      %v1874 = vpop.f32.mrb[0].mxu0
      %v1875 = vadd.f32 0.0, %v1874
      %v1876 = vpop.f32.mrb[0].mxu0
      %v1877 = vpop.f32.mrb[0].mxu0
      %v1878 = vadd.f32 0.0, %v1877
      %v1879 = vpop.f32.mrb[0].mxu0
      %1880 = vmatprep.mubr.bf16.mxu0 0
      %1881 = vmatmul.mubr.bf16.gmra.mrb[0].mxu0 %v1819
      %v1882 = vpop.f32.mrb[0].mxu0
      %v1883 = vadd.f32 0.0, %v1882
      %v1884 = vpop.f32.mrb[0].mxu0
      %v1885 = vpop.f32.mrb[0].mxu0
      %v1886 = vadd.f32 0.0, %v1885
      %v1887 = vpop.f32.mrb[0].mxu0
      %1888 = vmatprep.mubr.bf16.mxu0 0
      %1889 = vmatmul.mubr.bf16.gmra.mrb[0].mxu0 %v1821
      %v1890 = vpop.f32.mrb[0].mxu0
      %v1891 = vadd.f32 0.0, %v1890
      %v1892 = vpop.f32.mrb[0].mxu0
      %v1893 = vpop.f32.mrb[0].mxu0
      %v1894 = vadd.f32 0.0, %v1893
      %v1895 = vpop.f32.mrb[0].mxu0
      %1896 = vmatprep.mubr.bf16.mxu0 0
      %1897 = vmatmul.mubr.bf16.gmra.mrb[0].mxu0 %v1823
      %v1898 = vpop.f32.mrb[0].mxu0
      %v1899 = vadd.f32 0.0, %v1898
      %v1900 = vpop.f32.mrb[0].mxu0
      %v1901 = vpop.f32.mrb[0].mxu0
      %v1902 = vadd.f32 0.0, %v1901
      %v1903 = vpop.f32.mrb[0].mxu0
      %1904 = vmatprep.mubr.bf16.mxu0 0
      %1905 = vmatmul.mubr.bf16.gmra.mrb[0].mxu0 %v1825
      %v1906 = vpop.f32.mrb[0].mxu0
      %v1907 = vadd.f32 0.0, %v1906
      %v1908 = vpop.f32.mrb[0].mxu0
      %v1909 = vpop.f32.mrb[0].mxu0
      %v1910 = vadd.f32 0.0, %v1909
      %v1911 = vpop.f32.mrb[0].mxu0
      %1912 = vmatprep.mubr.bf16.mxu0 0
      %1913 = vmatmul.mubr.bf16.gmra.mrb[0].mxu0 %v1827
      %v1914 = vpop.f32.mrb[0].mxu0
      %v1915 = vadd.f32 0.0, %v1914
      %v1916 = vpop.f32.mrb[0].mxu0
      %v1917 = vpop.f32.mrb[0].mxu0
      %v1918 = vadd.f32 0.0, %v1917
      %v1919 = vpop.f32.mrb[0].mxu0
      %1920 = vmatprep.mubr.bf16.mxu0 0
      %1921 = vmatmul.mubr.bf16.gmra.mrb[0].mxu0 %v1829
      %v1922 = vpop.f32.mrb[0].mxu0
      %v1923 = vadd.f32 0.0, %v1922
      %v1924 = vpop.f32.mrb[0].mxu0
      %v1925 = vpop.f32.mrb[0].mxu0
      %v1926 = vadd.f32 0.0, %v1925
      %v1927 = vpop.f32.mrb[0].mxu0
      %1928 = vmatprep.mubr.bf16.mxu0 0
      %1929 = vmatmul.mubr.bf16.gmra.mrb[0].mxu0 %v1831
      %v1930 = vpop.f32.mrb[0].mxu0
      %v1931 = vadd.f32 0.0, %v1930
      %v1932 = vpop.f32.mrb[0].mxu0
      %v1933 = vpop.f32.mrb[0].mxu0
      %v1934 = vadd.f32 0.0, %v1933
      %v1935 = vpop.f32.mrb[0].mxu0
      %1936 = vmatprep.mubr.bf16.mxu0 0
      %1937 = vmatmul.mubr.bf16.gmra.mrb[0].mxu0 %v1833
      %v1938 = vpop.f32.mrb[0].mxu0
      %v1939 = vadd.f32 0.0, %v1938
      %v1940 = vpop.f32.mrb[0].mxu0
      %v1941 = vpop.f32.mrb[0].mxu0
      %v1942 = vadd.f32 0.0, %v1941
      %v1943 = vpop.f32.mrb[0].mxu0
      %1944 = vmatprep.mubr.bf16.mxu0 0
      %1945 = vmatmul.mubr.bf16.gmra.mrb[0].mxu0 %v1835
      %v1946 = vpop.f32.mrb[0].mxu0
      %v1947 = vadd.f32 0.0, %v1946
      %v1948 = vpop.f32.mrb[0].mxu0
      %v1949 = vpop.f32.mrb[0].mxu0
      %v1950 = vadd.f32 0.0, %v1949
      %v1951 = vpop.f32.mrb[0].mxu0
      %1952 = vdwg.mxu0
      %v1953 = vadd.f32 %v1790, %v1875
      %v1954 = vadd.f32 %v1791, %v1878
      %v1955 = vadd.f32 %v1792, %v1883
      %v1956 = vadd.f32 %v1793, %v1886
      %v1957 = vadd.f32 %v1794, %v1891
      %v1958 = vadd.f32 %v1795, %v1894
      %v1959 = vadd.f32 %v1796, %v1899
      %v1960 = vadd.f32 %v1797, %v1902
      %v1961 = vadd.f32 %v1798, %v1907
      %v1962 = vadd.f32 %v1799, %v1910
      %v1963 = vadd.f32 %v1800, %v1915
      %v1964 = vadd.f32 %v1801, %v1918
      %v1965 = vadd.f32 %v1802, %v1923
      %v1966 = vadd.f32 %v1803, %v1926
      %v1967 = vadd.f32 %v1804, %v1931
      %v1968 = vadd.f32 %v1805, %v1934
      %v1969 = vadd.f32 %v1806, %v1939
      %v1970 = vadd.f32 %v1807, %v1942
      %v1971 = vadd.f32 %v1808, %v1947
      %v1972 = vadd.f32 %v1809, %v1950
      %s1973 = scalar_lea.vmem %s5, 8
      %v1974 = vld [vmem:[%s1973] sm:$0xf]
      %v1975 = vld [vmem:[%s1973 + $0x4] sm:$0x3]
      %v1978 = vunpack.c.l.b16 %v1974
      %v1979 = vunpack.c.l.b16 %v1975
      %v1980 = vpack.c.b16 %v1979, %v1978
      %v1981 = vsel %vm1403, %v1390, 0
      %v1984 = vsel %vm1424, %v1980, 0
      %1986 = vmatprep.subr.bf16.mxu0 0
      %1987 = vmatpush1.bf16.msra.mxu0 %v1984
      %1988 = vmatprep.subr.bf16.mxu0 0
      %1989 = vmatpush1.bf16.msra.mxu0 0
      %1990 = vmatprep.subr.bf16.mxu0 0
      %1991 = vmatpush1.bf16.msra.mxu0 0
      %1992 = vmatprep.subr.bf16.mxu0 0
      %1993 = vmatpush1.bf16.msra.mxu0 0
      %1994 = vmatprep.subr.bf16.mxu0 0
      %1995 = vmatpush1.bf16.msra.mxu0 0
      %1996 = vmatprep.subr.bf16.mxu0 0
      %1997 = vmatpush1.bf16.msra.mxu0 0
      %1998 = vmatprep.subr.bf16.mxu0 0
      %1999 = vmatpush1.bf16.msra.mxu0 0
      %2000 = vmatprep.subr.bf16.mxu0 0
      %2001 = vmatpush1.bf16.msra.mxu0 0
      %2002 = vmatprep.subr.bf16.mxu0 0
      %2003 = vmatpush1.bf16.msra.mxu0 0
      %2004 = vmatprep.subr.bf16.mxu0 0
      %2005 = vmatpush1.bf16.msra.mxu0 0
      %2006 = vmatprep.subr.bf16.mxu0 0
      %2007 = vmatpush1.bf16.msra.mxu0 0
      %2008 = vmatprep.subr.bf16.mxu0 0
      %2009 = vmatpush1.bf16.msra.mxu0 0
      %2010 = vmatprep.subr.bf16.mxu0 0
      %2011 = vmatpush1.bf16.msra.mxu0 0
      %2012 = vmatprep.subr.bf16.mxu0 0
      %2013 = vmatpush1.bf16.msra.mxu0 0
      %2014 = vmatprep.subr.bf16.mxu0 0
      %2015 = vmatpush1.bf16.msra.mxu0 0
      %2016 = vmatprep.subr.bf16.mxu0 0
      %2017 = vmatpush1.bf16.msra.mxu0 0
      %2018 = vmatprep.mubr.bf16.mxu0 0
      %2019 = vmatmul.mubr.bf16.gmra.mrb[0].mxu0 %v1819
      %v2020 = vpop.f32.mrb[0].mxu0
      %v2021 = vadd.f32 0.0, %v2020
      %v2022 = vpop.f32.mrb[0].mxu0
      %v2023 = vpop.f32.mrb[0].mxu0
      %v2024 = vadd.f32 0.0, %v2023
      %v2025 = vpop.f32.mrb[0].mxu0
      %2026 = vmatprep.mubr.bf16.mxu0 0
      %2027 = vmatmul.mubr.bf16.gmra.mrb[0].mxu0 %v1821
      %v2028 = vpop.f32.mrb[0].mxu0
      %v2029 = vadd.f32 0.0, %v2028
      %v2030 = vpop.f32.mrb[0].mxu0
      %v2031 = vpop.f32.mrb[0].mxu0
      %v2032 = vadd.f32 0.0, %v2031
      %v2033 = vpop.f32.mrb[0].mxu0
      %2034 = vmatprep.mubr.bf16.mxu0 0
      %2035 = vmatmul.mubr.bf16.gmra.mrb[0].mxu0 %v1823
      %v2036 = vpop.f32.mrb[0].mxu0
      %v2037 = vadd.f32 0.0, %v2036
      %v2038 = vpop.f32.mrb[0].mxu0
      %v2039 = vpop.f32.mrb[0].mxu0
      %v2040 = vadd.f32 0.0, %v2039
      %v2041 = vpop.f32.mrb[0].mxu0
      %2042 = vmatprep.mubr.bf16.mxu0 0
      %2043 = vmatmul.mubr.bf16.gmra.mrb[0].mxu0 %v1825
      %v2044 = vpop.f32.mrb[0].mxu0
      %v2045 = vadd.f32 0.0, %v2044
      %v2046 = vpop.f32.mrb[0].mxu0
      %v2047 = vpop.f32.mrb[0].mxu0
      %v2048 = vadd.f32 0.0, %v2047
      %v2049 = vpop.f32.mrb[0].mxu0
      %2050 = vmatprep.mubr.bf16.mxu0 0
      %2051 = vmatmul.mubr.bf16.gmra.mrb[0].mxu0 %v1827
      %v2052 = vpop.f32.mrb[0].mxu0
      %v2053 = vadd.f32 0.0, %v2052
      %v2054 = vpop.f32.mrb[0].mxu0
      %v2055 = vpop.f32.mrb[0].mxu0
      %v2056 = vadd.f32 0.0, %v2055
      %v2057 = vpop.f32.mrb[0].mxu0
      %2058 = vmatprep.mubr.bf16.mxu0 0
      %2059 = vmatmul.mubr.bf16.gmra.mrb[0].mxu0 %v1829
      %v2060 = vpop.f32.mrb[0].mxu0
      %v2061 = vadd.f32 0.0, %v2060
      %v2062 = vpop.f32.mrb[0].mxu0
      %v2063 = vpop.f32.mrb[0].mxu0
      %v2064 = vadd.f32 0.0, %v2063
      %v2065 = vpop.f32.mrb[0].mxu0
      %2066 = vmatprep.mubr.bf16.mxu0 0
      %2067 = vmatmul.mubr.bf16.gmra.mrb[0].mxu0 %v1831
      %v2068 = vpop.f32.mrb[0].mxu0
      %v2069 = vadd.f32 0.0, %v2068
      %v2070 = vpop.f32.mrb[0].mxu0
      %v2071 = vpop.f32.mrb[0].mxu0
      %v2072 = vadd.f32 0.0, %v2071
      %v2073 = vpop.f32.mrb[0].mxu0
      %2074 = vmatprep.mubr.bf16.mxu0 0
      %2075 = vmatmul.mubr.bf16.gmra.mrb[0].mxu0 %v1833
      %v2076 = vpop.f32.mrb[0].mxu0
      %v2077 = vadd.f32 0.0, %v2076
      %v2078 = vpop.f32.mrb[0].mxu0
      %v2079 = vpop.f32.mrb[0].mxu0
      %v2080 = vadd.f32 0.0, %v2079
      %v2081 = vpop.f32.mrb[0].mxu0
      %2082 = vmatprep.mubr.bf16.mxu0 0
      %2083 = vmatmul.mubr.bf16.gmra.mrb[0].mxu0 %v1835
      %v2084 = vpop.f32.mrb[0].mxu0
      %v2085 = vadd.f32 0.0, %v2084
      %v2086 = vpop.f32.mrb[0].mxu0
      %v2087 = vpop.f32.mrb[0].mxu0
      %v2088 = vadd.f32 0.0, %v2087
      %v2089 = vpop.f32.mrb[0].mxu0
      %2090 = vmatprep.mubr.bf16.mxu0 0
      %2091 = vmatmul.mubr.bf16.gmra.mrb[0].mxu0 %v1981
      %v2092 = vpop.f32.mrb[0].mxu0
      %v2093 = vadd.f32 0.0, %v2092
      %v2094 = vpop.f32.mrb[0].mxu0
      %v2095 = vpop.f32.mrb[0].mxu0
      %v2096 = vadd.f32 0.0, %v2095
      %v2097 = vpop.f32.mrb[0].mxu0
      %2098 = vdwg.mxu0
      %v2099 = vadd.f32 %v1953, %v2021
      %v2100 = vadd.f32 %v1954, %v2024
      %v2101 = vadd.f32 %v1955, %v2029
      %v2102 = vadd.f32 %v1956, %v2032
      %v2103 = vadd.f32 %v1957, %v2037
      %v2104 = vadd.f32 %v1958, %v2040
      %v2105 = vadd.f32 %v1959, %v2045
      %v2106 = vadd.f32 %v1960, %v2048
      %v2107 = vadd.f32 %v1961, %v2053
      %v2108 = vadd.f32 %v1962, %v2056
      %v2109 = vadd.f32 %v1963, %v2061
      %v2110 = vadd.f32 %v1964, %v2064
      %v2111 = vadd.f32 %v1965, %v2069
      %v2112 = vadd.f32 %v1966, %v2072
      %v2113 = vadd.f32 %v1967, %v2077
      %v2114 = vadd.f32 %v1968, %v2080
      %v2115 = vadd.f32 %v1969, %v2085
      %v2116 = vadd.f32 %v1970, %v2088
      %v2117 = vadd.f32 %v1971, %v2093
      %v2118 = vadd.f32 %v1972, %v2096
      %s2119 = scalar_lea.vmem %s5, 16
      %v2120 = vld [vmem:[%s2119] sm:$0xf]
      %v2121 = vld [vmem:[%s2119 + $0x4] sm:$0x3]
      %v2124 = vunpack.c.l.b16 %v2120
      %v2125 = vunpack.c.l.b16 %v2121
      %v2126 = vpack.c.b16 %v2125, %v2124
      %v2127 = vsel %vm1403, %v1392, 0
      %v2130 = vsel %vm1424, %v2126, 0
      %2132 = vmatprep.subr.bf16.mxu0 0
      %2133 = vmatpush1.bf16.msra.mxu0 %v2130
      %2134 = vmatprep.subr.bf16.mxu0 0
      %2135 = vmatpush1.bf16.msra.mxu0 0
      %2136 = vmatprep.subr.bf16.mxu0 0
      %2137 = vmatpush1.bf16.msra.mxu0 0
      %2138 = vmatprep.subr.bf16.mxu0 0
      %2139 = vmatpush1.bf16.msra.mxu0 0
      %2140 = vmatprep.subr.bf16.mxu0 0
      %2141 = vmatpush1.bf16.msra.mxu0 0
      %2142 = vmatprep.subr.bf16.mxu0 0
      %2143 = vmatpush1.bf16.msra.mxu0 0
      %2144 = vmatprep.subr.bf16.mxu0 0
      %2145 = vmatpush1.bf16.msra.mxu0 0
      %2146 = vmatprep.subr.bf16.mxu0 0
      %2147 = vmatpush1.bf16.msra.mxu0 0
      %2148 = vmatprep.subr.bf16.mxu0 0
      %2149 = vmatpush1.bf16.msra.mxu0 0
      %2150 = vmatprep.subr.bf16.mxu0 0
      %2151 = vmatpush1.bf16.msra.mxu0 0
      %2152 = vmatprep.subr.bf16.mxu0 0
      %2153 = vmatpush1.bf16.msra.mxu0 0
      %2154 = vmatprep.subr.bf16.mxu0 0
      %2155 = vmatpush1.bf16.msra.mxu0 0
      %2156 = vmatprep.subr.bf16.mxu0 0
      %2157 = vmatpush1.bf16.msra.mxu0 0
      %2158 = vmatprep.subr.bf16.mxu0 0
      %2159 = vmatpush1.bf16.msra.mxu0 0
      %2160 = vmatprep.subr.bf16.mxu0 0
      %2161 = vmatpush1.bf16.msra.mxu0 0
      %2162 = vmatprep.subr.bf16.mxu0 0
      %2163 = vmatpush1.bf16.msra.mxu0 0
      %2164 = vmatprep.mubr.bf16.mxu0 0
      %2165 = vmatmul.mubr.bf16.gmra.mrb[0].mxu0 %v1821
      %v2166 = vpop.f32.mrb[0].mxu0
      %v2167 = vadd.f32 0.0, %v2166
      %v2168 = vpop.f32.mrb[0].mxu0
      %v2169 = vpop.f32.mrb[0].mxu0
      %v2170 = vadd.f32 0.0, %v2169
      %v2171 = vpop.f32.mrb[0].mxu0
      %2172 = vmatprep.mubr.bf16.mxu0 0
      %2173 = vmatmul.mubr.bf16.gmra.mrb[0].mxu0 %v1823
      %v2174 = vpop.f32.mrb[0].mxu0
      %v2175 = vadd.f32 0.0, %v2174
      %v2176 = vpop.f32.mrb[0].mxu0
      %v2177 = vpop.f32.mrb[0].mxu0
      %v2178 = vadd.f32 0.0, %v2177
      %v2179 = vpop.f32.mrb[0].mxu0
      %2180 = vmatprep.mubr.bf16.mxu0 0
      %2181 = vmatmul.mubr.bf16.gmra.mrb[0].mxu0 %v1825
      %v2182 = vpop.f32.mrb[0].mxu0
      %v2183 = vadd.f32 0.0, %v2182
      %v2184 = vpop.f32.mrb[0].mxu0
      %v2185 = vpop.f32.mrb[0].mxu0
      %v2186 = vadd.f32 0.0, %v2185
      %v2187 = vpop.f32.mrb[0].mxu0
      %2188 = vmatprep.mubr.bf16.mxu0 0
      %2189 = vmatmul.mubr.bf16.gmra.mrb[0].mxu0 %v1827
      %v2190 = vpop.f32.mrb[0].mxu0
      %v2191 = vadd.f32 0.0, %v2190
      %v2192 = vpop.f32.mrb[0].mxu0
      %v2193 = vpop.f32.mrb[0].mxu0
      %v2194 = vadd.f32 0.0, %v2193
      %v2195 = vpop.f32.mrb[0].mxu0
      %2196 = vmatprep.mubr.bf16.mxu0 0
      %2197 = vmatmul.mubr.bf16.gmra.mrb[0].mxu0 %v1829
      %v2198 = vpop.f32.mrb[0].mxu0
      %v2199 = vadd.f32 0.0, %v2198
      %v2200 = vpop.f32.mrb[0].mxu0
      %v2201 = vpop.f32.mrb[0].mxu0
      %v2202 = vadd.f32 0.0, %v2201
      %v2203 = vpop.f32.mrb[0].mxu0
      %2204 = vmatprep.mubr.bf16.mxu0 0
      %2205 = vmatmul.mubr.bf16.gmra.mrb[0].mxu0 %v1831
      %v2206 = vpop.f32.mrb[0].mxu0
      %v2207 = vadd.f32 0.0, %v2206
      %v2208 = vpop.f32.mrb[0].mxu0
      %v2209 = vpop.f32.mrb[0].mxu0
      %v2210 = vadd.f32 0.0, %v2209
      %v2211 = vpop.f32.mrb[0].mxu0
      %2212 = vmatprep.mubr.bf16.mxu0 0
      %2213 = vmatmul.mubr.bf16.gmra.mrb[0].mxu0 %v1833
      %v2214 = vpop.f32.mrb[0].mxu0
      %v2215 = vadd.f32 0.0, %v2214
      %v2216 = vpop.f32.mrb[0].mxu0
      %v2217 = vpop.f32.mrb[0].mxu0
      %v2218 = vadd.f32 0.0, %v2217
      %v2219 = vpop.f32.mrb[0].mxu0
      %2220 = vmatprep.mubr.bf16.mxu0 0
      %2221 = vmatmul.mubr.bf16.gmra.mrb[0].mxu0 %v1835
      %v2222 = vpop.f32.mrb[0].mxu0
      %v2223 = vadd.f32 0.0, %v2222
      %v2224 = vpop.f32.mrb[0].mxu0
      %v2225 = vpop.f32.mrb[0].mxu0
      %v2226 = vadd.f32 0.0, %v2225
      %v2227 = vpop.f32.mrb[0].mxu0
      %2228 = vmatprep.mubr.bf16.mxu0 0
      %2229 = vmatmul.mubr.bf16.gmra.mrb[0].mxu0 %v1981
      %v2230 = vpop.f32.mrb[0].mxu0
      %v2231 = vadd.f32 0.0, %v2230
      %v2232 = vpop.f32.mrb[0].mxu0
      %v2233 = vpop.f32.mrb[0].mxu0
      %v2234 = vadd.f32 0.0, %v2233
      %v2235 = vpop.f32.mrb[0].mxu0
      %2236 = vmatprep.mubr.bf16.mxu0 0
      %2237 = vmatmul.mubr.bf16.gmra.mrb[0].mxu0 %v2127
      %v2238 = vpop.f32.mrb[0].mxu0
      %v2239 = vadd.f32 0.0, %v2238
      %v2240 = vpop.f32.mrb[0].mxu0
      %v2241 = vpop.f32.mrb[0].mxu0
      %v2242 = vadd.f32 0.0, %v2241
      %v2243 = vpop.f32.mrb[0].mxu0
      %2244 = vdwg.mxu0
      %v2245 = vadd.f32 %v2099, %v2167
      %v2246 = vadd.f32 %v2100, %v2170
      %v2247 = vadd.f32 %v2101, %v2175
      %v2248 = vadd.f32 %v2102, %v2178
      %v2249 = vadd.f32 %v2103, %v2183
      %v2250 = vadd.f32 %v2104, %v2186
      %v2251 = vadd.f32 %v2105, %v2191
      %v2252 = vadd.f32 %v2106, %v2194
      %v2253 = vadd.f32 %v2107, %v2199
      %v2254 = vadd.f32 %v2108, %v2202
      %v2255 = vadd.f32 %v2109, %v2207
      %v2256 = vadd.f32 %v2110, %v2210
      %v2257 = vadd.f32 %v2111, %v2215
      %v2258 = vadd.f32 %v2112, %v2218
      %v2259 = vadd.f32 %v2113, %v2223
      %v2260 = vadd.f32 %v2114, %v2226
      %v2261 = vadd.f32 %v2115, %v2231
      %v2262 = vadd.f32 %v2116, %v2234
      %v2263 = vadd.f32 %v2117, %v2239
      %v2264 = vadd.f32 %v2118, %v2242
      %v2265 = vld [vmem:[%s6] sm:$0x1]
      %v2267 = vlaneseq
      %v2268 = vshrl.u32 %v2267, 7
      %v2269 = vsub.s32 0, %v2268
      %v2270 = vrot.slane %v2265, %v2269
      %v2272 = vadd.f32 %v2245, %v2270
      %v2273 = vadd.f32 %v2246, %v2270
      %v2274 = vadd.f32 %v2247, %v2270
      %v2275 = vadd.f32 %v2248, %v2270
      %v2276 = vadd.f32 %v2249, %v2270
      %v2277 = vadd.f32 %v2250, %v2270
      %v2278 = vadd.f32 %v2251, %v2270
      %v2279 = vadd.f32 %v2252, %v2270
      %v2280 = vadd.f32 %v2253, %v2270
      %v2281 = vadd.f32 %v2254, %v2270
      %v2282 = vadd.f32 %v2255, %v2270
      %v2283 = vadd.f32 %v2256, %v2270
      %v2284 = vadd.f32 %v2257, %v2270
      %v2285 = vadd.f32 %v2258, %v2270
      %v2286 = vadd.f32 %v2259, %v2270
      %v2287 = vadd.f32 %v2260, %v2270
      %v2288 = vadd.f32 %v2261, %v2270
      %v2289 = vadd.f32 %v2262, %v2270
      %v2290 = vadd.f32 %v2263, %v2270
      %v2291 = vadd.f32 %v2264, %v2270
      %v2292 = vmax.f32 %v2272, 0.0
      %v2293 = vmax.f32 %v2273, 0.0
      %v2294 = vmax.f32 %v2274, 0.0
      %v2295 = vmax.f32 %v2275, 0.0
      %v2296 = vmax.f32 %v2276, 0.0
      %v2297 = vmax.f32 %v2277, 0.0
      %v2298 = vmax.f32 %v2278, 0.0
      %v2299 = vmax.f32 %v2279, 0.0
      %v2300 = vmax.f32 %v2280, 0.0
      %v2301 = vmax.f32 %v2281, 0.0
      %v2302 = vmax.f32 %v2282, 0.0
      %v2303 = vmax.f32 %v2283, 0.0
      %v2304 = vmax.f32 %v2284, 0.0
      %v2305 = vmax.f32 %v2285, 0.0
      %v2306 = vmax.f32 %v2286, 0.0
      %v2307 = vmax.f32 %v2287, 0.0
      %v2308 = vmax.f32 %v2288, 0.0
      %v2309 = vmax.f32 %v2289, 0.0
      %v2310 = vmax.f32 %v2290, 0.0
      %v2311 = vmax.f32 %v2291, 0.0
      %v2312 = vpack.c.bf16 %v2293, %v2292
      %v2313 = vpack.c.bf16 %v2295, %v2294
      %v2314 = vpack.c.bf16 %v2297, %v2296
      %v2315 = vpack.c.bf16 %v2299, %v2298
      %v2316 = vpack.c.bf16 %v2301, %v2300
      %v2317 = vpack.c.bf16 %v2303, %v2302
      %v2318 = vpack.c.bf16 %v2305, %v2304
      %v2319 = vpack.c.bf16 %v2307, %v2306
      %v2320 = vpack.c.bf16 %v2309, %v2308
      %v2321 = vpack.c.bf16 %v2311, %v2310
      %v2332 = vunpack.c.l.b16 %v2312
      %v2333 = vunpack.c.h.b16 %v2312
      %v2334 = vunpack.c.l.b16 %v2313
      %v2335 = vunpack.c.h.b16 %v2313
      %v2336 = vunpack.c.l.b16 %v2314
      %v2337 = vunpack.c.h.b16 %v2314
      %v2338 = vunpack.c.l.b16 %v2315
      %v2339 = vunpack.c.h.b16 %v2315
      %v2340 = vunpack.c.l.b16 %v2316
      %v2341 = vunpack.c.h.b16 %v2316
      %v2342 = vunpack.c.l.b16 %v2317
      %v2343 = vunpack.c.h.b16 %v2317
      %v2344 = vunpack.c.l.b16 %v2318
      %v2345 = vunpack.c.h.b16 %v2318
      %v2346 = vunpack.c.l.b16 %v2319
      %v2347 = vunpack.c.h.b16 %v2319
      %v2348 = vunpack.c.l.b16 %v2320
      %v2349 = vunpack.c.h.b16 %v2320
      %v2350 = vunpack.c.l.b16 %v2321
      %v2351 = vunpack.c.h.b16 %v2321
      %v2352 = vpack.c.b16 %v2332, %v2332
      %v2353 = vpack.c.b16 %v2333, %v2333
      %v2354 = vpack.c.b16 %v2334, %v2334
      %v2355 = vpack.c.b16 %v2335, %v2335
      %v2356 = vpack.c.b16 %v2336, %v2336
      %v2357 = vpack.c.b16 %v2337, %v2337
      %v2358 = vpack.c.b16 %v2338, %v2338
      %v2359 = vpack.c.b16 %v2339, %v2339
      %v2360 = vpack.c.b16 %v2340, %v2340
      %v2361 = vpack.c.b16 %v2341, %v2341
      %v2362 = vpack.c.b16 %v2342, %v2342
      %v2363 = vpack.c.b16 %v2343, %v2343
      %v2364 = vpack.c.b16 %v2344, %v2344
      %v2365 = vpack.c.b16 %v2345, %v2345
      %v2366 = vpack.c.b16 %v2346, %v2346
      %v2367 = vpack.c.b16 %v2347, %v2347
      %v2368 = vpack.c.b16 %v2348, %v2348
      %v2369 = vpack.c.b16 %v2349, %v2349
      %v2370 = vpack.c.b16 %v2350, %v2350
      %v2371 = vpack.c.b16 %v2351, %v2351
      %vm2372 = vsmask.f32 256
      %vm2373 = vsmask.f32 4368
      %vm2374 = vmor %vm2372, %vm2373
      %v2376 = vshrl.u32 %v2352, 16
      %v2378 = vrot.slane %v2376, 7
      %v2379 = vshll.u32 %v2352, 16
      %v2381 = vor.u32 %v2378, %v2379
      %v2382 = vrot.slane %v2378, 4
      %v2384 = vshrl.u32 %v2353, 16
      %v2386 = vrot.slane %v2384, 7
      %v2387 = vshll.u32 %v2353, 16
      %v2389 = vor.u32 %v2386, %v2387
      %v2390 = vsel %vm2374, %v2382, %v2389
      %v2391 = vrot.slane %v2386, 4
      %v2393 = vshrl.u32 %v2354, 16
      %v2395 = vrot.slane %v2393, 7
      %v2396 = vshll.u32 %v2354, 16
      %v2398 = vor.u32 %v2395, %v2396
      %v2399 = vrot.slane %v2395, 4
      %v2401 = vshrl.u32 %v2355, 16
      %v2403 = vrot.slane %v2401, 7
      %v2404 = vshll.u32 %v2355, 16
      %v2406 = vor.u32 %v2403, %v2404
      %v2407 = vsel %vm2374, %v2399, %v2406
      %v2408 = vrot.slane %v2403, 4
      %v2410 = vshrl.u32 %v2356, 16
      %v2412 = vrot.slane %v2410, 7
      %v2413 = vshll.u32 %v2356, 16
      %v2415 = vor.u32 %v2412, %v2413
      %v2416 = vrot.slane %v2412, 4
      %v2418 = vshrl.u32 %v2357, 16
      %v2420 = vrot.slane %v2418, 7
      %v2421 = vshll.u32 %v2357, 16
      %v2423 = vor.u32 %v2420, %v2421
      %v2424 = vsel %vm2374, %v2416, %v2423
      %v2425 = vrot.slane %v2420, 4
      %v2427 = vshrl.u32 %v2358, 16
      %v2429 = vrot.slane %v2427, 7
      %v2430 = vshll.u32 %v2358, 16
      %v2432 = vor.u32 %v2429, %v2430
      %v2433 = vrot.slane %v2429, 4
      %v2435 = vshrl.u32 %v2359, 16
      %v2437 = vrot.slane %v2435, 7
      %v2438 = vshll.u32 %v2359, 16
      %v2440 = vor.u32 %v2437, %v2438
      %v2441 = vsel %vm2374, %v2433, %v2440
      %v2442 = vrot.slane %v2437, 4
      %v2444 = vshrl.u32 %v2360, 16
      %v2446 = vrot.slane %v2444, 7
      %v2447 = vshll.u32 %v2360, 16
      %v2449 = vor.u32 %v2446, %v2447
      %v2450 = vrot.slane %v2446, 4
      %v2452 = vshrl.u32 %v2361, 16
      %v2454 = vrot.slane %v2452, 7
      %v2455 = vshll.u32 %v2361, 16
      %v2457 = vor.u32 %v2454, %v2455
      %v2458 = vsel %vm2374, %v2450, %v2457
      %v2459 = vrot.slane %v2454, 4
      %v2461 = vshrl.u32 %v2362, 16
      %v2463 = vrot.slane %v2461, 7
      %v2464 = vshll.u32 %v2362, 16
      %v2466 = vor.u32 %v2463, %v2464
      %v2467 = vrot.slane %v2463, 4
      %v2469 = vshrl.u32 %v2363, 16
      %v2471 = vrot.slane %v2469, 7
      %v2472 = vshll.u32 %v2363, 16
      %v2474 = vor.u32 %v2471, %v2472
      %v2475 = vsel %vm2374, %v2467, %v2474
      %v2476 = vrot.slane %v2471, 4
      %v2478 = vshrl.u32 %v2364, 16
      %v2480 = vrot.slane %v2478, 7
      %v2481 = vshll.u32 %v2364, 16
      %v2483 = vor.u32 %v2480, %v2481
      %v2484 = vrot.slane %v2480, 4
      %v2486 = vshrl.u32 %v2365, 16
      %v2488 = vrot.slane %v2486, 7
      %v2489 = vshll.u32 %v2365, 16
      %v2491 = vor.u32 %v2488, %v2489
      %v2492 = vsel %vm2374, %v2484, %v2491
      %v2493 = vrot.slane %v2488, 4
      %v2495 = vshrl.u32 %v2366, 16
      %v2497 = vrot.slane %v2495, 7
      %v2498 = vshll.u32 %v2366, 16
      %v2500 = vor.u32 %v2497, %v2498
      %v2501 = vrot.slane %v2497, 4
      %v2503 = vshrl.u32 %v2367, 16
      %v2505 = vrot.slane %v2503, 7
      %v2506 = vshll.u32 %v2367, 16
      %v2508 = vor.u32 %v2505, %v2506
      %v2509 = vsel %vm2374, %v2501, %v2508
      %v2510 = vrot.slane %v2505, 4
      %v2512 = vshrl.u32 %v2368, 16
      %v2514 = vrot.slane %v2512, 7
      %v2515 = vshll.u32 %v2368, 16
      %v2517 = vor.u32 %v2514, %v2515
      %v2518 = vrot.slane %v2514, 4
      %v2520 = vshrl.u32 %v2369, 16
      %v2522 = vrot.slane %v2520, 7
      %v2523 = vshll.u32 %v2369, 16
      %v2525 = vor.u32 %v2522, %v2523
      %v2526 = vsel %vm2374, %v2518, %v2525
      %v2527 = vrot.slane %v2522, 4
      %v2529 = vshrl.u32 %v2370, 16
      %v2531 = vrot.slane %v2529, 7
      %v2532 = vshll.u32 %v2370, 16
      %v2534 = vor.u32 %v2531, %v2532
      %v2535 = vrot.slane %v2531, 4
      %v2537 = vshrl.u32 %v2371, 16
      %v2539 = vrot.slane %v2537, 7
      %v2540 = vshll.u32 %v2371, 16
      %v2542 = vor.u32 %v2539, %v2540
      %v2543 = vsel %vm2374, %v2535, %v2542
      %v2544 = vrot.slane %v2539, 4
      %vm2575 = vcmask 60416
      %vm2576 = vsmask.f32 7938
      %vm2577 = vmand %vm2575, %vm2576
      %v2578 = vld [vmem:[#allocation2] sm:$0xf]
      %v2579 = vsel %vm2577, %v2381, %v2578
      %2580 = vst [vmem:[#allocation2] sm:$0xf] %v2579
      %vm2581 = vcmask 60416
      %2582 = vst.msk [vmem:[#allocation2 + $0x4] sm:$0xf] %vm2581, %v2390
      %vm2583 = vcmask 57344
      %vm2584 = vmand %vm2583, %vm2372
      %v2585 = vld [vmem:[#allocation2 + $0x8] sm:$0x1]
      %v2586 = vsel %vm2584, %v2391, %v2585
      %2587 = vst [vmem:[#allocation2 + $0x8] sm:$0x1] %v2586
      %v2588 = vld [vmem:[#allocation2 + $0xc] sm:$0xf]
      %v2589 = vsel %vm2577, %v2398, %v2588
      %2590 = vst [vmem:[#allocation2 + $0xc] sm:$0xf] %v2589
      %2591 = vst.msk [vmem:[#allocation2 + $0x10] sm:$0xf] %vm2581, %v2407
      %v2592 = vld [vmem:[#allocation2 + $0x14] sm:$0x1]
      %v2593 = vsel %vm2584, %v2408, %v2592
      %2594 = vst [vmem:[#allocation2 + $0x14] sm:$0x1] %v2593
      %v2595 = vld [vmem:[#allocation2 + $0x18] sm:$0xf]
      %v2596 = vsel %vm2577, %v2415, %v2595
      %2597 = vst [vmem:[#allocation2 + $0x18] sm:$0xf] %v2596
      %2598 = vst.msk [vmem:[#allocation2 + $0x1c] sm:$0xf] %vm2581, %v2424
      %v2599 = vld [vmem:[#allocation2 + $0x20] sm:$0x1]
      %v2600 = vsel %vm2584, %v2425, %v2599
      %2601 = vst [vmem:[#allocation2 + $0x20] sm:$0x1] %v2600
      %v2602 = vld [vmem:[#allocation2 + $0x24] sm:$0xf]
      %v2603 = vsel %vm2577, %v2432, %v2602
      %2604 = vst [vmem:[#allocation2 + $0x24] sm:$0xf] %v2603
      %2605 = vst.msk [vmem:[#allocation2 + $0x28] sm:$0xf] %vm2581, %v2441
      %v2606 = vld [vmem:[#allocation2 + $0x2c] sm:$0x1]
      %v2607 = vsel %vm2584, %v2442, %v2606
      %2608 = vst [vmem:[#allocation2 + $0x2c] sm:$0x1] %v2607
      %v2609 = vld [vmem:[#allocation2 + $0x30] sm:$0xf]
      %v2610 = vsel %vm2577, %v2449, %v2609
      %2611 = vst [vmem:[#allocation2 + $0x30] sm:$0xf] %v2610
      %2612 = vst.msk [vmem:[#allocation2 + $0x34] sm:$0xf] %vm2581, %v2458
      %v2613 = vld [vmem:[#allocation2 + $0x38] sm:$0x1]
      %v2614 = vsel %vm2584, %v2459, %v2613
      %2615 = vst [vmem:[#allocation2 + $0x38] sm:$0x1] %v2614
      %v2616 = vld [vmem:[#allocation2 + $0x3c] sm:$0xf]
      %v2617 = vsel %vm2577, %v2466, %v2616
      %2618 = vst [vmem:[#allocation2 + $0x3c] sm:$0xf] %v2617
      %2619 = vst.msk [vmem:[#allocation2 + $0x40] sm:$0xf] %vm2581, %v2475
      %v2620 = vld [vmem:[#allocation2 + $0x44] sm:$0x1]
      %v2621 = vsel %vm2584, %v2476, %v2620
      %2622 = vst [vmem:[#allocation2 + $0x44] sm:$0x1] %v2621
      %v2623 = vld [vmem:[#allocation2 + $0x48] sm:$0xf]
      %v2624 = vsel %vm2577, %v2483, %v2623
      %2625 = vst [vmem:[#allocation2 + $0x48] sm:$0xf] %v2624
      %2626 = vst.msk [vmem:[#allocation2 + $0x4c] sm:$0xf] %vm2581, %v2492
      %v2627 = vld [vmem:[#allocation2 + $0x50] sm:$0x1]
      %v2628 = vsel %vm2584, %v2493, %v2627
      %2629 = vst [vmem:[#allocation2 + $0x50] sm:$0x1] %v2628
      %v2630 = vld [vmem:[#allocation2 + $0x54] sm:$0xf]
      %v2631 = vsel %vm2577, %v2500, %v2630
      %2632 = vst [vmem:[#allocation2 + $0x54] sm:$0xf] %v2631
      %2633 = vst.msk [vmem:[#allocation2 + $0x58] sm:$0xf] %vm2581, %v2509
      %v2634 = vld [vmem:[#allocation2 + $0x5c] sm:$0x1]
      %v2635 = vsel %vm2584, %v2510, %v2634
      %2636 = vst [vmem:[#allocation2 + $0x5c] sm:$0x1] %v2635
      %v2637 = vld [vmem:[#allocation2 + $0x60] sm:$0xf]
      %v2638 = vsel %vm2577, %v2517, %v2637
      %2639 = vst [vmem:[#allocation2 + $0x60] sm:$0xf] %v2638
      %2640 = vst.msk [vmem:[#allocation2 + $0x64] sm:$0xf] %vm2581, %v2526
      %v2641 = vld [vmem:[#allocation2 + $0x68] sm:$0x1]
      %v2642 = vsel %vm2584, %v2527, %v2641
      %2643 = vst [vmem:[#allocation2 + $0x68] sm:$0x1] %v2642
      %v2644 = vld [vmem:[#allocation2 + $0x6c] sm:$0xf]
      %v2645 = vsel %vm2577, %v2534, %v2644
      %2646 = vst [vmem:[#allocation2 + $0x6c] sm:$0xf] %v2645
      %2647 = vst.msk [vmem:[#allocation2 + $0x70] sm:$0xf] %vm2581, %v2543
      %v2648 = vld [vmem:[#allocation2 + $0x74] sm:$0x1]
      %v2649 = vsel %vm2584, %v2544, %v2648
      %2650 = vst [vmem:[#allocation2 + $0x74] sm:$0x1] %v2649
      %v2651 = vld [vmem:[#allocation2] sm:$0x1]
      %v2652 = vsel %vm2584, 0, %v2651
      %2653 = vst [vmem:[#allocation2] sm:$0x1] %v2652
      %v2654 = vld [vmem:[#allocation2 + $0xc] sm:$0x1]
      %v2655 = vsel %vm2584, 0, %v2654
      %2656 = vst [vmem:[#allocation2 + $0xc] sm:$0x1] %v2655
      %v2657 = vld [vmem:[#allocation2 + $0x18] sm:$0x1]
      %v2658 = vsel %vm2584, 0, %v2657
      %2659 = vst [vmem:[#allocation2 + $0x18] sm:$0x1] %v2658
      %v2660 = vld [vmem:[#allocation2 + $0x24] sm:$0x1]
      %v2661 = vsel %vm2584, 0, %v2660
      %2662 = vst [vmem:[#allocation2 + $0x24] sm:$0x1] %v2661
      %v2663 = vld [vmem:[#allocation2 + $0x30] sm:$0x1]
      %v2664 = vsel %vm2584, 0, %v2663
      %2665 = vst [vmem:[#allocation2 + $0x30] sm:$0x1] %v2664
      %v2666 = vld [vmem:[#allocation2 + $0x3c] sm:$0x1]
      %v2667 = vsel %vm2584, 0, %v2666
      %2668 = vst [vmem:[#allocation2 + $0x3c] sm:$0x1] %v2667
      %v2669 = vld [vmem:[#allocation2 + $0x48] sm:$0x1]
      %v2670 = vsel %vm2584, 0, %v2669
      %2671 = vst [vmem:[#allocation2 + $0x48] sm:$0x1] %v2670
      %v2672 = vld [vmem:[#allocation2 + $0x54] sm:$0x1]
      %v2673 = vsel %vm2584, 0, %v2672
      %2674 = vst [vmem:[#allocation2 + $0x54] sm:$0x1] %v2673
      %v2675 = vld [vmem:[#allocation2 + $0x60] sm:$0x1]
      %v2676 = vsel %vm2584, 0, %v2675
      %2677 = vst [vmem:[#allocation2 + $0x60] sm:$0x1] %v2676
      %v2678 = vld [vmem:[#allocation2 + $0x6c] sm:$0x1]
      %v2679 = vsel %vm2584, 0, %v2678
      %2680 = vst [vmem:[#allocation2 + $0x6c] sm:$0x1] %v2679
      %vm2681 = vmand %vm2583, %vm2576
      %v2682 = vld [vmem:[#allocation2 + $0x8] sm:$0x1]
      %v2683 = vsel %vm2681, 0, %v2682
      %2684 = vst [vmem:[#allocation2 + $0x8] sm:$0x1] %v2683
      %v2685 = vld [vmem:[#allocation2 + $0x14] sm:$0x1]
      %v2686 = vsel %vm2681, 0, %v2685
      %2687 = vst [vmem:[#allocation2 + $0x14] sm:$0x1] %v2686
      %v2688 = vld [vmem:[#allocation2 + $0x20] sm:$0x1]
      %v2689 = vsel %vm2681, 0, %v2688
      %2690 = vst [vmem:[#allocation2 + $0x20] sm:$0x1] %v2689
      %v2691 = vld [vmem:[#allocation2 + $0x2c] sm:$0x1]
      %v2692 = vsel %vm2681, 0, %v2691
      %2693 = vst [vmem:[#allocation2 + $0x2c] sm:$0x1] %v2692
      %v2694 = vld [vmem:[#allocation2 + $0x38] sm:$0x1]
      %v2695 = vsel %vm2681, 0, %v2694
      %2696 = vst [vmem:[#allocation2 + $0x38] sm:$0x1] %v2695
      %v2697 = vld [vmem:[#allocation2 + $0x44] sm:$0x1]
      %v2698 = vsel %vm2681, 0, %v2697
      %2699 = vst [vmem:[#allocation2 + $0x44] sm:$0x1] %v2698
      %v2700 = vld [vmem:[#allocation2 + $0x50] sm:$0x1]
      %v2701 = vsel %vm2681, 0, %v2700
      %2702 = vst [vmem:[#allocation2 + $0x50] sm:$0x1] %v2701
      %v2703 = vld [vmem:[#allocation2 + $0x5c] sm:$0x1]
      %v2704 = vsel %vm2681, 0, %v2703
      %2705 = vst [vmem:[#allocation2 + $0x5c] sm:$0x1] %v2704
      %v2706 = vld [vmem:[#allocation2 + $0x68] sm:$0x1]
      %v2707 = vsel %vm2681, 0, %v2706
      %2708 = vst [vmem:[#allocation2 + $0x68] sm:$0x1] %v2707
      %v2709 = vld [vmem:[#allocation2 + $0x74] sm:$0x1]
      %v2710 = vsel %vm2681, 0, %v2709
      %2711 = vst [vmem:[#allocation2 + $0x74] sm:$0x1] %v2710
      %p2712 = scmp.eq.s32.totalorder %s25, 0
      // Predicated region
      $region57: #{tpu_custom_call.1} parent=55 // pred_check
        %p2713 = pneg %p2712
      $region58: #{tpu_custom_call.1} parent=55 // pred_check_branch
        %2715 = sbr.rel (%p2713) target = $region60
      $region59: #{tpu_custom_call.1} parent=55 // pred_region
        %2716 = vst.msk [vmem:[#allocation2] sm:$0xf] %vm2581, 0
        %2717 = vst.msk [vmem:[#allocation2 + $0x4] sm:$0xf] %vm2581, 0
        %vm2718 = vcmask 57344
        %2719 = vst.msk [vmem:[#allocation2 + $0x8] sm:$0x1] %vm2718, 0
      $region60: #{tpu_custom_call.1} parent=55 // pred_fallthru
        _
      %p2720 = scmp.eq.s32.totalorder %s25, 1
      // Predicated region
      $region61: #{tpu_custom_call.1} parent=55 // pred_check
        %p2721 = pneg %p2720
      $region62: #{tpu_custom_call.1} parent=55 // pred_check_branch
        %2723 = sbr.rel (%p2721) target = $region64
      $region63: #{tpu_custom_call.1} parent=55 // pred_region
        %s2724 = scalar_lea.vmem [#allocation2], 108
        %2725 = vst.msk [vmem:[%s2724] sm:$0xf] %vm2581, 0
        %2726 = vst.msk [vmem:[%s2724 + $0x4] sm:$0xf] %vm2581, 0
        %vm2727 = vcmask 57344
        %2728 = vst.msk [vmem:[%s2724 + $0x8] sm:$0x1] %vm2727, 0
      $region64: #{tpu_custom_call.1} parent=55 // pred_fallthru
        _
      %v2729 = vld [vmem:[#allocation2] sm:$0xf]
      %v2730 = vld [vmem:[#allocation2 + $0x4] sm:$0xf]
      %v2731 = vld [vmem:[#allocation2 + $0x8] sm:$0x1]
      %v2732 = vld [vmem:[#allocation2 + $0xc] sm:$0xf]
      %v2733 = vld [vmem:[#allocation2 + $0x10] sm:$0xf]
      %v2734 = vld [vmem:[#allocation2 + $0x14] sm:$0x1]
      %v2735 = vld [vmem:[#allocation2 + $0x18] sm:$0xf]
      %v2736 = vld [vmem:[#allocation2 + $0x1c] sm:$0xf]
      %v2737 = vld [vmem:[#allocation2 + $0x20] sm:$0x1]
      %v2738 = vld [vmem:[#allocation2 + $0x24] sm:$0xf]
      %v2739 = vld [vmem:[#allocation2 + $0x28] sm:$0xf]
      %v2740 = vld [vmem:[#allocation2 + $0x2c] sm:$0x1]
      %v2741 = vld [vmem:[#allocation2 + $0x30] sm:$0xf]
      %v2742 = vld [vmem:[#allocation2 + $0x34] sm:$0xf]
      %v2743 = vld [vmem:[#allocation2 + $0x38] sm:$0x1]
      %v2744 = vld [vmem:[#allocation2 + $0x3c] sm:$0xf]
      %v2745 = vld [vmem:[#allocation2 + $0x40] sm:$0xf]
      %v2746 = vld [vmem:[#allocation2 + $0x44] sm:$0x1]
      %v2747 = vld [vmem:[#allocation2 + $0x48] sm:$0xf]
      %v2748 = vld [vmem:[#allocation2 + $0x4c] sm:$0xf]
      %v2749 = vld [vmem:[#allocation2 + $0x50] sm:$0x1]
      %v2750 = vld [vmem:[#allocation2 + $0x54] sm:$0xf]
      %v2751 = vld [vmem:[#allocation2 + $0x58] sm:$0xf]
      %v2752 = vld [vmem:[#allocation2 + $0x5c] sm:$0x1]
      %v2753 = vld [vmem:[#allocation2 + $0x60] sm:$0xf]
      %v2754 = vld [vmem:[#allocation2 + $0x64] sm:$0xf]
      %v2755 = vld [vmem:[#allocation2 + $0x68] sm:$0x1]
      %v2756 = vld [vmem:[#allocation2 + $0x6c] sm:$0xf]
      %v2757 = vld [vmem:[#allocation2 + $0x70] sm:$0xf]
      %v2758 = vld [vmem:[#allocation2 + $0x74] sm:$0x1]
      %v2779 = vunpack.c.l.b16 %v2729
      %v2780 = vunpack.c.l.b16 %v2730
      %v2781 = vunpack.c.l.b16 %v2732
      %v2782 = vunpack.c.l.b16 %v2733
      %v2783 = vunpack.c.l.b16 %v2735
      %v2784 = vunpack.c.l.b16 %v2736
      %v2785 = vunpack.c.l.b16 %v2738
      %v2786 = vunpack.c.l.b16 %v2739
      %v2787 = vunpack.c.l.b16 %v2741
      %v2788 = vunpack.c.l.b16 %v2742
      %v2789 = vunpack.c.l.b16 %v2744
      %v2790 = vunpack.c.l.b16 %v2745
      %v2791 = vunpack.c.l.b16 %v2747
      %v2792 = vunpack.c.l.b16 %v2748
      %v2793 = vunpack.c.l.b16 %v2750
      %v2794 = vunpack.c.l.b16 %v2751
      %v2795 = vunpack.c.l.b16 %v2753
      %v2796 = vunpack.c.l.b16 %v2754
      %v2797 = vunpack.c.l.b16 %v2756
      %v2798 = vunpack.c.l.b16 %v2757
      %v2799 = vpack.c.b16 %v2780, %v2779
      %v2800 = vpack.c.b16 %v2782, %v2781
      %v2801 = vpack.c.b16 %v2784, %v2783
      %v2802 = vpack.c.b16 %v2786, %v2785
      %v2803 = vpack.c.b16 %v2788, %v2787
      %v2804 = vpack.c.b16 %v2790, %v2789
      %v2805 = vpack.c.b16 %v2792, %v2791
      %v2806 = vpack.c.b16 %v2794, %v2793
      %v2807 = vpack.c.b16 %v2796, %v2795
      %v2808 = vpack.c.b16 %v2798, %v2797
      %v2819 = vunpack.c.l.b16 %v2731
      %v2820 = vunpack.c.l.b16 %v2734
      %v2821 = vunpack.c.l.b16 %v2737
      %v2822 = vunpack.c.l.b16 %v2740
      %v2823 = vunpack.c.l.b16 %v2743
      %v2824 = vunpack.c.l.b16 %v2746
      %v2825 = vunpack.c.l.b16 %v2749
      %v2826 = vunpack.c.l.b16 %v2752
      %v2827 = vunpack.c.l.b16 %v2755
      %v2828 = vunpack.c.l.b16 %v2758
      %v2829 = vpack.c.b16 %v2819, %v2819
      %v2830 = vpack.c.b16 %v2820, %v2820
      %v2831 = vpack.c.b16 %v2821, %v2821
      %v2832 = vpack.c.b16 %v2822, %v2822
      %v2833 = vpack.c.b16 %v2823, %v2823
      %v2834 = vpack.c.b16 %v2824, %v2824
      %v2835 = vpack.c.b16 %v2825, %v2825
      %v2836 = vpack.c.b16 %v2826, %v2826
      %v2837 = vpack.c.b16 %v2827, %v2827
      %v2838 = vpack.c.b16 %v2828, %v2828
      %v2840 = vshrl.u32 %v2799, 16
      %v2842 = vshll.u32 %v2799, 16
      %v2844 = vrot.slane %v2842, 1
      %v2845 = vor.u32 %v2840, %v2844
      %v2847 = vshll.u32 %v2829, 16
      %v2849 = vrot.slane %v2847, 1
      %v2850 = vsel %vm741, %v2845, %v2849
      %v2852 = vshrl.u32 %v2800, 16
      %v2854 = vshll.u32 %v2800, 16
      %v2856 = vrot.slane %v2854, 1
      %v2857 = vor.u32 %v2852, %v2856
      %v2859 = vshll.u32 %v2830, 16
      %v2861 = vrot.slane %v2859, 1
      %v2862 = vsel %vm741, %v2857, %v2861
      %v2864 = vshrl.u32 %v2801, 16
      %v2866 = vshll.u32 %v2801, 16
      %v2868 = vrot.slane %v2866, 1
      %v2869 = vor.u32 %v2864, %v2868
      %v2871 = vshll.u32 %v2831, 16
      %v2873 = vrot.slane %v2871, 1
      %v2874 = vsel %vm741, %v2869, %v2873
      %v2876 = vshrl.u32 %v2802, 16
      %v2878 = vshll.u32 %v2802, 16
      %v2880 = vrot.slane %v2878, 1
      %v2881 = vor.u32 %v2876, %v2880
      %v2883 = vshll.u32 %v2832, 16
      %v2885 = vrot.slane %v2883, 1
      %v2886 = vsel %vm741, %v2881, %v2885
      %v2888 = vshrl.u32 %v2803, 16
      %v2890 = vshll.u32 %v2803, 16
      %v2892 = vrot.slane %v2890, 1
      %v2893 = vor.u32 %v2888, %v2892
      %v2895 = vshll.u32 %v2833, 16
      %v2897 = vrot.slane %v2895, 1
      %v2898 = vsel %vm741, %v2893, %v2897
      %v2900 = vshrl.u32 %v2804, 16
      %v2902 = vshll.u32 %v2804, 16
      %v2904 = vrot.slane %v2902, 1
      %v2905 = vor.u32 %v2900, %v2904
      %v2907 = vshll.u32 %v2834, 16
      %v2909 = vrot.slane %v2907, 1
      %v2910 = vsel %vm741, %v2905, %v2909
      %v2912 = vshrl.u32 %v2805, 16
      %v2914 = vshll.u32 %v2805, 16
      %v2916 = vrot.slane %v2914, 1
      %v2917 = vor.u32 %v2912, %v2916
      %v2919 = vshll.u32 %v2835, 16
      %v2921 = vrot.slane %v2919, 1
      %v2922 = vsel %vm741, %v2917, %v2921
      %v2924 = vshrl.u32 %v2806, 16
      %v2926 = vshll.u32 %v2806, 16
      %v2928 = vrot.slane %v2926, 1
      %v2929 = vor.u32 %v2924, %v2928
      %v2931 = vshll.u32 %v2836, 16
      %v2933 = vrot.slane %v2931, 1
      %v2934 = vsel %vm741, %v2929, %v2933
      %v2936 = vshrl.u32 %v2807, 16
      %v2938 = vshll.u32 %v2807, 16
      %v2940 = vrot.slane %v2938, 1
      %v2941 = vor.u32 %v2936, %v2940
      %v2943 = vshll.u32 %v2837, 16
      %v2945 = vrot.slane %v2943, 1
      %v2946 = vsel %vm741, %v2941, %v2945
      %v2948 = vshrl.u32 %v2808, 16
      %v2950 = vshll.u32 %v2808, 16
      %v2952 = vrot.slane %v2950, 1
      %v2953 = vor.u32 %v2948, %v2952
      %v2955 = vshll.u32 %v2838, 16
      %v2957 = vrot.slane %v2955, 1
      %v2958 = vsel %vm741, %v2953, %v2957
      %2959 = vrot.lane.b32.xlu0 %v2850, 8
      %v2960 = vpop.permute.xlu0 %2959
      %2961 = vrot.lane.b32.xlu0 %v2862, 8
      %v2962 = vpop.permute.xlu0 %2961
      %2963 = vrot.lane.b32.xlu0 %v2874, 8
      %v2964 = vpop.permute.xlu0 %2963
      %2965 = vrot.lane.b32.xlu0 %v2886, 8
      %v2966 = vpop.permute.xlu0 %2965
      %2967 = vrot.lane.b32.xlu0 %v2898, 8
      %v2968 = vpop.permute.xlu0 %2967
      %2969 = vrot.lane.b32.xlu0 %v2910, 8
      %v2970 = vpop.permute.xlu0 %2969
      %2971 = vrot.lane.b32.xlu0 %v2922, 8
      %v2972 = vpop.permute.xlu0 %2971
      %2973 = vrot.lane.b32.xlu0 %v2934, 8
      %v2974 = vpop.permute.xlu0 %2973
      %2975 = vrot.lane.b32.xlu0 %v2946, 8
      %v2976 = vpop.permute.xlu0 %2975
      %2977 = vrot.lane.b32.xlu0 %v2958, 8
      %v2978 = vpop.permute.xlu0 %2977
      %v2979 = vrot.slane %v2799, 1
      %v2980 = vrot.slane %v2829, 1
      %v2981 = vsel %vm910, %v2979, %v2980
      %v2982 = vrot.slane %v2800, 1
      %v2983 = vrot.slane %v2830, 1
      %v2984 = vsel %vm910, %v2982, %v2983
      %v2985 = vrot.slane %v2801, 1
      %v2986 = vrot.slane %v2831, 1
      %v2987 = vsel %vm910, %v2985, %v2986
      %v2988 = vrot.slane %v2802, 1
      %v2989 = vrot.slane %v2832, 1
      %v2990 = vsel %vm910, %v2988, %v2989
      %v2991 = vrot.slane %v2803, 1
      %v2992 = vrot.slane %v2833, 1
      %v2993 = vsel %vm910, %v2991, %v2992
      %v2994 = vrot.slane %v2804, 1
      %v2995 = vrot.slane %v2834, 1
      %v2996 = vsel %vm910, %v2994, %v2995
      %v2997 = vrot.slane %v2805, 1
      %v2998 = vrot.slane %v2835, 1
      %v2999 = vsel %vm910, %v2997, %v2998
      %v3000 = vrot.slane %v2806, 1
      %v3001 = vrot.slane %v2836, 1
      %v3002 = vsel %vm910, %v3000, %v3001
      %v3003 = vrot.slane %v2807, 1
      %v3004 = vrot.slane %v2837, 1
      %v3005 = vsel %vm910, %v3003, %v3004
      %v3006 = vrot.slane %v2808, 1
      %v3007 = vrot.slane %v2838, 1
      %v3008 = vsel %vm910, %v3006, %v3007
      %3009 = vrot.lane.b32.xlu0 %v2981, 16
      %v3010 = vpop.permute.xlu0 %3009
      %3011 = vrot.lane.b32.xlu0 %v2984, 16
      %v3012 = vpop.permute.xlu0 %3011
      %3013 = vrot.lane.b32.xlu0 %v2987, 16
      %v3014 = vpop.permute.xlu0 %3013
      %3015 = vrot.lane.b32.xlu0 %v2990, 16
      %v3016 = vpop.permute.xlu0 %3015
      %3017 = vrot.lane.b32.xlu0 %v2993, 16
      %v3018 = vpop.permute.xlu0 %3017
      %3019 = vrot.lane.b32.xlu0 %v2996, 16
      %v3020 = vpop.permute.xlu0 %3019
      %3021 = vrot.lane.b32.xlu0 %v2999, 16
      %v3022 = vpop.permute.xlu0 %3021
      %3023 = vrot.lane.b32.xlu0 %v3002, 16
      %v3024 = vpop.permute.xlu0 %3023
      %3025 = vrot.lane.b32.xlu0 %v3005, 16
      %v3026 = vpop.permute.xlu0 %3025
      %3027 = vrot.lane.b32.xlu0 %v3008, 16
      %v3028 = vpop.permute.xlu0 %3027
      %v3030 = vsel %vm996, %v2799, %v2960
      %v3032 = vsel %vm996, %v2800, %v2962
      %v3034 = vsel %vm996, %v2801, %v2964
      %v3036 = vsel %vm996, %v2802, %v2966
      %v3038 = vsel %vm996, %v2803, %v2968
      %v3040 = vsel %vm996, %v2804, %v2970
      %v3042 = vsel %vm996, %v2805, %v2972
      %v3044 = vsel %vm996, %v2806, %v2974
      %v3046 = vsel %vm996, %v2807, %v2976
      %v3048 = vsel %vm996, %v2808, %v2978
      %vm3049 = vcmask 130048
      %v3051 = vsel %vm3049, %v3030, %v3010
      %v3053 = vsel %vm3049, %v3032, %v3012
      %v3055 = vsel %vm3049, %v3034, %v3014
      %v3057 = vsel %vm3049, %v3036, %v3016
      %v3059 = vsel %vm3049, %v3038, %v3018
      %v3061 = vsel %vm3049, %v3040, %v3020
      %v3063 = vsel %vm3049, %v3042, %v3022
      %v3065 = vsel %vm3049, %v3044, %v3024
      %v3067 = vsel %vm3049, %v3046, %v3026
      %v3069 = vsel %vm3049, %v3048, %v3028
      %v3070 = vld [vmem:[%s7] sm:$0xf]
      %v3071 = vld [vmem:[%s7 + $0x4] sm:$0xf]
      %v3072 = vld [vmem:[%s7 + $0x8] sm:$0xf]
      %s3073 = scalar_lea.vmem %s7, 12
      %v3074 = vld [vmem:[%s3073] sm:$0xf]
      %v3075 = vld [vmem:[%s3073 + $0x4] sm:$0xf]
      %v3076 = vld [vmem:[%s3073 + $0x8] sm:$0xf]
      %v3080 = vunpack.c.l.b16 %v3074
      %v3081 = vunpack.c.l.b16 %v3075
      %v3082 = vunpack.c.l.b16 %v3076
      %v3083 = vpack.c.b16 %v3081, %v3080
      %v3084 = vpack.c.b16 %v3082, %v3082
      %vm3086 = vcmask 195584
      %v3087 = vsel %vm3086, %v3053, 0
      %v3089 = vsel %vm3086, %v3055, 0
      %v3091 = vsel %vm3086, %v3057, 0
      %v3093 = vsel %vm3086, %v3059, 0
      %v3095 = vsel %vm3086, %v3061, 0
      %v3097 = vsel %vm3086, %v3063, 0
      %v3099 = vsel %vm3086, %v3065, 0
      %v3101 = vsel %vm3086, %v3067, 0
      %vm3103 = vcmask 1043456
      %v3105 = vsel %vm3103, %v3084, 0
      %3107 = vmatprep.subr.bf16.mxu0 0
      %3108 = vmatpush1.bf16.msra.mxu0 %v3083
      %3109 = vmatprep.subr.bf16.mxu0 0
      %3110 = vmatpush1.bf16.msra.mxu0 %v3105
      %3111 = vmatprep.subr.bf16.mxu0 0
      %3112 = vmatpush1.bf16.msra.mxu0 0
      %3113 = vmatprep.subr.bf16.mxu0 0
      %3114 = vmatpush1.bf16.msra.mxu0 0
      %3115 = vmatprep.subr.bf16.mxu0 0
      %3116 = vmatpush1.bf16.msra.mxu0 0
      %3117 = vmatprep.subr.bf16.mxu0 0
      %3118 = vmatpush1.bf16.msra.mxu0 0
      %3119 = vmatprep.subr.bf16.mxu0 0
      %3120 = vmatpush1.bf16.msra.mxu0 0
      %3121 = vmatprep.subr.bf16.mxu0 0
      %3122 = vmatpush1.bf16.msra.mxu0 0
      %3123 = vmatprep.subr.bf16.mxu0 0
      %3124 = vmatpush1.bf16.msra.mxu0 0
      %3125 = vmatprep.subr.bf16.mxu0 0
      %3126 = vmatpush1.bf16.msra.mxu0 0
      %3127 = vmatprep.subr.bf16.mxu0 0
      %3128 = vmatpush1.bf16.msra.mxu0 0
      %3129 = vmatprep.subr.bf16.mxu0 0
      %3130 = vmatpush1.bf16.msra.mxu0 0
      %3131 = vmatprep.subr.bf16.mxu0 0
      %3132 = vmatpush1.bf16.msra.mxu0 0
      %3133 = vmatprep.subr.bf16.mxu0 0
      %3134 = vmatpush1.bf16.msra.mxu0 0
      %3135 = vmatprep.subr.bf16.mxu0 0
      %3136 = vmatpush1.bf16.msra.mxu0 0
      %3137 = vmatprep.subr.bf16.mxu0 0
      %3138 = vmatpush1.bf16.msra.mxu0 0
      %3139 = vmatprep.mubr.bf16.mxu0 0
      %3140 = vmatmul.mubr.bf16.gmra.mrb[0].mxu0 %v3087
      %v3141 = vpop.f32.mrb[0].mxu0
      %v3142 = vadd.f32 0.0, %v3141
      %v3143 = vpop.f32.mrb[0].mxu0
      %v3144 = vpop.f32.mrb[0].mxu0
      %v3145 = vadd.f32 0.0, %v3144
      %v3146 = vpop.f32.mrb[0].mxu0
      %3147 = vmatprep.mubr.bf16.mxu0 0
      %3148 = vmatmul.mubr.bf16.gmra.mrb[0].mxu0 %v3089
      %v3149 = vpop.f32.mrb[0].mxu0
      %v3150 = vadd.f32 0.0, %v3149
      %v3151 = vpop.f32.mrb[0].mxu0
      %v3152 = vpop.f32.mrb[0].mxu0
      %v3153 = vadd.f32 0.0, %v3152
      %v3154 = vpop.f32.mrb[0].mxu0
      %3155 = vmatprep.mubr.bf16.mxu0 0
      %3156 = vmatmul.mubr.bf16.gmra.mrb[0].mxu0 %v3091
      %v3157 = vpop.f32.mrb[0].mxu0
      %v3158 = vadd.f32 0.0, %v3157
      %v3159 = vpop.f32.mrb[0].mxu0
      %v3160 = vpop.f32.mrb[0].mxu0
      %v3161 = vadd.f32 0.0, %v3160
      %v3162 = vpop.f32.mrb[0].mxu0
      %3163 = vmatprep.mubr.bf16.mxu0 0
      %3164 = vmatmul.mubr.bf16.gmra.mrb[0].mxu0 %v3093
      %v3165 = vpop.f32.mrb[0].mxu0
      %v3166 = vadd.f32 0.0, %v3165
      %v3167 = vpop.f32.mrb[0].mxu0
      %v3168 = vpop.f32.mrb[0].mxu0
      %v3169 = vadd.f32 0.0, %v3168
      %v3170 = vpop.f32.mrb[0].mxu0
      %3171 = vmatprep.mubr.bf16.mxu0 0
      %3172 = vmatmul.mubr.bf16.gmra.mrb[0].mxu0 %v3095
      %v3173 = vpop.f32.mrb[0].mxu0
      %v3174 = vadd.f32 0.0, %v3173
      %v3175 = vpop.f32.mrb[0].mxu0
      %v3176 = vpop.f32.mrb[0].mxu0
      %v3177 = vadd.f32 0.0, %v3176
      %v3178 = vpop.f32.mrb[0].mxu0
      %3179 = vmatprep.mubr.bf16.mxu0 0
      %3180 = vmatmul.mubr.bf16.gmra.mrb[0].mxu0 %v3097
      %v3181 = vpop.f32.mrb[0].mxu0
      %v3182 = vadd.f32 0.0, %v3181
      %v3183 = vpop.f32.mrb[0].mxu0
      %v3184 = vpop.f32.mrb[0].mxu0
      %v3185 = vadd.f32 0.0, %v3184
      %v3186 = vpop.f32.mrb[0].mxu0
      %3187 = vmatprep.mubr.bf16.mxu0 0
      %3188 = vmatmul.mubr.bf16.gmra.mrb[0].mxu0 %v3099
      %v3189 = vpop.f32.mrb[0].mxu0
      %v3190 = vadd.f32 0.0, %v3189
      %v3191 = vpop.f32.mrb[0].mxu0
      %v3192 = vpop.f32.mrb[0].mxu0
      %v3193 = vadd.f32 0.0, %v3192
      %v3194 = vpop.f32.mrb[0].mxu0
      %3195 = vmatprep.mubr.bf16.mxu0 0
      %3196 = vmatmul.mubr.bf16.gmra.mrb[0].mxu0 %v3101
      %v3197 = vpop.f32.mrb[0].mxu0
      %v3198 = vadd.f32 0.0, %v3197
      %v3199 = vpop.f32.mrb[0].mxu0
      %v3200 = vpop.f32.mrb[0].mxu0
      %v3201 = vadd.f32 0.0, %v3200
      %v3202 = vpop.f32.mrb[0].mxu0
      %3203 = vdwg.mxu0
      %v3207 = vunpack.c.l.b16 %v3070
      %v3208 = vunpack.c.l.b16 %v3071
      %v3209 = vunpack.c.l.b16 %v3072
      %v3210 = vpack.c.b16 %v3208, %v3207
      %v3211 = vpack.c.b16 %v3209, %v3209
      %v3213 = vsel %vm3086, %v3051, 0
      %v3216 = vsel %vm3103, %v3211, 0
      %3218 = vmatprep.subr.bf16.mxu0 0
      %3219 = vmatpush1.bf16.msra.mxu0 %v3210
      %3220 = vmatprep.subr.bf16.mxu0 0
      %3221 = vmatpush1.bf16.msra.mxu0 %v3216
      %3222 = vmatprep.subr.bf16.mxu0 0
      %3223 = vmatpush1.bf16.msra.mxu0 0
      %3224 = vmatprep.subr.bf16.mxu0 0
      %3225 = vmatpush1.bf16.msra.mxu0 0
      %3226 = vmatprep.subr.bf16.mxu0 0
      %3227 = vmatpush1.bf16.msra.mxu0 0
      %3228 = vmatprep.subr.bf16.mxu0 0
      %3229 = vmatpush1.bf16.msra.mxu0 0
      %3230 = vmatprep.subr.bf16.mxu0 0
      %3231 = vmatpush1.bf16.msra.mxu0 0
      %3232 = vmatprep.subr.bf16.mxu0 0
      %3233 = vmatpush1.bf16.msra.mxu0 0
      %3234 = vmatprep.subr.bf16.mxu0 0
      %3235 = vmatpush1.bf16.msra.mxu0 0
      %3236 = vmatprep.subr.bf16.mxu0 0
      %3237 = vmatpush1.bf16.msra.mxu0 0
      %3238 = vmatprep.subr.bf16.mxu0 0
      %3239 = vmatpush1.bf16.msra.mxu0 0
      %3240 = vmatprep.subr.bf16.mxu0 0
      %3241 = vmatpush1.bf16.msra.mxu0 0
      %3242 = vmatprep.subr.bf16.mxu0 0
      %3243 = vmatpush1.bf16.msra.mxu0 0
      %3244 = vmatprep.subr.bf16.mxu0 0
      %3245 = vmatpush1.bf16.msra.mxu0 0
      %3246 = vmatprep.subr.bf16.mxu0 0
      %3247 = vmatpush1.bf16.msra.mxu0 0
      %3248 = vmatprep.subr.bf16.mxu0 0
      %3249 = vmatpush1.bf16.msra.mxu0 0
      %3250 = vmatprep.mubr.bf16.mxu0 0
      %3251 = vmatmul.mubr.bf16.gmra.mrb[0].mxu0 %v3213
      %v3252 = vpop.f32.mrb[0].mxu0
      %v3253 = vadd.f32 %v3142, %v3252
      %v3254 = vpop.f32.mrb[0].mxu0
      %v3255 = vpop.f32.mrb[0].mxu0
      %v3256 = vadd.f32 %v3145, %v3255
      %v3257 = vpop.f32.mrb[0].mxu0
      %3258 = vmatprep.mubr.bf16.mxu0 0
      %3259 = vmatmul.mubr.bf16.gmra.mrb[0].mxu0 %v3087
      %v3260 = vpop.f32.mrb[0].mxu0
      %v3261 = vadd.f32 %v3150, %v3260
      %v3262 = vpop.f32.mrb[0].mxu0
      %v3263 = vpop.f32.mrb[0].mxu0
      %v3264 = vadd.f32 %v3153, %v3263
      %v3265 = vpop.f32.mrb[0].mxu0
      %3266 = vmatprep.mubr.bf16.mxu0 0
      %3267 = vmatmul.mubr.bf16.gmra.mrb[0].mxu0 %v3089
      %v3268 = vpop.f32.mrb[0].mxu0
      %v3269 = vadd.f32 %v3158, %v3268
      %v3270 = vpop.f32.mrb[0].mxu0
      %v3271 = vpop.f32.mrb[0].mxu0
      %v3272 = vadd.f32 %v3161, %v3271
      %v3273 = vpop.f32.mrb[0].mxu0
      %3274 = vmatprep.mubr.bf16.mxu0 0
      %3275 = vmatmul.mubr.bf16.gmra.mrb[0].mxu0 %v3091
      %v3276 = vpop.f32.mrb[0].mxu0
      %v3277 = vadd.f32 %v3166, %v3276
      %v3278 = vpop.f32.mrb[0].mxu0
      %v3279 = vpop.f32.mrb[0].mxu0
      %v3280 = vadd.f32 %v3169, %v3279
      %v3281 = vpop.f32.mrb[0].mxu0
      %3282 = vmatprep.mubr.bf16.mxu0 0
      %3283 = vmatmul.mubr.bf16.gmra.mrb[0].mxu0 %v3093
      %v3284 = vpop.f32.mrb[0].mxu0
      %v3285 = vadd.f32 %v3174, %v3284
      %v3286 = vpop.f32.mrb[0].mxu0
      %v3287 = vpop.f32.mrb[0].mxu0
      %v3288 = vadd.f32 %v3177, %v3287
      %v3289 = vpop.f32.mrb[0].mxu0
      %3290 = vmatprep.mubr.bf16.mxu0 0
      %3291 = vmatmul.mubr.bf16.gmra.mrb[0].mxu0 %v3095
      %v3292 = vpop.f32.mrb[0].mxu0
      %v3293 = vadd.f32 %v3182, %v3292
      %v3294 = vpop.f32.mrb[0].mxu0
      %v3295 = vpop.f32.mrb[0].mxu0
      %v3296 = vadd.f32 %v3185, %v3295
      %v3297 = vpop.f32.mrb[0].mxu0
      %3298 = vmatprep.mubr.bf16.mxu0 0
      %3299 = vmatmul.mubr.bf16.gmra.mrb[0].mxu0 %v3097
      %v3300 = vpop.f32.mrb[0].mxu0
      %v3301 = vadd.f32 %v3190, %v3300
      %v3302 = vpop.f32.mrb[0].mxu0
      %v3303 = vpop.f32.mrb[0].mxu0
      %v3304 = vadd.f32 %v3193, %v3303
      %v3305 = vpop.f32.mrb[0].mxu0
      %3306 = vmatprep.mubr.bf16.mxu0 0
      %3307 = vmatmul.mubr.bf16.gmra.mrb[0].mxu0 %v3099
      %v3308 = vpop.f32.mrb[0].mxu0
      %v3309 = vadd.f32 %v3198, %v3308
      %v3310 = vpop.f32.mrb[0].mxu0
      %v3311 = vpop.f32.mrb[0].mxu0
      %v3312 = vadd.f32 %v3201, %v3311
      %v3313 = vpop.f32.mrb[0].mxu0
      %3314 = vdwg.mxu0
      %s3315 = scalar_lea.vmem %s7, 24
      %v3316 = vld [vmem:[%s3315] sm:$0xf]
      %v3317 = vld [vmem:[%s3315 + $0x4] sm:$0xf]
      %v3318 = vld [vmem:[%s3315 + $0x8] sm:$0xf]
      %v3322 = vunpack.c.l.b16 %v3316
      %v3323 = vunpack.c.l.b16 %v3317
      %v3324 = vunpack.c.l.b16 %v3318
      %v3325 = vpack.c.b16 %v3323, %v3322
      %v3326 = vpack.c.b16 %v3324, %v3324
      %v3328 = vsel %vm3086, %v3069, 0
      %v3331 = vsel %vm3103, %v3326, 0
      %3333 = vmatprep.subr.bf16.mxu0 0
      %3334 = vmatpush1.bf16.msra.mxu0 %v3325
      %3335 = vmatprep.subr.bf16.mxu0 0
      %3336 = vmatpush1.bf16.msra.mxu0 %v3331
      %3337 = vmatprep.subr.bf16.mxu0 0
      %3338 = vmatpush1.bf16.msra.mxu0 0
      %3339 = vmatprep.subr.bf16.mxu0 0
      %3340 = vmatpush1.bf16.msra.mxu0 0
      %3341 = vmatprep.subr.bf16.mxu0 0
      %3342 = vmatpush1.bf16.msra.mxu0 0
      %3343 = vmatprep.subr.bf16.mxu0 0
      %3344 = vmatpush1.bf16.msra.mxu0 0
      %3345 = vmatprep.subr.bf16.mxu0 0
      %3346 = vmatpush1.bf16.msra.mxu0 0
      %3347 = vmatprep.subr.bf16.mxu0 0
      %3348 = vmatpush1.bf16.msra.mxu0 0
      %3349 = vmatprep.subr.bf16.mxu0 0
      %3350 = vmatpush1.bf16.msra.mxu0 0
      %3351 = vmatprep.subr.bf16.mxu0 0
      %3352 = vmatpush1.bf16.msra.mxu0 0
      %3353 = vmatprep.subr.bf16.mxu0 0
      %3354 = vmatpush1.bf16.msra.mxu0 0
      %3355 = vmatprep.subr.bf16.mxu0 0
      %3356 = vmatpush1.bf16.msra.mxu0 0
      %3357 = vmatprep.subr.bf16.mxu0 0
      %3358 = vmatpush1.bf16.msra.mxu0 0
      %3359 = vmatprep.subr.bf16.mxu0 0
      %3360 = vmatpush1.bf16.msra.mxu0 0
      %3361 = vmatprep.subr.bf16.mxu0 0
      %3362 = vmatpush1.bf16.msra.mxu0 0
      %3363 = vmatprep.subr.bf16.mxu0 0
      %3364 = vmatpush1.bf16.msra.mxu0 0
      %3365 = vmatprep.mubr.bf16.mxu0 0
      %3366 = vmatmul.mubr.bf16.gmra.mrb[0].mxu0 %v3089
      %v3367 = vpop.f32.mrb[0].mxu0
      %v3368 = vadd.f32 0.0, %v3367
      %v3369 = vpop.f32.mrb[0].mxu0
      %v3370 = vpop.f32.mrb[0].mxu0
      %v3371 = vadd.f32 0.0, %v3370
      %v3372 = vpop.f32.mrb[0].mxu0
      %3373 = vmatprep.mubr.bf16.mxu0 0
      %3374 = vmatmul.mubr.bf16.gmra.mrb[0].mxu0 %v3091
      %v3375 = vpop.f32.mrb[0].mxu0
      %v3376 = vadd.f32 0.0, %v3375
      %v3377 = vpop.f32.mrb[0].mxu0
      %v3378 = vpop.f32.mrb[0].mxu0
      %v3379 = vadd.f32 0.0, %v3378
      %v3380 = vpop.f32.mrb[0].mxu0
      %3381 = vmatprep.mubr.bf16.mxu0 0
      %3382 = vmatmul.mubr.bf16.gmra.mrb[0].mxu0 %v3093
      %v3383 = vpop.f32.mrb[0].mxu0
      %v3384 = vadd.f32 0.0, %v3383
      %v3385 = vpop.f32.mrb[0].mxu0
      %v3386 = vpop.f32.mrb[0].mxu0
      %v3387 = vadd.f32 0.0, %v3386
      %v3388 = vpop.f32.mrb[0].mxu0
      %3389 = vmatprep.mubr.bf16.mxu0 0
      %3390 = vmatmul.mubr.bf16.gmra.mrb[0].mxu0 %v3095
      %v3391 = vpop.f32.mrb[0].mxu0
      %v3392 = vadd.f32 0.0, %v3391
      %v3393 = vpop.f32.mrb[0].mxu0
      %v3394 = vpop.f32.mrb[0].mxu0
      %v3395 = vadd.f32 0.0, %v3394
      %v3396 = vpop.f32.mrb[0].mxu0
      %3397 = vmatprep.mubr.bf16.mxu0 0
      %3398 = vmatmul.mubr.bf16.gmra.mrb[0].mxu0 %v3097
      %v3399 = vpop.f32.mrb[0].mxu0
      %v3400 = vadd.f32 0.0, %v3399
      %v3401 = vpop.f32.mrb[0].mxu0
      %v3402 = vpop.f32.mrb[0].mxu0
      %v3403 = vadd.f32 0.0, %v3402
      %v3404 = vpop.f32.mrb[0].mxu0
      %3405 = vmatprep.mubr.bf16.mxu0 0
      %3406 = vmatmul.mubr.bf16.gmra.mrb[0].mxu0 %v3099
      %v3407 = vpop.f32.mrb[0].mxu0
      %v3408 = vadd.f32 0.0, %v3407
      %v3409 = vpop.f32.mrb[0].mxu0
      %v3410 = vpop.f32.mrb[0].mxu0
      %v3411 = vadd.f32 0.0, %v3410
      %v3412 = vpop.f32.mrb[0].mxu0
      %3413 = vmatprep.mubr.bf16.mxu0 0
      %3414 = vmatmul.mubr.bf16.gmra.mrb[0].mxu0 %v3101
      %v3415 = vpop.f32.mrb[0].mxu0
      %v3416 = vadd.f32 0.0, %v3415
      %v3417 = vpop.f32.mrb[0].mxu0
      %v3418 = vpop.f32.mrb[0].mxu0
      %v3419 = vadd.f32 0.0, %v3418
      %v3420 = vpop.f32.mrb[0].mxu0
      %3421 = vmatprep.mubr.bf16.mxu0 0
      %3422 = vmatmul.mubr.bf16.gmra.mrb[0].mxu0 %v3328
      %v3423 = vpop.f32.mrb[0].mxu0
      %v3424 = vadd.f32 0.0, %v3423
      %v3425 = vpop.f32.mrb[0].mxu0
      %v3426 = vpop.f32.mrb[0].mxu0
      %v3427 = vadd.f32 0.0, %v3426
      %v3428 = vpop.f32.mrb[0].mxu0
      %3429 = vdwg.mxu0
      %v3430 = vadd.f32 %v3253, %v3368
      %v3431 = vadd.f32 %v3256, %v3371
      %v3432 = vadd.f32 %v3261, %v3376
      %v3433 = vadd.f32 %v3264, %v3379
      %v3434 = vadd.f32 %v3269, %v3384
      %v3435 = vadd.f32 %v3272, %v3387
      %v3436 = vadd.f32 %v3277, %v3392
      %v3437 = vadd.f32 %v3280, %v3395
      %v3438 = vadd.f32 %v3285, %v3400
      %v3439 = vadd.f32 %v3288, %v3403
      %v3440 = vadd.f32 %v3293, %v3408
      %v3441 = vadd.f32 %v3296, %v3411
      %v3442 = vadd.f32 %v3301, %v3416
      %v3443 = vadd.f32 %v3304, %v3419
      %v3444 = vadd.f32 %v3309, %v3424
      %v3445 = vadd.f32 %v3312, %v3427
      %v3446 = vld [vmem:[%s8] sm:$0x1]
      %v3448 = vlaneseq
      %v3449 = vshrl.u32 %v3448, 7
      %v3450 = vsub.s32 0, %v3449
      %v3451 = vrot.slane %v3446, %v3450
      %v3453 = vadd.f32 %v3430, %v3451
      %v3454 = vadd.f32 %v3431, %v3451
      %v3455 = vadd.f32 %v3432, %v3451
      %v3456 = vadd.f32 %v3433, %v3451
      %v3457 = vadd.f32 %v3434, %v3451
      %v3458 = vadd.f32 %v3435, %v3451
      %v3459 = vadd.f32 %v3436, %v3451
      %v3460 = vadd.f32 %v3437, %v3451
      %v3461 = vadd.f32 %v3438, %v3451
      %v3462 = vadd.f32 %v3439, %v3451
      %v3463 = vadd.f32 %v3440, %v3451
      %v3464 = vadd.f32 %v3441, %v3451
      %v3465 = vadd.f32 %v3442, %v3451
      %v3466 = vadd.f32 %v3443, %v3451
      %v3467 = vadd.f32 %v3444, %v3451
      %v3468 = vadd.f32 %v3445, %v3451
      %v3469 = vmax.f32 %v3453, 0.0
      %v3470 = vmax.f32 %v3454, 0.0
      %v3471 = vmax.f32 %v3455, 0.0
      %v3472 = vmax.f32 %v3456, 0.0
      %v3473 = vmax.f32 %v3457, 0.0
      %v3474 = vmax.f32 %v3458, 0.0
      %v3475 = vmax.f32 %v3459, 0.0
      %v3476 = vmax.f32 %v3460, 0.0
      %v3477 = vmax.f32 %v3461, 0.0
      %v3478 = vmax.f32 %v3462, 0.0
      %v3479 = vmax.f32 %v3463, 0.0
      %v3480 = vmax.f32 %v3464, 0.0
      %v3481 = vmax.f32 %v3465, 0.0
      %v3482 = vmax.f32 %v3466, 0.0
      %v3483 = vmax.f32 %v3467, 0.0
      %v3484 = vmax.f32 %v3468, 0.0
      %3485 = vst.msk [vmem:[%s570] sm:$0xff] %vm996, %v3469
      %3486 = vst.msk [vmem:[%s570 + $0x8] sm:$0xff] %vm996, %v3470
      %3487 = vst.msk [vmem:[%s570 + $0x10] sm:$0xff] %vm996, %v3471
      %3488 = vst.msk [vmem:[%s570 + $0x18] sm:$0xff] %vm996, %v3472
      %3489 = vst.msk [vmem:[%s570 + $0x20] sm:$0xff] %vm996, %v3473
      %3490 = vst.msk [vmem:[%s570 + $0x28] sm:$0xff] %vm996, %v3474
      %3491 = vst.msk [vmem:[%s570 + $0x30] sm:$0xff] %vm996, %v3475
      %3492 = vst.msk [vmem:[%s570 + $0x38] sm:$0xff] %vm996, %v3476
      %3493 = vst.msk [vmem:[%s570 + $0x40] sm:$0xff] %vm996, %v3477
      %3494 = vst.msk [vmem:[%s570 + $0x48] sm:$0xff] %vm996, %v3478
      %3495 = vst.msk [vmem:[%s570 + $0x50] sm:$0xff] %vm996, %v3479
      %3496 = vst.msk [vmem:[%s570 + $0x58] sm:$0xff] %vm996, %v3480
      %3497 = vst.msk [vmem:[%s570 + $0x60] sm:$0xff] %vm996, %v3481
      %3498 = vst.msk [vmem:[%s570 + $0x68] sm:$0xff] %vm996, %v3482
      %3499 = vst.msk [vmem:[%s570 + $0x70] sm:$0xff] %vm996, %v3483
      %3500 = vst.msk [vmem:[%s570 + $0x78] sm:$0xff] %vm996, %v3484
      %s3501 = smul.u32 8, %s25
      %p3502 = scmp.lt.s32.totalorder %s24, 1
      %s3503 = scalar_select %p3502, %s24, 1
      %p3504 = scmp.lt.s32.totalorder %s3501, 15
      %s3505 = scalar_select %p3504, %s3501, 15
      %s3506 = smul.addr %s3505, 2
      %s3507 = smul.addr %s3503, 32
      %s3508 = sadd.s32 %s3506, %s3507
      %s3509 = smul.addr %s3508, 8
      %s3510 = scalar_lea.vmem %s9, %s3509
      // Predicated region
      $region65: #{tpu_custom_call.1} parent=55 // pred_check
        %p3511 = pneg %p277
      $region66: #{tpu_custom_call.1} parent=55 // pred_check_branch
        %3513 = sbr.rel (%p3511) target = $region68
      $region67: #{tpu_custom_call.1} parent=55 // pred_region
        %s3514 = smul.u32 8, %s25
      $region68: #{tpu_custom_call.1} parent=55 // pred_fallthru
        _
    $region56: #{tpu_custom_call.1} parent=5 // pred_fallthru
      _
    %p3515 = scmp.le.s32.totalorder 2, %s15
    // Predicated region
    $region69: #{tpu_custom_call.1} parent=5 // pred_check
      %p3516 = pneg %p3515
    $region70: #{tpu_custom_call.1} parent=5 // pred_check_branch
      %3518 = sbr.rel (%p3516) target = $region72
    $region71: #{tpu_custom_call.1} parent=5 // pred_region
      %s3519 = ssub.s32 %s15, 2
      // Predicated region
      $region73: #{tpu_custom_call.1} parent=71 // pred_check
        %p3520 = pneg %p283
      $region74: #{tpu_custom_call.1} parent=71 // pred_check_branch
        %3522 = sbr.rel (%p3520) target = $region76
      $region75: #{tpu_custom_call.1} parent=71 // pred_region
        %s3523 = smul.u32 8, %s27
        %p3524 = scmp.lt.s32.totalorder %s26, 1
        %s3525 = scalar_select %p3524, %s26, 1
        %p3526 = scmp.lt.s32.totalorder %s3523, 15
        %s3527 = scalar_select %p3526, %s3523, 15
        %s3528 = smul.addr %s3527, 2
        %s3529 = smul.addr %s3525, 32
        %s3530 = sadd.s32 %s3528, %s3529
        %s3531 = smul.addr %s3530, 8
        %s3532 = scalar_lea.vmem %s9, %s3531
      $region76: #{tpu_custom_call.1} parent=71 // pred_fallthru
        _
    $region72: #{tpu_custom_call.1} parent=5 // pred_fallthru
      _
  $region6: #{tpu_custom_call.1} parent=0 // loop_footer
    %s19 = sadd.s32 1, %s15
  $region7: #{tpu_custom_call.1} parent=0 // loop_footer_branch
    %14 = sbr.rel target = $region3
  $region8: #{tpu_custom_call.1} parent=0 // loop_exit
    _

</llo_original>
